<compile_context>
chip_gen: v5e
topology: v5e:2x2
jax: 0.10.0
libtpu: 0.0.40
codegen_flags: <defaults>
</compile_context>

<pallas_src>
import jax
import jax.numpy as jnp
from jax.experimental import pallas as pl
from jax.experimental.pallas import tpu as pltpu


# ---------------------------------------------------------------------------
# In-kernel helpers
# ---------------------------------------------------------------------------
def _softmax_lanes(s):
    """Numerically-stable softmax over the last (lane) axis."""
    m = jnp.max(s, axis=-1, keepdims=True)
    e = jnp.exp(s - m)
    return e * pl.reciprocal(jnp.sum(e, axis=-1, keepdims=True), approx=True)


def _bn_relu(z, g_ref, be_ref, eps=1e-5):
    """Train-mode BatchNorm1d (batch mean, biased batch var) + ReLU.

    Single pass over z (var = E[z^2] - mu^2), applied as a precomputed
    scale/shift -> 2 VPU ops per element."""
    mu = jnp.mean(z, axis=0, keepdims=True)
    ez2 = jnp.mean(z * z, axis=0, keepdims=True)
    var = jnp.maximum(ez2 - mu * mu, 0.0)
    scale = g_ref[...] * jax.lax.rsqrt(var + eps)        # (1, F)
    shift = be_ref[...] - mu * scale                      # (1, F)
    return jnp.maximum(z * scale + shift, 0.0)


# ---------------------------------------------------------------------------
# Kernel A: attention pooling + layer-1 Linear (batch-tiled, "parallel")
# ---------------------------------------------------------------------------
def pool_layer1_kernel(text_ref, cpath_ref, ppath_ref,
                       attw_ref, attb_ref, projh_ref, w1_ref, b1_ref,
                       z1_ref):
    def attention_pool(p_ref):
        p = p_ref[...]                                    # (tb, P, E) bf16
        tb, P, E = p.shape
        # Single MXU push for the whole tile: flatten (tb,P,E) -> (tb*P,E).
        flat = p.reshape(tb * P, E)
        temp = jnp.dot(flat, attw_ref[...],
                       preferred_element_type=jnp.float32) + attb_ref[...]
        temp = jnp.maximum(temp, 0.0).reshape(tb, P, -1)  # (tb, P, A) f32
        # N=1 projection kept off the MXU: VPU multiply + lane reduction.
        scores = jnp.sum(temp * projh_ref[...], axis=-1)  # (tb, P)
        att = _softmax_lanes(scores)                      # softmax over paths
        return jnp.sum(att[:, :, None] * p.astype(jnp.float32), axis=1)

    cand = attention_pool(cpath_ref)                      # (tb, E) f32
    prox = attention_pool(ppath_ref)                      # (tb, E) f32

    # Layer-1 Linear pipelined into the batch grid:
    #   z1 = concat(q, c, p, cand, prox) @ W1 + b1
    # expressed as five partial dots against w1 slabs (5, E, H1), so no (B,5E)
    # concat buffer and no lane-misaligned strip stores are needed.
    text = text_ref[...]                                  # (tb, 3, E) bf16
    z = jnp.dot(text[:, 0, :], w1_ref[0], preferred_element_type=jnp.float32)
    z = z + jnp.dot(text[:, 1, :], w1_ref[1], preferred_element_type=jnp.float32)
    z = z + jnp.dot(text[:, 2, :], w1_ref[2], preferred_element_type=jnp.float32)
    z = z + jnp.dot(cand.astype(jnp.bfloat16), w1_ref[3],
                    preferred_element_type=jnp.float32)
    z = z + jnp.dot(prox.astype(jnp.bfloat16), w1_ref[4],
                    preferred_element_type=jnp.float32)
    z1_ref[...] = z + b1_ref[...]


# ---------------------------------------------------------------------------
# Kernel B: whole-batch train-mode BN + MLP tail + sigmoid
# ---------------------------------------------------------------------------
def bn_mlp_kernel(z1_ref, g1_ref, be1_ref,
                  w2_ref, b2_ref, g2_ref, be2_ref,
                  w3_ref, b3_ref, g3_ref, be3_ref,
                  w4_ref, b4_ref, g4_ref, be4_ref,
                  w5_ref, b5_ref, out_ref):
    h = _bn_relu(z1_ref[...], g1_ref, be1_ref)
    for w, b, g, be in ((w2_ref, b2_ref, g2_ref, be2_ref),
                        (w3_ref, b3_ref, g3_ref, be3_ref),
                        (w4_ref, b4_ref, g4_ref, be4_ref)):
        z = jnp.dot(h.astype(jnp.bfloat16), w[...],
                    preferred_element_type=jnp.float32) + b[...]
        h = _bn_relu(z, g, be)
    logits = jnp.dot(h.astype(jnp.bfloat16), w5_ref[...],
                     preferred_element_type=jnp.float32) + b5_ref[...]
    # Overflow-robust sigmoid via tanh (EUP).
    out_ref[...] = 0.5 * (jnp.tanh(0.5 * logits) + 1.0)


# ---------------------------------------------------------------------------
# Wrapper
# ---------------------------------------------------------------------------
def _pick_batch_tile(B, max_tb):
    """Largest batch tile <= max_tb dividing B with tb % 8 == 0 (sublane-
    aligned z1 output block), falling back to the whole batch."""
    if B <= max_tb:
        return B
    for tb in range(max_tb - max_tb % 8, 7, -8):
        if B % tb == 0:
            return tb
    return B


def pro_mdp_forward(x, params, tb=None, single_buffer_params=True):
    B, S, E = x.shape
    P = (S - 3) // 2
    A = params['att_w'].shape[1]
    H1 = params['w1'].shape[1]
    H2 = params['w2'].shape[1]
    H3 = params['w3'].shape[1]
    H4 = params['w4'].shape[1]
    out_dim = params['w5'].shape[1]

    # ---- generation-aware VMEM budget & default batch tile -----------------
    try:
        vmem_cap = int(getattr(pltpu.get_tpu_info(), 'vmem_capacity_bytes',
                               64 << 20))
    except Exception:
        vmem_cap = 64 << 20
    vmem_ceiling = int(0.75 * vmem_cap)   # ~96 MiB on v5e/v6e, ~48 MiB on v7x

    if tb is None:
        tb = _pick_batch_tile(B, 512 if vmem_cap >= (96 << 20) else 256)
    assert B % tb == 0 and (tb % 8 == 0 or tb == B), (B, tb)

    # ---- wrapper-side layout: bf16 streams, sublane-aligned splits ---------
    xbf = x.astype(jnp.bfloat16)
    text = xbf[:, :3, :]                    # (B, 3, E)
    cpaths = xbf[:, 3:3 + P, :]             # (B, P, E)
    ppaths = xbf[:, 3 + P:3 + 2 * P, :]     # (B, P, E)

    bf = lambda a: a.astype(jnp.bfloat16)
    row = lambda a: a.reshape(1, -1).astype(jnp.float32)

    att_w = bf(params['att_w'])                       # (E, A)
    att_b = row(params['att_b'])                      # (1, A)
    proj_h = row(params['proj_h'])                    # (1, A)
    w1 = bf(params['w1']).reshape(5, E, H1)           # (5, E, H1)
    b1 = row(params['b1'])                            # (1, H1)

    mlp_args = [row(params['g1']), row(params['be1'])]
    for k in (2, 3, 4):
        mlp_args += [bf(params[f'w{k}']), row(params[f'b{k}']),
                     row(params[f'g{k}']), row(params[f'be{k}'])]
    mlp_args += [bf(params['w5']), row(params['b5'])]

    # ---- cost estimates & VMEM limits ---------------------------------------
    flops_a = 4 * B * P * (E * A + A + E) + 10 * B * E * H1
    bytes_a = (B * S * E * 2 + (E * A + 5 * E * H1) * 2
               + (2 * A + 2 * H1) * 4 + B * H1 * 4)
    cost_a = pl.CostEstimate(flops=int(flops_a),
                             transcendentals=int(2 * B * (P + 1)),
                             bytes_accessed=int(bytes_a))
    work_a = (2 * tb * S * E * 2 + 2 * tb * H1 * 4
              + 2 * ((E * A + 5 * E * H1) * 2 + (2 * A + 2 * H1) * 4))
    vmem_a = int(min(vmem_ceiling, max(4 * work_a, 32 << 20)))

    mm_b = H1 * H2 + H2 * H3 + H3 * H4 + H4 * out_dim
    flops_b = 2 * B * mm_b + 12 * B * (H1 + H2 + H3 + H4)
    bytes_b = (B * (H1 + out_dim) * 4 + mm_b * 2
               + 4 * (3 * H1 + 3 * H2 + 3 * H3 + 3 * H4 + out_dim))
    cost_b = pl.CostEstimate(flops=int(flops_b),
                             transcendentals=int(B * out_dim),
                             bytes_accessed=int(bytes_b))
    work_b = B * (2 * H1 + H2 + H3 + H4 + out_dim) * 4 + mm_b * 2
    vmem_b = int(min(vmem_ceiling, max(3 * work_b, 32 << 20)))
    # TODO(synk): for very large B where work_b approaches the VMEM ceiling
    # (v7x 64 MiB), switch kernel B to a batch-tiled two-pass BN
    # (stats pass + normalize pass) instead of one whole-batch step.

    def _build_and_run(single_buffer):
        def const_spec(shape):
            nd = len(shape)
            if single_buffer:
                # Constant-index resident params: single-buffer to save VMEM.
                return pl.BlockSpec(shape, lambda *_: (0,) * nd,
                                    pipeline_mode=pl.Buffered(1))
            return pl.BlockSpec(shape, lambda *_: (0,) * nd)

        # ---- kernel A: pooling + layer 1 (batch-tiled, megacore parallel) ---
        z1 = pl.pallas_call(
            pool_layer1_kernel,
            out_shape=jax.ShapeDtypeStruct((B, H1), jnp.float32),
            grid_spec=pltpu.PrefetchScalarGridSpec(
                num_scalar_prefetch=0,
                grid=(B // tb,),
                in_specs=[
                    pl.BlockSpec((tb, 3, E), lambda i: (i, 0, 0)),
                    pl.BlockSpec((tb, P, E), lambda i: (i, 0, 0)),
                    pl.BlockSpec((tb, P, E), lambda i: (i, 0, 0)),
                    const_spec(att_w.shape), const_spec(att_b.shape),
                    const_spec(proj_h.shape), const_spec(w1.shape),
                    const_spec(b1.shape),
                ],
                out_specs=pl.BlockSpec((tb, H1), lambda i: (i, 0))),
            compiler_params=pltpu.CompilerParams(
                dimension_semantics=("parallel",),
                vmem_limit_bytes=vmem_a),
            cost_estimate=cost_a,
        )(text, cpaths, ppaths, att_w, att_b, proj_h, w1, b1)

        # ---- kernel B: whole-batch train-mode BN + MLP + sigmoid ------------
        out = pl.pallas_call(
            bn_mlp_kernel,
            out_shape=jax.ShapeDtypeStruct((B, out_dim), jnp.float32),
            grid_spec=pltpu.PrefetchScalarGridSpec(
                num_scalar_prefetch=0,
                grid=(1,),
                in_specs=[const_spec((B, H1))]
                         + [const_spec(a.shape) for a in mlp_args],
                out_specs=pl.BlockSpec((B, out_dim), lambda i: (0, 0))),
            compiler_params=pltpu.CompilerParams(
                dimension_semantics=("arbitrary",),
                vmem_limit_bytes=vmem_b),
            cost_estimate=cost_b,
        )(z1, *mlp_args)
        return out

    if single_buffer_params:
        try:
            return _build_and_run(True)
        except Exception:
            # pl.Buffered(1) unsupported on this jax version -> default
            # double-buffered resident params.
            pass
    return _build_and_run(False)


# ---------------------------------------------------------------------------
# Pure-JAX f32 reference (training-mode BN), parameter init, demo
# ---------------------------------------------------------------------------
def pro_mdp_reference(x, params, eps=1e-5):
    B, S, E = x.shape
    P = (S - 3) // 2

    def pool(p):
        t = jax.nn.relu(jnp.einsum('bpe,ea->bpa', p, params['att_w'])
                        + params['att_b'].reshape(-1))
        s = jnp.einsum('bpa,ao->bpo', t, params['proj_h'])
        a = jax.nn.softmax(s, axis=1)
        return jnp.sum(a * p, axis=1)

    cand = pool(x[:, 3:3 + P, :])
    prox = pool(x[:, 3 + P:3 + 2 * P, :])
    h = jnp.concatenate([x[:, 0, :], x[:, 1, :], x[:, 2, :], cand, prox],
                        axis=1)

    def dense_bn_relu(h, k):
        z = h @ params[f'w{k}'] + params[f'b{k}'].reshape(-1)
        mu = z.mean(axis=0)
        var = ((z - mu) ** 2).mean(axis=0)
        zn = (z - mu) / jnp.sqrt(var + eps)
        return jax.nn.relu(zn * params[f'g{k}'].reshape(-1)
                           + params[f'be{k}'].reshape(-1))

    for k in (1, 2, 3, 4):
        h = dense_bn_relu(h, k)
    return jax.nn.sigmoid(h @ params['w5'] + params['b5'].reshape(-1))


def init_params(key, embedding_size, attn_factor, h1, h2, h3, h4, out_dim):
    E, A = embedding_size, attn_factor
    ks = jax.random.split(key, 8)

    def xavier_normal(k, shape):
        std = (2.0 / (shape[0] + shape[1])) ** 0.5
        return std * jax.random.normal(k, shape, dtype=jnp.float32)

    def linear(k, fan_in, fan_out):
        kw, kb = jax.random.split(k)
        bound = 1.0 / (fan_in ** 0.5)
        w = jax.random.uniform(kw, (fan_in, fan_out), jnp.float32, -bound, bound)
        b = jax.random.uniform(kb, (1, fan_out), jnp.float32, -bound, bound)
        return w, b

    params = {
        'att_w': xavier_normal(ks[0], (E, A)),
        'att_b': jnp.zeros((1, A), jnp.float32),
        'proj_h': xavier_normal(ks[1], (A, 1)),
    }
    dims = [(5 * E, h1), (h1, h2), (h2, h3), (h3, h4), (h4, out_dim)]
    for i, (fi, fo) in enumerate(dims, start=1):
        w, b = linear(ks[1 + i], fi, fo)
        params[f'w{i}'] = w
        params[f'b{i}'] = b
        if i <= 4:  # BatchNorm1d defaults: weight = 1, bias = 0
            params[f'g{i}'] = jnp.ones((1, fo), jnp.float32)
            params[f'be{i}'] = jnp.zeros((1, fo), jnp.float32)
    return params


if __name__ == "__main__":
    # Small shapes consistent with the module; B=16 with tb=8 exercises a
    # 2-step batch grid on kernel A.
    B, E, A = 16, 32, 16          # batch, embedding_size, PathAttention_factor
    path_num = 4
    S = 3 + 2 * path_num          # sequence length = 11
    H1 = H2 = H3 = H4 = 32
    OUT = 1

    key = jax.random.PRNGKey(0)
    kx, kp = jax.random.split(key)
    x = jax.random.normal(kx, (B, S, E), dtype=jnp.float32)
    params = init_params(kp, E, A, H1, H2, H3, H4, OUT)

    out = pro_mdp_forward(x, params, tb=8)
    out = jax.block_until_ready(out)

    assert out.shape == (B, OUT)
    assert bool(jnp.all(jnp.isfinite(out)))
    assert bool(jnp.all((out >= 0.0) & (out <= 1.0)))   # sigmoid range

    ref = pro_mdp_reference(x, params)                  # pure-JAX f32 reference
    max_err = float(jnp.max(jnp.abs(out - ref)))
    assert max_err < 5e-2, f"max |kernel - f32 reference| = {max_err}"
    print("KERNEL_OK")
</pallas_src>

<mosaic_0001>
module attributes {stable_mosaic.version = 11 : i64} {
  func.func @pool_layer1_kernel(%arg0: i32, %arg1: memref<8x3x32xbf16, #tpu.memory_space<vmem>>, %arg2: memref<8x4x32xbf16, #tpu.memory_space<vmem>>, %arg3: memref<8x4x32xbf16, #tpu.memory_space<vmem>>, %arg4: memref<32x16xbf16, #tpu.memory_space<vmem>>, %arg5: memref<1x16xf32, #tpu.memory_space<vmem>>, %arg6: memref<1x16xf32, #tpu.memory_space<vmem>>, %arg7: memref<5x32x32xbf16, #tpu.memory_space<vmem>>, %arg8: memref<1x32xf32, #tpu.memory_space<vmem>>, %arg9: memref<8x32xf32, #tpu.memory_space<vmem>>) attributes {dimension_semantics = [#tpu.dimension_semantics<parallel>], iteration_bounds = array<i64: 2>, scalar_prefetch = 0 : i64, scratch_operands = 0 : i64, tpu.core_type = #tpu.core_type<tc>, window_params = [{transform_indices = @transform_0, window_bounds = array<i64: 8, 3, 32>}, {transform_indices = @transform_1, window_bounds = array<i64: 8, 4, 32>}, {transform_indices = @transform_2, window_bounds = array<i64: 8, 4, 32>}, {pipeline_mode = #tpu.pipeline_mode<synchronous>, transform_indices = @transform_3, window_bounds = array<i64: 32, 16>}, {pipeline_mode = #tpu.pipeline_mode<synchronous>, transform_indices = @transform_4, window_bounds = array<i64: 1, 16>}, {pipeline_mode = #tpu.pipeline_mode<synchronous>, transform_indices = @transform_5, window_bounds = array<i64: 1, 16>}, {pipeline_mode = #tpu.pipeline_mode<synchronous>, transform_indices = @transform_6, window_bounds = array<i64: 5, 32, 32>}, {pipeline_mode = #tpu.pipeline_mode<synchronous>, transform_indices = @transform_7, window_bounds = array<i64: 1, 32>}, {transform_indices = @transform_8, window_bounds = array<i64: 8, 32>}]} {
    %c0 = arith.constant 0 : index
    %c0_0 = arith.constant 0 : index
    %c0_1 = arith.constant 0 : index
    %0 = vector.load %arg2[%c0, %c0_0, %c0_1] : memref<8x4x32xbf16, #tpu.memory_space<vmem>>, vector<8x4x32xbf16>
    %1 = vector.shape_cast %0 : vector<8x4x32xbf16> to vector<32x32xbf16>
    %c0_2 = arith.constant 0 : index
    %c0_3 = arith.constant 0 : index
    %2 = vector.load %arg4[%c0_2, %c0_3] : memref<32x16xbf16, #tpu.memory_space<vmem>>, vector<32x16xbf16>
    %cst = arith.constant dense<0.000000e+00> : vector<32x16xf32>
    %3 = tpu.matmul %1, %2, %cst {dimension_numbers = #tpu.dot_dimension_numbers<[1], [0], [0], [1], [0, 0, 1, 1], [], []>} : vector<32x32xbf16>, vector<32x16xbf16>, vector<32x16xf32> -> vector<32x16xf32>
    %c0_4 = arith.constant 0 : index
    %c0_5 = arith.constant 0 : index
    %4 = vector.load %arg5[%c0_4, %c0_5] : memref<1x16xf32, #tpu.memory_space<vmem>>, vector<1x16xf32>
    %5 = vector.broadcast %4 : vector<1x16xf32> to vector<32x16xf32>
    %6 = arith.addf %3, %5 : vector<32x16xf32>
    %cst_6 = arith.constant 0.000000e+00 : f32
    %7 = vector.broadcast %cst_6 : f32 to vector<32x16xf32>
    %8 = arith.maximumf %6, %7 : vector<32x16xf32>
    %9 = vector.shape_cast %8 : vector<32x16xf32> to vector<8x4x16xf32>
    %c0_7 = arith.constant 0 : index
    %c0_8 = arith.constant 0 : index
    %10 = vector.load %arg6[%c0_7, %c0_8] : memref<1x16xf32, #tpu.memory_space<vmem>>, vector<1x16xf32>
    %11 = vector.shape_cast %10 : vector<1x16xf32> to vector<1x1x16xf32>
    %12 = vector.broadcast %11 : vector<1x1x16xf32> to vector<8x4x16xf32>
    %13 = arith.mulf %9, %12 : vector<8x4x16xf32>
    %cst_9 = arith.constant dense<0.000000e+00> : vector<8x4xf32>
    %14 = vector.multi_reduction <add>, %13, %cst_9 [2] : vector<8x4x16xf32> to vector<8x4xf32>
    %cst_10 = arith.constant dense<0xFF800000> : vector<8xf32>
    %15 = vector.multi_reduction <maximumf>, %14, %cst_10 [1] : vector<8x4xf32> to vector<8xf32>
    %16 = vector.shape_cast %15 : vector<8xf32> to vector<8x1xf32>
    %17 = vector.broadcast %16 : vector<8x1xf32> to vector<8x4xf32>
    %18 = arith.subf %14, %17 : vector<8x4xf32>
    %19 = math.exp %18 : vector<8x4xf32>
    %cst_11 = arith.constant dense<0.000000e+00> : vector<8xf32>
    %20 = vector.multi_reduction <add>, %19, %cst_11 [1] : vector<8x4xf32> to vector<8xf32>
    %21 = vector.shape_cast %20 : vector<8xf32> to vector<8x1xf32>
    %22 = tpu.reciprocal %21 {approx = true} : vector<8x1xf32> -> vector<8x1xf32>
    %23 = vector.broadcast %22 : vector<8x1xf32> to vector<8x4xf32>
    %24 = arith.mulf %19, %23 : vector<8x4xf32>
    %25 = vector.shape_cast %24 : vector<8x4xf32> to vector<8x4x1xf32>
    %26 = arith.extf %0 : vector<8x4x32xbf16> to vector<8x4x32xf32>
    %27 = vector.broadcast %25 : vector<8x4x1xf32> to vector<8x4x32xf32>
    %28 = arith.mulf %27, %26 : vector<8x4x32xf32>
    %cst_12 = arith.constant dense<0.000000e+00> : vector<8x32xf32>
    %29 = vector.multi_reduction <add>, %28, %cst_12 [1] : vector<8x4x32xf32> to vector<8x32xf32>
    %c0_13 = arith.constant 0 : index
    %c0_14 = arith.constant 0 : index
    %c0_15 = arith.constant 0 : index
    %30 = vector.load %arg3[%c0_13, %c0_14, %c0_15] : memref<8x4x32xbf16, #tpu.memory_space<vmem>>, vector<8x4x32xbf16>
    %31 = vector.shape_cast %30 : vector<8x4x32xbf16> to vector<32x32xbf16>
    %c0_16 = arith.constant 0 : index
    %c0_17 = arith.constant 0 : index
    %32 = vector.load %arg4[%c0_16, %c0_17] : memref<32x16xbf16, #tpu.memory_space<vmem>>, vector<32x16xbf16>
    %cst_18 = arith.constant dense<0.000000e+00> : vector<32x16xf32>
    %33 = tpu.matmul %31, %32, %cst_18 {dimension_numbers = #tpu.dot_dimension_numbers<[1], [0], [0], [1], [0, 0, 1, 1], [], []>} : vector<32x32xbf16>, vector<32x16xbf16>, vector<32x16xf32> -> vector<32x16xf32>
    %c0_19 = arith.constant 0 : index
    %c0_20 = arith.constant 0 : index
    %34 = vector.load %arg5[%c0_19, %c0_20] : memref<1x16xf32, #tpu.memory_space<vmem>>, vector<1x16xf32>
    %35 = vector.broadcast %34 : vector<1x16xf32> to vector<32x16xf32>
    %36 = arith.addf %33, %35 : vector<32x16xf32>
    %cst_21 = arith.constant 0.000000e+00 : f32
    %37 = vector.broadcast %cst_21 : f32 to vector<32x16xf32>
    %38 = arith.maximumf %36, %37 : vector<32x16xf32>
    %39 = vector.shape_cast %38 : vector<32x16xf32> to vector<8x4x16xf32>
    %c0_22 = arith.constant 0 : index
    %c0_23 = arith.constant 0 : index
    %40 = vector.load %arg6[%c0_22, %c0_23] : memref<1x16xf32, #tpu.memory_space<vmem>>, vector<1x16xf32>
    %41 = vector.shape_cast %40 : vector<1x16xf32> to vector<1x1x16xf32>
    %42 = vector.broadcast %41 : vector<1x1x16xf32> to vector<8x4x16xf32>
    %43 = arith.mulf %39, %42 : vector<8x4x16xf32>
    %cst_24 = arith.constant dense<0.000000e+00> : vector<8x4xf32>
    %44 = vector.multi_reduction <add>, %43, %cst_24 [2] : vector<8x4x16xf32> to vector<8x4xf32>
    %cst_25 = arith.constant dense<0xFF800000> : vector<8xf32>
    %45 = vector.multi_reduction <maximumf>, %44, %cst_25 [1] : vector<8x4xf32> to vector<8xf32>
    %46 = vector.shape_cast %45 : vector<8xf32> to vector<8x1xf32>
    %47 = vector.broadcast %46 : vector<8x1xf32> to vector<8x4xf32>
    %48 = arith.subf %44, %47 : vector<8x4xf32>
    %49 = math.exp %48 : vector<8x4xf32>
    %cst_26 = arith.constant dense<0.000000e+00> : vector<8xf32>
    %50 = vector.multi_reduction <add>, %49, %cst_26 [1] : vector<8x4xf32> to vector<8xf32>
    %51 = vector.shape_cast %50 : vector<8xf32> to vector<8x1xf32>
    %52 = tpu.reciprocal %51 {approx = true} : vector<8x1xf32> -> vector<8x1xf32>
    %53 = vector.broadcast %52 : vector<8x1xf32> to vector<8x4xf32>
    %54 = arith.mulf %49, %53 : vector<8x4xf32>
    %55 = vector.shape_cast %54 : vector<8x4xf32> to vector<8x4x1xf32>
    %56 = arith.extf %30 : vector<8x4x32xbf16> to vector<8x4x32xf32>
    %57 = vector.broadcast %55 : vector<8x4x1xf32> to vector<8x4x32xf32>
    %58 = arith.mulf %57, %56 : vector<8x4x32xf32>
    %cst_27 = arith.constant dense<0.000000e+00> : vector<8x32xf32>
    %59 = vector.multi_reduction <add>, %58, %cst_27 [1] : vector<8x4x32xf32> to vector<8x32xf32>
    %c0_28 = arith.constant 0 : index
    %c0_29 = arith.constant 0 : index
    %c0_30 = arith.constant 0 : index
    %60 = vector.load %arg1[%c0_28, %c0_29, %c0_30] : memref<8x3x32xbf16, #tpu.memory_space<vmem>>, vector<8x3x32xbf16>
    %61 = vector.extract_strided_slice %60 {offsets = [0, 0, 0], sizes = [8, 1, 32], strides = [1, 1, 1]} : vector<8x3x32xbf16> to vector<8x1x32xbf16>
    %62 = vector.shape_cast %61 : vector<8x1x32xbf16> to vector<8x32xbf16>
    %c0_31 = arith.constant 0 : index
    %c0_32 = arith.constant 0 : index
    %c0_33 = arith.constant 0 : index
    %63 = vector.load %arg7[%c0_31, %c0_32, %c0_33] : memref<5x32x32xbf16, #tpu.memory_space<vmem>>, vector<1x32x32xbf16>
    %64 = vector.shape_cast %63 : vector<1x32x32xbf16> to vector<32x32xbf16>
    %cst_34 = arith.constant dense<0.000000e+00> : vector<8x32xf32>
    %65 = tpu.matmul %62, %64, %cst_34 {dimension_numbers = #tpu.dot_dimension_numbers<[1], [0], [0], [1], [0, 0, 1, 1], [], []>} : vector<8x32xbf16>, vector<32x32xbf16>, vector<8x32xf32> -> vector<8x32xf32>
    %66 = vector.extract_strided_slice %60 {offsets = [0, 1, 0], sizes = [8, 1, 32], strides = [1, 1, 1]} : vector<8x3x32xbf16> to vector<8x1x32xbf16>
    %67 = vector.shape_cast %66 : vector<8x1x32xbf16> to vector<8x32xbf16>
    %c1 = arith.constant 1 : index
    %c0_35 = arith.constant 0 : index
    %c0_36 = arith.constant 0 : index
    %68 = vector.load %arg7[%c1, %c0_35, %c0_36] : memref<5x32x32xbf16, #tpu.memory_space<vmem>>, vector<1x32x32xbf16>
    %69 = vector.shape_cast %68 : vector<1x32x32xbf16> to vector<32x32xbf16>
    %cst_37 = arith.constant dense<0.000000e+00> : vector<8x32xf32>
    %70 = tpu.matmul %67, %69, %cst_37 {dimension_numbers = #tpu.dot_dimension_numbers<[1], [0], [0], [1], [0, 0, 1, 1], [], []>} : vector<8x32xbf16>, vector<32x32xbf16>, vector<8x32xf32> -> vector<8x32xf32>
    %71 = arith.addf %65, %70 : vector<8x32xf32>
    %72 = vector.extract_strided_slice %60 {offsets = [0, 2, 0], sizes = [8, 1, 32], strides = [1, 1, 1]} : vector<8x3x32xbf16> to vector<8x1x32xbf16>
    %73 = vector.shape_cast %72 : vector<8x1x32xbf16> to vector<8x32xbf16>
    %c2 = arith.constant 2 : index
    %c0_38 = arith.constant 0 : index
    %c0_39 = arith.constant 0 : index
    %74 = vector.load %arg7[%c2, %c0_38, %c0_39] : memref<5x32x32xbf16, #tpu.memory_space<vmem>>, vector<1x32x32xbf16>
    %75 = vector.shape_cast %74 : vector<1x32x32xbf16> to vector<32x32xbf16>
    %cst_40 = arith.constant dense<0.000000e+00> : vector<8x32xf32>
    %76 = tpu.matmul %73, %75, %cst_40 {dimension_numbers = #tpu.dot_dimension_numbers<[1], [0], [0], [1], [0, 0, 1, 1], [], []>} : vector<8x32xbf16>, vector<32x32xbf16>, vector<8x32xf32> -> vector<8x32xf32>
    %77 = arith.addf %71, %76 : vector<8x32xf32>
    %78 = arith.truncf %29 : vector<8x32xf32> to vector<8x32xbf16>
    %c3 = arith.constant 3 : index
    %c0_41 = arith.constant 0 : index
    %c0_42 = arith.constant 0 : index
    %79 = vector.load %arg7[%c3, %c0_41, %c0_42] : memref<5x32x32xbf16, #tpu.memory_space<vmem>>, vector<1x32x32xbf16>
    %80 = vector.shape_cast %79 : vector<1x32x32xbf16> to vector<32x32xbf16>
    %cst_43 = arith.constant dense<0.000000e+00> : vector<8x32xf32>
    %81 = tpu.matmul %78, %80, %cst_43 {dimension_numbers = #tpu.dot_dimension_numbers<[1], [0], [0], [1], [0, 0, 1, 1], [], []>} : vector<8x32xbf16>, vector<32x32xbf16>, vector<8x32xf32> -> vector<8x32xf32>
    %82 = arith.addf %77, %81 : vector<8x32xf32>
    %83 = arith.truncf %59 : vector<8x32xf32> to vector<8x32xbf16>
    %c4 = arith.constant 4 : index
    %c0_44 = arith.constant 0 : index
    %c0_45 = arith.constant 0 : index
    %84 = vector.load %arg7[%c4, %c0_44, %c0_45] : memref<5x32x32xbf16, #tpu.memory_space<vmem>>, vector<1x32x32xbf16>
    %85 = vector.shape_cast %84 : vector<1x32x32xbf16> to vector<32x32xbf16>
    %cst_46 = arith.constant dense<0.000000e+00> : vector<8x32xf32>
    %86 = tpu.matmul %83, %85, %cst_46 {dimension_numbers = #tpu.dot_dimension_numbers<[1], [0], [0], [1], [0, 0, 1, 1], [], []>} : vector<8x32xbf16>, vector<32x32xbf16>, vector<8x32xf32> -> vector<8x32xf32>
    %87 = arith.addf %82, %86 : vector<8x32xf32>
    %c0_47 = arith.constant 0 : index
    %c0_48 = arith.constant 0 : index
    %88 = vector.load %arg8[%c0_47, %c0_48] : memref<1x32xf32, #tpu.memory_space<vmem>>, vector<1x32xf32>
    %89 = vector.broadcast %88 : vector<1x32xf32> to vector<8x32xf32>
    %90 = arith.addf %87, %89 : vector<8x32xf32>
    %c0_49 = arith.constant 0 : index
    %c0_50 = arith.constant 0 : index
    %91 = vector.load %arg9[%c0_49, %c0_50] : memref<8x32xf32, #tpu.memory_space<vmem>>, vector<8x32xf32>
    tpu.vector_store %arg9[%c0_49, %c0_50], %90 {strides = array<i32>} : memref<8x32xf32, #tpu.memory_space<vmem>>, vector<8x32xf32>,
    return
  }
  func.func @transform_0(%arg0: i32) -> (i32, i32, i32) {
    %c0_i32 = arith.constant 0 : i32
    %c0_i32_0 = arith.constant 0 : i32
    %c0_i32_1 = arith.constant 0 : i32
    return %arg0, %c0_i32, %c0_i32_0 : i32, i32, i32
  }
  func.func @transform_1(%arg0: i32) -> (i32, i32, i32) {
    %c0_i32 = arith.constant 0 : i32
    %c0_i32_0 = arith.constant 0 : i32
    %c0_i32_1 = arith.constant 0 : i32
    return %arg0, %c0_i32, %c0_i32_0 : i32, i32, i32
  }
  func.func @transform_2(%arg0: i32) -> (i32, i32, i32) {
    %c0_i32 = arith.constant 0 : i32
    %c0_i32_0 = arith.constant 0 : i32
    %c0_i32_1 = arith.constant 0 : i32
    return %arg0, %c0_i32, %c0_i32_0 : i32, i32, i32
  }
  func.func @transform_3(%arg0: i32) -> (i32, i32) {
    %c0_i32 = arith.constant 0 : i32
    %c0_i32_0 = arith.constant 0 : i32
    %c0_i32_1 = arith.constant 0 : i32
    return %c0_i32, %c0_i32_0 : i32, i32
  }
  func.func @transform_4(%arg0: i32) -> (i32, i32) {
    %c0_i32 = arith.constant 0 : i32
    %c0_i32_0 = arith.constant 0 : i32
    %c0_i32_1 = arith.constant 0 : i32
    return %c0_i32, %c0_i32_0 : i32, i32
  }
  func.func @transform_5(%arg0: i32) -> (i32, i32) {
    %c0_i32 = arith.constant 0 : i32
    %c0_i32_0 = arith.constant 0 : i32
    %c0_i32_1 = arith.constant 0 : i32
    return %c0_i32, %c0_i32_0 : i32, i32
  }
  func.func @transform_6(%arg0: i32) -> (i32, i32, i32) {
    %c0_i32 = arith.constant 0 : i32
    %c0_i32_0 = arith.constant 0 : i32
    %c0_i32_1 = arith.constant 0 : i32
    %c0_i32_2 = arith.constant 0 : i32
    return %c0_i32, %c0_i32_0, %c0_i32_1 : i32, i32, i32
  }
  func.func @transform_7(%arg0: i32) -> (i32, i32) {
    %c0_i32 = arith.constant 0 : i32
    %c0_i32_0 = arith.constant 0 : i32
    %c0_i32_1 = arith.constant 0 : i32
    return %c0_i32, %c0_i32_0 : i32, i32
  }
  func.func @transform_8(%arg0: i32) -> (i32, i32) {
    %c0_i32 = arith.constant 0 : i32
    %c0_i32_0 = arith.constant 0 : i32
    return %arg0, %c0_i32 : i32, i32
  }
}

module attributes {stable_mosaic.version = 11 : i64} {
  func.func @pool_layer1_kernel(%arg0: i32, %arg1: memref<8x3x32xbf16, #tpu.memory_space<vmem>>, %arg2: memref<8x4x32xbf16, #tpu.memory_space<vmem>>, %arg3: memref<8x4x32xbf16, #tpu.memory_space<vmem>>, %arg4: memref<32x16xbf16, #tpu.memory_space<vmem>>, %arg5: memref<1x16xf32, #tpu.memory_space<vmem>>, %arg6: memref<1x16xf32, #tpu.memory_space<vmem>>, %arg7: memref<5x32x32xbf16, #tpu.memory_space<vmem>>, %arg8: memref<1x32xf32, #tpu.memory_space<vmem>>, %arg9: memref<8x32xf32, #tpu.memory_space<vmem>>) attributes {dimension_semantics = [#tpu.dimension_semantics<parallel>], iteration_bounds = array<i64: 2>, scalar_prefetch = 0 : i64, scratch_operands = 0 : i64, tpu.core_type = #tpu.core_type<tc>, window_params = [{transform_indices = @transform_0, window_bounds = array<i64: 8, 3, 32>}, {transform_indices = @transform_1, window_bounds = array<i64: 8, 4, 32>}, {transform_indices = @transform_2, window_bounds = array<i64: 8, 4, 32>}, {pipeline_mode = #tpu.pipeline_mode<synchronous>, transform_indices = @transform_3, window_bounds = array<i64: 32, 16>}, {pipeline_mode = #tpu.pipeline_mode<synchronous>, transform_indices = @transform_4, window_bounds = array<i64: 1, 16>}, {pipeline_mode = #tpu.pipeline_mode<synchronous>, transform_indices = @transform_5, window_bounds = array<i64: 1, 16>}, {pipeline_mode = #tpu.pipeline_mode<synchronous>, transform_indices = @transform_6, window_bounds = array<i64: 5, 32, 32>}, {pipeline_mode = #tpu.pipeline_mode<synchronous>, transform_indices = @transform_7, window_bounds = array<i64: 1, 32>}, {transform_indices = @transform_8, window_bounds = array<i64: 8, 32>}]} {
    %c0 = arith.constant 0 : index
    %c0_0 = arith.constant 0 : index
    %c0_1 = arith.constant 0 : index
    %0 = vector.load %arg2[%c0, %c0_0, %c0_1] : memref<8x4x32xbf16, #tpu.memory_space<vmem>>, vector<8x4x32xbf16>
    %1 = vector.shape_cast %0 : vector<8x4x32xbf16> to vector<32x32xbf16>
    %c0_2 = arith.constant 0 : index
    %c0_3 = arith.constant 0 : index
    %2 = vector.load %arg4[%c0_2, %c0_3] : memref<32x16xbf16, #tpu.memory_space<vmem>>, vector<32x16xbf16>
    %cst = arith.constant dense<0.000000e+00> : vector<32x16xf32>
    %3 = tpu.matmul %1, %2, %cst {dimension_numbers = #tpu.dot_dimension_numbers<[1], [0], [0], [1], [0, 0, 1, 1], [], []>} : vector<32x32xbf16>, vector<32x16xbf16>, vector<32x16xf32> -> vector<32x16xf32>
    %c0_4 = arith.constant 0 : index
    %c0_5 = arith.constant 0 : index
    %4 = vector.load %arg5[%c0_4, %c0_5] : memref<1x16xf32, #tpu.memory_space<vmem>>, vector<1x16xf32>
    %5 = vector.broadcast %4 : vector<1x16xf32> to vector<32x16xf32>
    %6 = arith.addf %3, %5 : vector<32x16xf32>
    %cst_6 = arith.constant 0.000000e+00 : f32
    %7 = vector.broadcast %cst_6 : f32 to vector<32x16xf32>
    %8 = arith.maximumf %6, %7 : vector<32x16xf32>
    %9 = vector.shape_cast %8 : vector<32x16xf32> to vector<8x4x16xf32>
    %c0_7 = arith.constant 0 : index
    %c0_8 = arith.constant 0 : index
    %10 = vector.load %arg6[%c0_7, %c0_8] : memref<1x16xf32, #tpu.memory_space<vmem>>, vector<1x16xf32>
    %11 = vector.shape_cast %10 : vector<1x16xf32> to vector<1x1x16xf32>
    %12 = vector.broadcast %11 : vector<1x1x16xf32> to vector<8x4x16xf32>
    %13 = arith.mulf %9, %12 : vector<8x4x16xf32>
    %cst_9 = arith.constant dense<0.000000e+00> : vector<8x4xf32>
    %14 = vector.multi_reduction <add>, %13, %cst_9 [2] : vector<8x4x16xf32> to vector<8x4xf32>
    %cst_10 = arith.constant dense<0xFF800000> : vector<8xf32>
    %15 = vector.multi_reduction <maximumf>, %14, %cst_10 [1] : vector<8x4xf32> to vector<8xf32>
    %16 = vector.shape_cast %15 : vector<8xf32> to vector<8x1xf32>
    %17 = vector.broadcast %16 : vector<8x1xf32> to vector<8x4xf32>
    %18 = arith.subf %14, %17 : vector<8x4xf32>
    %19 = math.exp %18 : vector<8x4xf32>
    %cst_11 = arith.constant dense<0.000000e+00> : vector<8xf32>
    %20 = vector.multi_reduction <add>, %19, %cst_11 [1] : vector<8x4xf32> to vector<8xf32>
    %21 = vector.shape_cast %20 : vector<8xf32> to vector<8x1xf32>
    %22 = tpu.reciprocal %21 {approx = true} : vector<8x1xf32> -> vector<8x1xf32>
    %23 = vector.broadcast %22 : vector<8x1xf32> to vector<8x4xf32>
    %24 = arith.mulf %19, %23 : vector<8x4xf32>
    %25 = vector.shape_cast %24 : vector<8x4xf32> to vector<8x4x1xf32>
    %26 = arith.extf %0 : vector<8x4x32xbf16> to vector<8x4x32xf32>
    %27 = vector.broadcast %25 : vector<8x4x1xf32> to vector<8x4x32xf32>
    %28 = arith.mulf %27, %26 : vector<8x4x32xf32>
    %cst_12 = arith.constant dense<0.000000e+00> : vector<8x32xf32>
    %29 = vector.multi_reduction <add>, %28, %cst_12 [1] : vector<8x4x32xf32> to vector<8x32xf32>
    %c0_13 = arith.constant 0 : index
    %c0_14 = arith.constant 0 : index
    %c0_15 = arith.constant 0 : index
    %30 = vector.load %arg3[%c0_13, %c0_14, %c0_15] : memref<8x4x32xbf16, #tpu.memory_space<vmem>>, vector<8x4x32xbf16>
    %31 = vector.shape_cast %30 : vector<8x4x32xbf16> to vector<32x32xbf16>
    %c0_16 = arith.constant 0 : index
    %c0_17 = arith.constant 0 : index
    %32 = vector.load %arg4[%c0_16, %c0_17] : memref<32x16xbf16, #tpu.memory_space<vmem>>, vector<32x16xbf16>
    %cst_18 = arith.constant dense<0.000000e+00> : vector<32x16xf32>
    %33 = tpu.matmul %31, %32, %cst_18 {dimension_numbers = #tpu.dot_dimension_numbers<[1], [0], [0], [1], [0, 0, 1, 1], [], []>} : vector<32x32xbf16>, vector<32x16xbf16>, vector<32x16xf32> -> vector<32x16xf32>
    %c0_19 = arith.constant 0 : index
    %c0_20 = arith.constant 0 : index
    %34 = vector.load %arg5[%c0_19, %c0_20] : memref<1x16xf32, #tpu.memory_space<vmem>>, vector<1x16xf32>
    %35 = vector.broadcast %34 : vector<1x16xf32> to vector<32x16xf32>
    %36 = arith.addf %33, %35 : vector<32x16xf32>
    %cst_21 = arith.constant 0.000000e+00 : f32
    %37 = vector.broadcast %cst_21 : f32 to vector<32x16xf32>
    %38 = arith.maximumf %36, %37 : vector<32x16xf32>
    %39 = vector.shape_cast %38 : vector<32x16xf32> to vector<8x4x16xf32>
    %c0_22 = arith.constant 0 : index
    %c0_23 = arith.constant 0 : index
    %40 = vector.load %arg6[%c0_22, %c0_23] : memref<1x16xf32, #tpu.memory_space<vmem>>, vector<1x16xf32>
    %41 = vector.shape_cast %40 : vector<1x16xf32> to vector<1x1x16xf32>
    %42 = vector.broadcast %41 : vector<1x1x16xf32> to vector<8x4x16xf32>
    %43 = arith.mulf %39, %42 : vector<8x4x16xf32>
    %cst_24 = arith.constant dense<0.000000e+00> : vector<8x4xf32>
    %44 = vector.multi_reduction <add>, %43, %cst_24 [2] : vector<8x4x16xf32> to vector<8x4xf32>
    %cst_25 = arith.constant dense<0xFF800000> : vector<8xf32>
    %45 = vector.multi_reduction <maximumf>, %44, %cst_25 [1] : vector<8x4xf32> to vector<8xf32>
    %46 = vector.shape_cast %45 : vector<8xf32> to vector<8x1xf32>
    %47 = vector.broadcast %46 : vector<8x1xf32> to vector<8x4xf32>
    %48 = arith.subf %44, %47 : vector<8x4xf32>
    %49 = math.exp %48 : vector<8x4xf32>
    %cst_26 = arith.constant dense<0.000000e+00> : vector<8xf32>
    %50 = vector.multi_reduction <add>, %49, %cst_26 [1] : vector<8x4xf32> to vector<8xf32>
    %51 = vector.shape_cast %50 : vector<8xf32> to vector<8x1xf32>
    %52 = tpu.reciprocal %51 {approx = true} : vector<8x1xf32> -> vector<8x1xf32>
    %53 = vector.broadcast %52 : vector<8x1xf32> to vector<8x4xf32>
    %54 = arith.mulf %49, %53 : vector<8x4xf32>
    %55 = vector.shape_cast %54 : vector<8x4xf32> to vector<8x4x1xf32>
    %56 = arith.extf %30 : vector<8x4x32xbf16> to vector<8x4x32xf32>
    %57 = vector.broadcast %55 : vector<8x4x1xf32> to vector<8x4x32xf32>
    %58 = arith.mulf %57, %56 : vector<8x4x32xf32>
    %cst_27 = arith.constant dense<0.000000e+00> : vector<8x32xf32>
    %59 = vector.multi_reduction <add>, %58, %cst_27 [1] : vector<8x4x32xf32> to vector<8x32xf32>
    %c0_28 = arith.constant 0 : index
    %c0_29 = arith.constant 0 : index
    %c0_30 = arith.constant 0 : index
    %60 = vector.load %arg1[%c0_28, %c0_29, %c0_30] : memref<8x3x32xbf16, #tpu.memory_space<vmem>>, vector<8x3x32xbf16>
    %61 = vector.extract_strided_slice %60 {offsets = [0, 0, 0], sizes = [8, 1, 32], strides = [1, 1, 1]} : vector<8x3x32xbf16> to vector<8x1x32xbf16>
    %62 = vector.shape_cast %61 : vector<8x1x32xbf16> to vector<8x32xbf16>
    %c0_31 = arith.constant 0 : index
    %c0_32 = arith.constant 0 : index
    %c0_33 = arith.constant 0 : index
    %63 = vector.load %arg7[%c0_31, %c0_32, %c0_33] : memref<5x32x32xbf16, #tpu.memory_space<vmem>>, vector<1x32x32xbf16>
    %64 = vector.shape_cast %63 : vector<1x32x32xbf16> to vector<32x32xbf16>
    %cst_34 = arith.constant dense<0.000000e+00> : vector<8x32xf32>
    %65 = tpu.matmul %62, %64, %cst_34 {dimension_numbers = #tpu.dot_dimension_numbers<[1], [0], [0], [1], [0, 0, 1, 1], [], []>} : vector<8x32xbf16>, vector<32x32xbf16>, vector<8x32xf32> -> vector<8x32xf32>
    %66 = vector.extract_strided_slice %60 {offsets = [0, 1, 0], sizes = [8, 1, 32], strides = [1, 1, 1]} : vector<8x3x32xbf16> to vector<8x1x32xbf16>
    %67 = vector.shape_cast %66 : vector<8x1x32xbf16> to vector<8x32xbf16>
    %c1 = arith.constant 1 : index
    %c0_35 = arith.constant 0 : index
    %c0_36 = arith.constant 0 : index
    %68 = vector.load %arg7[%c1, %c0_35, %c0_36] : memref<5x32x32xbf16, #tpu.memory_space<vmem>>, vector<1x32x32xbf16>
    %69 = vector.shape_cast %68 : vector<1x32x32xbf16> to vector<32x32xbf16>
    %cst_37 = arith.constant dense<0.000000e+00> : vector<8x32xf32>
    %70 = tpu.matmul %67, %69, %cst_37 {dimension_numbers = #tpu.dot_dimension_numbers<[1], [0], [0], [1], [0, 0, 1, 1], [], []>} : vector<8x32xbf16>, vector<32x32xbf16>, vector<8x32xf32> -> vector<8x32xf32>
    %71 = arith.addf %65, %70 : vector<8x32xf32>
    %72 = vector.extract_strided_slice %60 {offsets = [0, 2, 0], sizes = [8, 1, 32], strides = [1, 1, 1]} : vector<8x3x32xbf16> to vector<8x1x32xbf16>
    %73 = vector.shape_cast %72 : vector<8x1x32xbf16> to vector<8x32xbf16>
    %c2 = arith.constant 2 : index
    %c0_38 = arith.constant 0 : index
    %c0_39 = arith.constant 0 : index
    %74 = vector.load %arg7[%c2, %c0_38, %c0_39] : memref<5x32x32xbf16, #tpu.memory_space<vmem>>, vector<1x32x32xbf16>
    %75 = vector.shape_cast %74 : vector<1x32x32xbf16> to vector<32x32xbf16>
    %cst_40 = arith.constant dense<0.000000e+00> : vector<8x32xf32>
    %76 = tpu.matmul %73, %75, %cst_40 {dimension_numbers = #tpu.dot_dimension_numbers<[1], [0], [0], [1], [0, 0, 1, 1], [], []>} : vector<8x32xbf16>, vector<32x32xbf16>, vector<8x32xf32> -> vector<8x32xf32>
    %77 = arith.addf %71, %76 : vector<8x32xf32>
    %78 = arith.truncf %29 : vector<8x32xf32> to vector<8x32xbf16>
    %c3 = arith.constant 3 : index
    %c0_41 = arith.constant 0 : index
    %c0_42 = arith.constant 0 : index
    %79 = vector.load %arg7[%c3, %c0_41, %c0_42] : memref<5x32x32xbf16, #tpu.memory_space<vmem>>, vector<1x32x32xbf16>
    %80 = vector.shape_cast %79 : vector<1x32x32xbf16> to vector<32x32xbf16>
    %cst_43 = arith.constant dense<0.000000e+00> : vector<8x32xf32>
    %81 = tpu.matmul %78, %80, %cst_43 {dimension_numbers = #tpu.dot_dimension_numbers<[1], [0], [0], [1], [0, 0, 1, 1], [], []>} : vector<8x32xbf16>, vector<32x32xbf16>, vector<8x32xf32> -> vector<8x32xf32>
    %82 = arith.addf %77, %81 : vector<8x32xf32>
    %83 = arith.truncf %59 : vector<8x32xf32> to vector<8x32xbf16>
    %c4 = arith.constant 4 : index
    %c0_44 = arith.constant 0 : index
    %c0_45 = arith.constant 0 : index
    %84 = vector.load %arg7[%c4, %c0_44, %c0_45] : memref<5x32x32xbf16, #tpu.memory_space<vmem>>, vector<1x32x32xbf16>
    %85 = vector.shape_cast %84 : vector<1x32x32xbf16> to vector<32x32xbf16>
    %cst_46 = arith.constant dense<0.000000e+00> : vector<8x32xf32>
    %86 = tpu.matmul %83, %85, %cst_46 {dimension_numbers = #tpu.dot_dimension_numbers<[1], [0], [0], [1], [0, 0, 1, 1], [], []>} : vector<8x32xbf16>, vector<32x32xbf16>, vector<8x32xf32> -> vector<8x32xf32>
    %87 = arith.addf %82, %86 : vector<8x32xf32>
    %c0_47 = arith.constant 0 : index
    %c0_48 = arith.constant 0 : index
    %88 = vector.load %arg8[%c0_47, %c0_48] : memref<1x32xf32, #tpu.memory_space<vmem>>, vector<1x32xf32>
    %89 = vector.broadcast %88 : vector<1x32xf32> to vector<8x32xf32>
    %90 = arith.addf %87, %89 : vector<8x32xf32>
    %c0_49 = arith.constant 0 : index
    %c0_50 = arith.constant 0 : index
    %91 = vector.load %arg9[%c0_49, %c0_50] : memref<8x32xf32, #tpu.memory_space<vmem>>, vector<8x32xf32>
    tpu.vector_store %arg9[%c0_49, %c0_50], %90 {strides = array<i32>} : memref<8x32xf32, #tpu.memory_space<vmem>>, vector<8x32xf32>,
    return
  }
  func.func @transform_0(%arg0: i32) -> (i32, i32, i32) {
    %c0_i32 = arith.constant 0 : i32
    %c0_i32_0 = arith.constant 0 : i32
    %c0_i32_1 = arith.constant 0 : i32
    return %arg0, %c0_i32, %c0_i32_0 : i32, i32, i32
  }
  func.func @transform_1(%arg0: i32) -> (i32, i32, i32) {
    %c0_i32 = arith.constant 0 : i32
    %c0_i32_0 = arith.constant 0 : i32
    %c0_i32_1 = arith.constant 0 : i32
    return %arg0, %c0_i32, %c0_i32_0 : i32, i32, i32
  }
  func.func @transform_2(%arg0: i32) -> (i32, i32, i32) {
    %c0_i32 = arith.constant 0 : i32
    %c0_i32_0 = arith.constant 0 : i32
    %c0_i32_1 = arith.constant 0 : i32
    return %arg0, %c0_i32, %c0_i32_0 : i32, i32, i32
  }
  func.func @transform_3(%arg0: i32) -> (i32, i32) {
    %c0_i32 = arith.constant 0 : i32
    %c0_i32_0 = arith.constant 0 : i32
    %c0_i32_1 = arith.constant 0 : i32
    return %c0_i32, %c0_i32_0 : i32, i32
  }
  func.func @transform_4(%arg0: i32) -> (i32, i32) {
    %c0_i32 = arith.constant 0 : i32
    %c0_i32_0 = arith.constant 0 : i32
    %c0_i32_1 = arith.constant 0 : i32
    return %c0_i32, %c0_i32_0 : i32, i32
  }
  func.func @transform_5(%arg0: i32) -> (i32, i32) {
    %c0_i32 = arith.constant 0 : i32
    %c0_i32_0 = arith.constant 0 : i32
    %c0_i32_1 = arith.constant 0 : i32
    return %c0_i32, %c0_i32_0 : i32, i32
  }
  func.func @transform_6(%arg0: i32) -> (i32, i32, i32) {
    %c0_i32 = arith.constant 0 : i32
    %c0_i32_0 = arith.constant 0 : i32
    %c0_i32_1 = arith.constant 0 : i32
    %c0_i32_2 = arith.constant 0 : i32
    return %c0_i32, %c0_i32_0, %c0_i32_1 : i32, i32, i32
  }
  func.func @transform_7(%arg0: i32) -> (i32, i32) {
    %c0_i32 = arith.constant 0 : i32
    %c0_i32_0 = arith.constant 0 : i32
    %c0_i32_1 = arith.constant 0 : i32
    return %c0_i32, %c0_i32_0 : i32, i32
  }
  func.func @transform_8(%arg0: i32) -> (i32, i32) {
    %c0_i32 = arith.constant 0 : i32
    %c0_i32_0 = arith.constant 0 : i32
    return %arg0, %c0_i32 : i32, i32
  }
}

</mosaic_0001>

<llo_original>
// kernel: tpu_custom_call.1
$region0: #{tpu_custom_call.1}
  #allocation0 [shape = 'u32[]', space=smem, size = 0x4, offset = 0x4, fixed_abs, tag = 'smem constant byte address 0x4 - core index']
  #allocation1 [shape = 'u32[72,128]{1,0:T(1,128)}', space=vmem, size = 0x9000, scoped, tag = 'internal scratch']
  %s0 = inlined_call_operand.vmem [shape: bf16[16,3,32], index: 0, kind: input, shape index: {}]
  %s1 = inlined_call_operand.hbm [shape: bf16[16,4,32], index: 1, kind: input, shape index: {}]
  %s2 = inlined_call_operand.hbm [shape: bf16[16,4,32], index: 2, kind: input, shape index: {}]
  %s3 = inlined_call_operand.vmem [shape: bf16[32,16], index: 3, kind: input, shape index: {}]
  %s4 = inlined_call_operand.vmem [shape: f32[1,16], index: 4, kind: input, shape index: {}]
  %s5 = inlined_call_operand.vmem [shape: f32[1,16], index: 5, kind: input, shape index: {}]
  %s6 = inlined_call_operand.vmem [shape: bf16[5,32,32], index: 6, kind: input, shape index: {}]
  %s7 = inlined_call_operand.vmem [shape: f32[1,32], index: 7, kind: input, shape index: {}]
  %s8 = inlined_call_operand.hbm [shape: f32[16,32], index: 8, kind: output, shape index: {}]
  %s9 = sld [smem:[#allocation0]]
  $region73: #{tpu_custom_call.1} parent=0
    _
  %s11 = ssub.s32 1, %s9
  %s12 = scalar_select 0, %s11, %s9
  $region1: #{tpu_custom_call.1} parent=0
    #allocation2 [shape = 'u8[16384]{0}', space=vmem, size = 0x4000, scoped, tag = 'input window, operand 1']
    #allocation3 [shape = 's32[2]{0}', space=sflag, size = 0x8, scoped, tag = 'scoped memory for tpu_custom_call.1']
    #allocation4 [shape = 's32[2]{0}', space=sflag, size = 0x8, scoped, tag = 'scoped memory for tpu_custom_call.1']
    #allocation5 [shape = 'u8[16384]{0}', space=vmem, size = 0x4000, scoped, tag = 'input window, operand 2']
    #allocation6 [shape = 's32[2]{0}', space=sflag, size = 0x8, scoped, tag = 'scoped memory for tpu_custom_call.1']
    #allocation7 [shape = 'u8[8192]{0}', space=vmem, size = 0x2000, scoped, tag = 'output window, operand 0']
    %13 = vsyncpa [#allocation3], 0
    %s14 = scalar_lea.sflag [#allocation3], 1
    %15 = vsyncpa %s14, 0
    %16 = vsyncpa [#allocation6], 0
    %s17 = scalar_lea.sflag [#allocation6], 1
    %18 = vsyncpa %s17, 0
    %19 = vsyncpa [#allocation4], 0
    %s20 = scalar_lea.sflag [#allocation4], 1
    %21 = vsyncpa %s20, 0
    loop: start=0, step=1, limit=4
    $region2: #{tpu_custom_call.1} parent=1 // loop_pre_header
      _
    $region3: #{tpu_custom_call.1} parent=1 // loop_header
      %s23 = sphi 0, %s27
      %p24 = scmp.ge.s32.totalorder %s23, 4
      %s33 = sphi 0, %s35
      %s36 = sphi 0, %s33
      %s37 = sphi 0, %s36
      %s53 = sphi 0, %s37
      %s59 = sphi 0, %s61
      %s62 = sphi 0, %s59
      %s63 = sphi 0, %s62
      %s79 = sphi 0, %s63
      %s85 = sphi 0, %s87
      %s88 = sphi 0, %s85
      %s89 = sphi 0, %s88
      %s105 = sphi 0, %s89
      %s109 = sphi 0, %s109
      %s111 = sphi 0, %s109
      %s112 = sphi 0, %s111
      %s126 = sphi 0, %s112
      %s130 = sphi 0, %s130
      %s132 = sphi 0, %s130
      %s133 = sphi 0, %s132
      %s147 = sphi 0, %s133
      %s151 = sphi 0, %s151
      %s153 = sphi 0, %s151
      %s154 = sphi 0, %s153
      %s168 = sphi 0, %s154
      %s172 = sphi 0, %s172
      %s174 = sphi 0, %s172
      %s175 = sphi 0, %s174
      %s189 = sphi 0, %s175
      %s193 = sphi 0, %s193
      %s195 = sphi 0, %s193
      %s196 = sphi 0, %s195
      %s210 = sphi 0, %s196
      %s216 = sphi 0, %s218
      %s219 = sphi 0, %s216
      %s220 = sphi 0, %s219
      %s236 = sphi 0, %s220
    $region4: #{tpu_custom_call.1} parent=1 // loop_header_branch
      %26 = sbr.rel (%p24) target = $region8
    $region5: #{tpu_custom_call.1} parent=1 // loop_body
      %s28 = ssub.s32 %s23, 1
      %s29 = ssub.s32 %s23, 2
      %s30 = sadd.s32 %s23, 1
      %s31 = ssub.s32 %s23, %s30
      %p32 = scmp.eq.s32.totalorder %s31, 0
      %s34 = sadd.s32 %s33, 1
      %s35 = scalar_select %p32, %s33, %s34
      %p38 = pneg %p32
      %p39 = scmp.eq.s32.totalorder %s23, 1
      %p40 = por %p38, %p39
      %p41 = scmp.ne.s32.totalorder %s33, %s36
      %p42 = scmp.eq.s32.totalorder %s23, 0
      %p43 = por %p41, %p42
      %p44 = scmp.ne.s32.totalorder %s33, %s36
      %p45 = scmp.eq.s32.totalorder %s28, 1
      %p46 = por %p44, %p45
      %p47 = scmp.ne.s32.totalorder %s36, %s37
      %p48 = scmp.eq.s32.totalorder %s28, 0
      %p49 = por %p47, %p48
      %p50 = scmp.ne.s32.totalorder %s36, %s37
      %p51 = scmp.eq.s32.totalorder %s29, 1
      %p52 = por %p50, %p51
      %p54 = scmp.ne.s32.totalorder %s37, %s53
      %p55 = scmp.eq.s32.totalorder %s29, 0
      %p56 = por %p54, %p55
      %s57 = ssub.s32 %s23, %s30
      %p58 = scmp.eq.s32.totalorder %s57, 0
      %s60 = sadd.s32 %s59, 1
      %s61 = scalar_select %p58, %s59, %s60
      %p64 = pneg %p58
      %p65 = scmp.eq.s32.totalorder %s23, 1
      %p66 = por %p64, %p65
      %p67 = scmp.ne.s32.totalorder %s59, %s62
      %p68 = scmp.eq.s32.totalorder %s23, 0
      %p69 = por %p67, %p68
      %p70 = scmp.ne.s32.totalorder %s59, %s62
      %p71 = scmp.eq.s32.totalorder %s28, 1
      %p72 = por %p70, %p71
      %p73 = scmp.ne.s32.totalorder %s62, %s63
      %p74 = scmp.eq.s32.totalorder %s28, 0
      %p75 = por %p73, %p74
      %p76 = scmp.ne.s32.totalorder %s62, %s63
      %p77 = scmp.eq.s32.totalorder %s29, 1
      %p78 = por %p76, %p77
      %p80 = scmp.ne.s32.totalorder %s63, %s79
      %p81 = scmp.eq.s32.totalorder %s29, 0
      %p82 = por %p80, %p81
      %s83 = ssub.s32 %s23, %s30
      %p84 = scmp.eq.s32.totalorder %s83, 0
      %s86 = sadd.s32 %s85, 1
      %s87 = scalar_select %p84, %s85, %s86
      %p90 = pneg %p84
      %p91 = scmp.eq.s32.totalorder %s23, 1
      %p92 = por %p90, %p91
      %p93 = scmp.ne.s32.totalorder %s85, %s88
      %p94 = scmp.eq.s32.totalorder %s23, 0
      %p95 = por %p93, %p94
      %p96 = scmp.ne.s32.totalorder %s85, %s88
      %p97 = scmp.eq.s32.totalorder %s28, 1
      %p98 = por %p96, %p97
      %p99 = scmp.ne.s32.totalorder %s88, %s89
      %p100 = scmp.eq.s32.totalorder %s28, 0
      %p101 = por %p99, %p100
      %p102 = scmp.ne.s32.totalorder %s88, %s89
      %p103 = scmp.eq.s32.totalorder %s29, 1
      %p104 = por %p102, %p103
      %p106 = scmp.ne.s32.totalorder %s89, %s105
      %p107 = scmp.eq.s32.totalorder %s29, 0
      %p108 = por %p106, %p107
      %s110 = sadd.s32 %s109, 1
      %p113 = scmp.eq.s32.totalorder %s23, 1
      %p114 = scmp.ne.s32.totalorder %s109, %s111
      %p115 = scmp.eq.s32.totalorder %s23, 0
      %p116 = por %p114, %p115
      %p117 = scmp.ne.s32.totalorder %s109, %s111
      %p118 = scmp.eq.s32.totalorder %s28, 1
      %p119 = por %p117, %p118
      %p120 = scmp.ne.s32.totalorder %s111, %s112
      %p121 = scmp.eq.s32.totalorder %s28, 0
      %p122 = por %p120, %p121
      %p123 = scmp.ne.s32.totalorder %s111, %s112
      %p124 = scmp.eq.s32.totalorder %s29, 1
      %p125 = por %p123, %p124
      %p127 = scmp.ne.s32.totalorder %s112, %s126
      %p128 = scmp.eq.s32.totalorder %s29, 0
      %p129 = por %p127, %p128
      %s131 = sadd.s32 %s130, 1
      %p134 = scmp.eq.s32.totalorder %s23, 1
      %p135 = scmp.ne.s32.totalorder %s130, %s132
      %p136 = scmp.eq.s32.totalorder %s23, 0
      %p137 = por %p135, %p136
      %p138 = scmp.ne.s32.totalorder %s130, %s132
      %p139 = scmp.eq.s32.totalorder %s28, 1
      %p140 = por %p138, %p139
      %p141 = scmp.ne.s32.totalorder %s132, %s133
      %p142 = scmp.eq.s32.totalorder %s28, 0
      %p143 = por %p141, %p142
      %p144 = scmp.ne.s32.totalorder %s132, %s133
      %p145 = scmp.eq.s32.totalorder %s29, 1
      %p146 = por %p144, %p145
      %p148 = scmp.ne.s32.totalorder %s133, %s147
      %p149 = scmp.eq.s32.totalorder %s29, 0
      %p150 = por %p148, %p149
      %s152 = sadd.s32 %s151, 1
      %p155 = scmp.eq.s32.totalorder %s23, 1
      %p156 = scmp.ne.s32.totalorder %s151, %s153
      %p157 = scmp.eq.s32.totalorder %s23, 0
      %p158 = por %p156, %p157
      %p159 = scmp.ne.s32.totalorder %s151, %s153
      %p160 = scmp.eq.s32.totalorder %s28, 1
      %p161 = por %p159, %p160
      %p162 = scmp.ne.s32.totalorder %s153, %s154
      %p163 = scmp.eq.s32.totalorder %s28, 0
      %p164 = por %p162, %p163
      %p165 = scmp.ne.s32.totalorder %s153, %s154
      %p166 = scmp.eq.s32.totalorder %s29, 1
      %p167 = por %p165, %p166
      %p169 = scmp.ne.s32.totalorder %s154, %s168
      %p170 = scmp.eq.s32.totalorder %s29, 0
      %p171 = por %p169, %p170
      %s173 = sadd.s32 %s172, 1
      %p176 = scmp.eq.s32.totalorder %s23, 1
      %p177 = scmp.ne.s32.totalorder %s172, %s174
      %p178 = scmp.eq.s32.totalorder %s23, 0
      %p179 = por %p177, %p178
      %p180 = scmp.ne.s32.totalorder %s172, %s174
      %p181 = scmp.eq.s32.totalorder %s28, 1
      %p182 = por %p180, %p181
      %p183 = scmp.ne.s32.totalorder %s174, %s175
      %p184 = scmp.eq.s32.totalorder %s28, 0
      %p185 = por %p183, %p184
      %p186 = scmp.ne.s32.totalorder %s174, %s175
      %p187 = scmp.eq.s32.totalorder %s29, 1
      %p188 = por %p186, %p187
      %p190 = scmp.ne.s32.totalorder %s175, %s189
      %p191 = scmp.eq.s32.totalorder %s29, 0
      %p192 = por %p190, %p191
      %s194 = sadd.s32 %s193, 1
      %p197 = scmp.eq.s32.totalorder %s23, 1
      %p198 = scmp.ne.s32.totalorder %s193, %s195
      %p199 = scmp.eq.s32.totalorder %s23, 0
      %p200 = por %p198, %p199
      %p201 = scmp.ne.s32.totalorder %s193, %s195
      %p202 = scmp.eq.s32.totalorder %s28, 1
      %p203 = por %p201, %p202
      %p204 = scmp.ne.s32.totalorder %s195, %s196
      %p205 = scmp.eq.s32.totalorder %s28, 0
      %p206 = por %p204, %p205
      %p207 = scmp.ne.s32.totalorder %s195, %s196
      %p208 = scmp.eq.s32.totalorder %s29, 1
      %p209 = por %p207, %p208
      %p211 = scmp.ne.s32.totalorder %s196, %s210
      %p212 = scmp.eq.s32.totalorder %s29, 0
      %p213 = por %p211, %p212
      %s214 = ssub.s32 %s23, %s30
      %p215 = scmp.eq.s32.totalorder %s214, 0
      %s217 = sadd.s32 %s216, 1
      %s218 = scalar_select %p215, %s216, %s217
      %p221 = pneg %p215
      %p222 = scmp.eq.s32.totalorder %s23, 1
      %p223 = por %p221, %p222
      %p224 = scmp.ne.s32.totalorder %s216, %s219
      %p225 = scmp.eq.s32.totalorder %s23, 0
      %p226 = por %p224, %p225
      %p227 = scmp.ne.s32.totalorder %s216, %s219
      %p228 = scmp.eq.s32.totalorder %s28, 1
      %p229 = por %p227, %p228
      %p230 = scmp.ne.s32.totalorder %s219, %s220
      %p231 = scmp.eq.s32.totalorder %s28, 0
      %p232 = por %p230, %p231
      %p233 = scmp.ne.s32.totalorder %s219, %s220
      %p234 = scmp.eq.s32.totalorder %s29, 1
      %p235 = por %p233, %p234
      %p237 = scmp.ne.s32.totalorder %s220, %s236
      %p238 = scmp.eq.s32.totalorder %s29, 0
      %p239 = por %p237, %p238
      %p240 = scmp.le.s32.totalorder 1, %s23
      %p241 = scmp.lt.s32.totalorder %s23, 3
      %p242 = pnand %p240, %p241
      %p243 = pneg %p242
      // Predicated region
      $region9: #{tpu_custom_call.1} parent=5 // pred_check
        _
      $region10: #{tpu_custom_call.1} parent=5 // pred_check_branch
        %245 = sbr.rel (%p242) target = $region12
      $region11: #{tpu_custom_call.1} parent=5 // pred_region
        %s246 = ssub.s32 %s23, 1
        // Predicated region
        $region13: #{tpu_custom_call.1} parent=11 // pred_check
          %p247 = pneg %p122
        $region14: #{tpu_custom_call.1} parent=11 // pred_check_branch
          %249 = sbr.rel (%p247) target = $region16
        $region15: #{tpu_custom_call.1} parent=11 // pred_region
          _
        $region16: #{tpu_custom_call.1} parent=11 // pred_fallthru
          _
        // Predicated region
        $region17: #{tpu_custom_call.1} parent=11 // pred_check
          %p250 = pneg %p143
        $region18: #{tpu_custom_call.1} parent=11 // pred_check_branch
          %252 = sbr.rel (%p250) target = $region20
        $region19: #{tpu_custom_call.1} parent=11 // pred_region
          _
        $region20: #{tpu_custom_call.1} parent=11 // pred_fallthru
          _
        // Predicated region
        $region21: #{tpu_custom_call.1} parent=11 // pred_check
          %p253 = pneg %p164
        $region22: #{tpu_custom_call.1} parent=11 // pred_check_branch
          %255 = sbr.rel (%p253) target = $region24
        $region23: #{tpu_custom_call.1} parent=11 // pred_region
          _
        $region24: #{tpu_custom_call.1} parent=11 // pred_fallthru
          _
        // Predicated region
        $region25: #{tpu_custom_call.1} parent=11 // pred_check
          %p256 = pneg %p185
        $region26: #{tpu_custom_call.1} parent=11 // pred_check_branch
          %258 = sbr.rel (%p256) target = $region28
        $region27: #{tpu_custom_call.1} parent=11 // pred_region
          _
        $region28: #{tpu_custom_call.1} parent=11 // pred_fallthru
          _
        // Predicated region
        $region29: #{tpu_custom_call.1} parent=11 // pred_check
          %p259 = pneg %p206
        $region30: #{tpu_custom_call.1} parent=11 // pred_check_branch
          %261 = sbr.rel (%p259) target = $region32
        $region31: #{tpu_custom_call.1} parent=11 // pred_region
          _
        $region32: #{tpu_custom_call.1} parent=11 // pred_fallthru
          _
      $region12: #{tpu_custom_call.1} parent=5 // pred_fallthru
        _
      %p262 = scmp.lt.s32.totalorder %s23, 2
      // Predicated region
      $region33: #{tpu_custom_call.1} parent=5 // pred_check
        %p263 = pneg %p262
      $region34: #{tpu_custom_call.1} parent=5 // pred_check_branch
        %265 = sbr.rel (%p263) target = $region36
      $region35: #{tpu_custom_call.1} parent=5 // pred_region
        // Predicated region
        $region37: #{tpu_custom_call.1} parent=35 // pred_check
          %p266 = pneg %p43
        $region38: #{tpu_custom_call.1} parent=35 // pred_check_branch
          %268 = sbr.rel (%p266) target = $region40
        $region39: #{tpu_custom_call.1} parent=35 // pred_region
          %s269 = smul.u32 8, %s23
          %p270 = scmp.lt.s32.totalorder %s269, 15
          %s271 = scalar_select %p270, %s269, 15
          %s272 = smul.addr %s271, 2
          %s273 = scalar_lea.vmem %s0, %s272
          %s274 = smul.u32 8, %s23
        $region40: #{tpu_custom_call.1} parent=35 // pred_fallthru
          _
        // Predicated region
        $region41: #{tpu_custom_call.1} parent=35 // pred_check
          %p275 = pneg %p69
        $region42: #{tpu_custom_call.1} parent=35 // pred_check_branch
          %277 = sbr.rel (%p275) target = $region44
        $region43: #{tpu_custom_call.1} parent=35 // pred_region
          %s278 = sand.u32 %s59, 1
          %s279 = scalar_lea.sflag [#allocation3], %s278
          %s280 = sand.u32 %s59, 1
          %s281 = smul.addr %s280, 16
          %s282 = scalar_lea.vmem [#allocation2], %s281
          %s283 = smul.u32 8, %s23
          %285 = vsyncadd %s279, 0
          %s286 = smul.addr %s283, 2
          %s287 = scalar_lea.hbm %s1, %s286
          %s288 = sshll.u32 %s287, 4
          %s289 = int_to_ptr.hbm [resolvable:$true] %s288
          %s290 = sshll.u32 %s282, 4
          %s291 = int_to_ptr.vmem [resolvable:$true] %s290
          %296 = dma.hbm_to_vmem [thread:$0]  %s289, 256, %s291, %s279, 32, 32, 2
        $region44: #{tpu_custom_call.1} parent=35 // pred_fallthru
          _
        // Predicated region
        $region45: #{tpu_custom_call.1} parent=35 // pred_check
          %p297 = pneg %p95
        $region46: #{tpu_custom_call.1} parent=35 // pred_check_branch
          %299 = sbr.rel (%p297) target = $region48
        $region47: #{tpu_custom_call.1} parent=35 // pred_region
          %s300 = sand.u32 %s85, 1
          %s301 = scalar_lea.sflag [#allocation6], %s300
          %s302 = sand.u32 %s85, 1
          %s303 = smul.addr %s302, 16
          %s304 = scalar_lea.vmem [#allocation5], %s303
          %s305 = smul.u32 8, %s23
          %307 = vsyncadd %s301, 0
          %s308 = smul.addr %s305, 2
          %s309 = scalar_lea.hbm %s2, %s308
          %s310 = sshll.u32 %s309, 4
          %s311 = int_to_ptr.hbm [resolvable:$true] %s310
          %s312 = sshll.u32 %s304, 4
          %s313 = int_to_ptr.vmem [resolvable:$true] %s312
          %318 = dma.hbm_to_vmem [thread:$0]  %s311, 256, %s313, %s301, 32, 32, 2
        $region48: #{tpu_custom_call.1} parent=35 // pred_fallthru
          _
      $region36: #{tpu_custom_call.1} parent=5 // pred_fallthru
        _
      %p319 = scmp.le.s32.totalorder 1, %s23
      %p320 = scmp.lt.s32.totalorder %s23, 3
      %p321 = pnand %p319, %p320
      %p322 = pneg %p321
      // Predicated region
      $region49: #{tpu_custom_call.1} parent=5 // pred_check
        _
      $region50: #{tpu_custom_call.1} parent=5 // pred_check_branch
        %324 = sbr.rel (%p321) target = $region52
      $region51: #{tpu_custom_call.1} parent=5 // pred_region
        %s325 = ssub.s32 %s23, 1
        %s326 = sand.u32 %s62, 1
        %s327 = scalar_lea.sflag [#allocation3], %s326
        %s328 = sand.u32 %s62, 1
        %s329 = smul.addr %s328, 16
        %s330 = scalar_lea.vmem [#allocation2], %s329
        // Predicated region
        $region53: #{tpu_custom_call.1} parent=51 // pred_check
          %p331 = pneg %p75
        $region54: #{tpu_custom_call.1} parent=51 // pred_check_branch
          %333 = sbr.rel (%p331) target = $region56
        $region55: #{tpu_custom_call.1} parent=51 // pred_region
          %335 = dma.done %s327, 256
        $region56: #{tpu_custom_call.1} parent=51 // pred_fallthru
          _
        %s336 = sand.u32 %s88, 1
        %s337 = scalar_lea.sflag [#allocation6], %s336
        %s338 = sand.u32 %s88, 1
        %s339 = smul.addr %s338, 16
        %s340 = scalar_lea.vmem [#allocation5], %s339
        // Predicated region
        $region57: #{tpu_custom_call.1} parent=51 // pred_check
          %p341 = pneg %p101
        $region58: #{tpu_custom_call.1} parent=51 // pred_check_branch
          %343 = sbr.rel (%p341) target = $region60
        $region59: #{tpu_custom_call.1} parent=51 // pred_region
          %345 = dma.done %s337, 256
        $region60: #{tpu_custom_call.1} parent=51 // pred_fallthru
          _
        %s346 = smul.u32 8, %s28
        %p347 = scmp.lt.s32.totalorder %s346, 15
        %s348 = scalar_select %p347, %s346, 15
        %s349 = smul.addr %s348, 2
        %s350 = scalar_lea.vmem %s0, %s349
        %p351 = pneg %p49
        %p352 = pneg %p46
        %s353 = sand.u32 %s62, 1
        %s354 = scalar_lea.sflag [#allocation3], %s353
        %s355 = sand.u32 %s62, 1
        %s356 = smul.addr %s355, 16
        %s357 = scalar_lea.vmem [#allocation2], %s356
        %p358 = pneg %p75
        %p359 = pneg %p72
        %s360 = sand.u32 %s88, 1
        %s361 = scalar_lea.sflag [#allocation6], %s360
        %s362 = sand.u32 %s88, 1
        %s363 = smul.addr %s362, 16
        %s364 = scalar_lea.vmem [#allocation5], %s363
        %p365 = pneg %p101
        %p366 = pneg %p98
        %p367 = pneg %p122
        %p368 = pneg %p119
        %p369 = pneg %p143
        %p370 = pneg %p140
        %p371 = pneg %p164
        %p372 = pneg %p161
        %p373 = pneg %p185
        %p374 = pneg %p182
        %p375 = pneg %p206
        %p376 = pneg %p203
        %p377 = pneg %p232
        %p378 = pneg %p229
        %s379 = sand.u32 %s219, 1
        %s380 = scalar_lea.sflag [#allocation4], %s379
        %s381 = sand.u32 %s219, 1
        %s382 = smul.addr %s381, 8
        %s383 = scalar_lea.vmem [#allocation7], %s382
        %s384 = smul.u32 8, %s28
        %p385 = scmp.lt.s32.totalorder %s384, 15
        %s386 = scalar_select %p385, %s384, 15
        %s387 = smul.addr %s386, 2
        %s388 = scalar_lea.vmem %s0, %s387
        %s389 = smul.u32 8, %s28
        %s390 = smul.u32 8, %s28
        %s391 = smul.u32 8, %s28
        %v393 = vld [vmem:[%s330] sm:$0x3]
        %v394 = vld [vmem:[%s330 + $0x2] sm:$0x3]
        %v395 = vld [vmem:[%s330 + $0x4] sm:$0x3]
        %v396 = vld [vmem:[%s330 + $0x6] sm:$0x3]
        %v397 = vld [vmem:[%s330 + $0x8] sm:$0x3]
        %v398 = vld [vmem:[%s330 + $0xa] sm:$0x3]
        %v399 = vld [vmem:[%s330 + $0xc] sm:$0x3]
        %v400 = vld [vmem:[%s330 + $0xe] sm:$0x3]
        %v401 = vld [vmem:[%s3] sm:$0xf]
        %v402 = vld [vmem:[%s3 + $0x4] sm:$0xf]
        %v403 = vld [vmem:[%s3 + $0x8] sm:$0xf]
        %v404 = vld [vmem:[%s3 + $0xc] sm:$0xf]
        %v405 = vld [vmem:[%s4] sm:$0x1]
        %v407 = vperm.slane %v405, 0
        %410 = vst [vmem:[#allocation1] ss:$4 sm:$0xff] %v393
        %s412 = scalar_lea.vmem [#allocation1], 1
        %413 = vst [vmem:[%s412] ss:$4 sm:$0xff] %v394
        %s415 = scalar_lea.vmem [#allocation1], 2
        %416 = vst [vmem:[%s415] ss:$4 sm:$0xff] %v395
        %s418 = scalar_lea.vmem [#allocation1], 3
        %419 = vst [vmem:[%s418] ss:$4 sm:$0xff] %v396
        %s421 = scalar_lea.vmem [#allocation1], 32
        %422 = vst [vmem:[%s421] ss:$4 sm:$0xff] %v397
        %s424 = scalar_lea.vmem [#allocation1], 33
        %425 = vst [vmem:[%s424] ss:$4 sm:$0xff] %v398
        %s427 = scalar_lea.vmem [#allocation1], 34
        %428 = vst [vmem:[%s427] ss:$4 sm:$0xff] %v399
        %s430 = scalar_lea.vmem [#allocation1], 35
        %431 = vst [vmem:[%s430] ss:$4 sm:$0xff] %v400
        %v432 = vld.sshfl [vmem:[#allocation1] sm:$0xff pattern:$0x73625140]
        %v433 = vld.sshfl [vmem:[#allocation1 + $0x20] sm:$0xff pattern:$0x73625140]
        %v438 = vunpack.c.l.b16 %v401
        %v439 = vunpack.c.l.b16 %v402
        %v440 = vunpack.c.l.b16 %v403
        %v441 = vunpack.c.l.b16 %v404
        %v442 = vpack.c.b16 %v439, %v438
        %v443 = vpack.c.b16 %v441, %v440
        %vm446 = vcmask 261120
        %v447 = vsel %vm446, %v432, 0
        %v449 = vsel %vm446, %v433, 0
        %451 = vmatpush.bf16.msra.mxu0 0
        %452 = vmatpush.bf16.msra.mxu0 0
        %453 = vmatpush.bf16.msra.mxu0 0
        %454 = vmatpush.bf16.msra.mxu0 0
        %455 = vmatpush.bf16.msra.mxu0 0
        %456 = vmatpush.bf16.msra.mxu0 0
        %457 = vmatpush.bf16.msra.mxu0 %v443
        %458 = vmatpush.bf16.msra.mxu0 %v442
        %459 = vmatmul.bf16.gmra.mxu0 %v447
        %v460 = vpop.f32.mrf.mxu0
        %v461 = vadd.f32 %v407, %v460
        %v462 = vpop.f32.mrf.mxu0
        %v463 = vadd.f32 %v407, %v462
        %464 = vmatmul.bf16.gmra.mxu0 %v449
        %v465 = vpop.f32.mrf.mxu0
        %v466 = vadd.f32 %v407, %v465
        %v467 = vpop.f32.mrf.mxu0
        %v468 = vadd.f32 %v407, %v467
        %469 = vdwg.mxu0
        %v470 = vmax.f32 %v461, 0.0
        %v471 = vmax.f32 %v463, 0.0
        %v472 = vmax.f32 %v466, 0.0
        %v473 = vmax.f32 %v468, 0.0
        %v478 = vrot.slane %v470, 4
        %v479 = vrot.slane %v471, 4
        %v480 = vrot.slane %v472, 4
        %v481 = vrot.slane %v473, 4
        %v486 = vld [vmem:[%s5] sm:$0x1]
        %v488 = vperm.slane %v486, 0
        %v490 = vmul.f32 %v470, %v488
        %v491 = vmul.f32 %v478, %v488
        %v492 = vmul.f32 %v471, %v488
        %v493 = vmul.f32 %v479, %v488
        %v494 = vmul.f32 %v472, %v488
        %v495 = vmul.f32 %v480, %v488
        %v496 = vmul.f32 %v473, %v488
        %v497 = vmul.f32 %v481, %v488
        %vm498 = vcmask 125952
        %v499 = vsel %vm498, %v490, 0.0
        %500 = vadd.xlane.f32.xlu0 %v499
        %v501 = vpop.xlane.xlu0 %500
        %v502 = vsel %vm498, %v491, 0.0
        %503 = vadd.xlane.f32.xlu0 %v502
        %v504 = vpop.xlane.xlu0 %503
        %v505 = vsel %vm498, %v492, 0.0
        %506 = vadd.xlane.f32.xlu0 %v505
        %v507 = vpop.xlane.xlu0 %506
        %v508 = vsel %vm498, %v493, 0.0
        %509 = vadd.xlane.f32.xlu0 %v508
        %v510 = vpop.xlane.xlu0 %509
        %v511 = vsel %vm498, %v494, 0.0
        %512 = vadd.xlane.f32.xlu0 %v511
        %v513 = vpop.xlane.xlu0 %512
        %v514 = vsel %vm498, %v495, 0.0
        %515 = vadd.xlane.f32.xlu0 %v514
        %v516 = vpop.xlane.xlu0 %515
        %v517 = vsel %vm498, %v496, 0.0
        %518 = vadd.xlane.f32.xlu0 %v517
        %v519 = vpop.xlane.xlu0 %518
        %v520 = vsel %vm498, %v497, 0.0
        %521 = vadd.xlane.f32.xlu0 %v520
        %v522 = vpop.xlane.xlu0 %521
        %v531 = vlaneseq
        %v532 = vand.u32 %v531, 127
        %v533 = vperm.slane %v501, %v532
        %v534 = vperm.slane %v504, %v532
        %v535 = vperm.slane %v507, %v532
        %v536 = vperm.slane %v510, %v532
        %v537 = vperm.slane %v513, %v532
        %v538 = vperm.slane %v516, %v532
        %v539 = vperm.slane %v519, %v532
        %v540 = vperm.slane %v522, %v532
        %vm541 = vcmask 1041409
        %v542 = vsel %vm541, %v534, %v533
        %vm543 = vcmask 1042434
        %v544 = vsel %vm543, %v535, %v542
        %vm545 = vcmask 1043459
        %v546 = vsel %vm545, %v536, %v544
        %vm547 = vcmask 1044484
        %v548 = vsel %vm547, %v537, %v546
        %vm549 = vcmask 1045509
        %v550 = vsel %vm549, %v538, %v548
        %vm551 = vcmask 1046534
        %v552 = vsel %vm551, %v539, %v550
        %vm553 = vcmask 1047559
        %v554 = vsel %vm553, %v540, %v552
        %vm556 = vcmask 31744
        %v557 = vsel %vm556, %v554, -inf
        %558 = vmax.xlane.f32.xlu0 %v557
        %v559 = vpop.xlane.xlu0 %558
        %v561 = vperm.slane %v559, 0
        %v562 = vperm.slane %v559, 1
        %v563 = vperm.slane %v559, 2
        %v564 = vperm.slane %v559, 3
        %v565 = vperm.slane %v559, 4
        %v566 = vperm.slane %v559, 5
        %v567 = vperm.slane %v559, 6
        %v568 = vperm.slane %v559, 7
        %v577 = vsub.f32 %v501, %v561
        %v578 = vsub.f32 %v504, %v562
        %v579 = vsub.f32 %v507, %v563
        %v580 = vsub.f32 %v510, %v564
        %v581 = vsub.f32 %v513, %v565
        %v582 = vsub.f32 %v516, %v566
        %v583 = vsub.f32 %v519, %v567
        %v584 = vsub.f32 %v522, %v568
        %v585 = vmul.f32 %v577, 1.442695
        %v586 = vpow.pop %v585
        %v587 = vmul.f32 %v578, 1.442695
        %v588 = vpow.pop %v587
        %v589 = vmul.f32 %v579, 1.442695
        %v590 = vpow.pop %v589
        %v591 = vmul.f32 %v580, 1.442695
        %v592 = vpow.pop %v591
        %v593 = vmul.f32 %v581, 1.442695
        %v594 = vpow.pop %v593
        %v595 = vmul.f32 %v582, 1.442695
        %v596 = vpow.pop %v595
        %v597 = vmul.f32 %v583, 1.442695
        %v598 = vpow.pop %v597
        %v599 = vmul.f32 %v584, 1.442695
        %v600 = vpow.pop %v599
        %609 = vset.pattern.permute.xlu0 0
        %610 = vperm.xlu0 %609, %v586
        %v611 = vpop.permute.xlu0 %610
        %612 = vset.pattern.permute.xlu0 0
        %613 = vperm.xlu0 %612, %v588
        %v614 = vpop.permute.xlu0 %613
        %615 = vset.pattern.permute.xlu0 0
        %616 = vperm.xlu0 %615, %v590
        %v617 = vpop.permute.xlu0 %616
        %618 = vset.pattern.permute.xlu0 0
        %619 = vperm.xlu0 %618, %v592
        %v620 = vpop.permute.xlu0 %619
        %621 = vset.pattern.permute.xlu0 0
        %622 = vperm.xlu0 %621, %v594
        %v623 = vpop.permute.xlu0 %622
        %624 = vset.pattern.permute.xlu0 0
        %625 = vperm.xlu0 %624, %v596
        %v626 = vpop.permute.xlu0 %625
        %627 = vset.pattern.permute.xlu0 0
        %628 = vperm.xlu0 %627, %v598
        %v629 = vpop.permute.xlu0 %628
        %630 = vset.pattern.permute.xlu0 0
        %631 = vperm.xlu0 %630, %v600
        %v632 = vpop.permute.xlu0 %631
        %v633 = vperm.slane %v611, %v532
        %v634 = vperm.slane %v614, %v532
        %v635 = vperm.slane %v617, %v532
        %v636 = vperm.slane %v620, %v532
        %v637 = vperm.slane %v623, %v532
        %v638 = vperm.slane %v626, %v532
        %v639 = vperm.slane %v629, %v532
        %v640 = vperm.slane %v632, %v532
        %v641 = vsel %vm541, %v634, %v633
        %v642 = vsel %vm543, %v635, %v641
        %v643 = vsel %vm545, %v636, %v642
        %v644 = vsel %vm547, %v637, %v643
        %v645 = vsel %vm549, %v638, %v644
        %v646 = vsel %vm551, %v639, %v645
        %v647 = vsel %vm553, %v640, %v646
        %v649 = vsel %vm556, %v647, 0.0
        %650 = vadd.xlane.f32.xlu0 %v649
        %v651 = vpop.xlane.xlu0 %650
        %v652 = vrcp.pop %v651
        %v654 = vperm.slane %v652, 0
        %v655 = vperm.slane %v652, 1
        %v656 = vperm.slane %v652, 2
        %v657 = vperm.slane %v652, 3
        %v658 = vperm.slane %v652, 4
        %v659 = vperm.slane %v652, 5
        %v660 = vperm.slane %v652, 6
        %v661 = vperm.slane %v652, 7
        %v670 = vmul.f32 %v586, %v654
        %v671 = vmul.f32 %v588, %v655
        %v672 = vmul.f32 %v590, %v656
        %v673 = vmul.f32 %v592, %v657
        %v674 = vmul.f32 %v594, %v658
        %v675 = vmul.f32 %v596, %v659
        %v676 = vmul.f32 %v598, %v660
        %v677 = vmul.f32 %v600, %v661
        %v678 = vunpack.c.l.bf16 %v393
        %v679 = vunpack.c.l.bf16 %v394
        %v680 = vunpack.c.l.bf16 %v395
        %v681 = vunpack.c.l.bf16 %v396
        %v682 = vunpack.c.l.bf16 %v397
        %v683 = vunpack.c.l.bf16 %v398
        %v684 = vunpack.c.l.bf16 %v399
        %v685 = vunpack.c.l.bf16 %v400
        %687 = vset.pattern.permute.xlu0 0
        %688 = vperm.xlu0 %687, %v670
        %v689 = vpop.permute.xlu0 %688
        %692 = vset.pattern.permute.xlu0 0
        %693 = vperm.xlu0 %692, %v671
        %v694 = vpop.permute.xlu0 %693
        %697 = vset.pattern.permute.xlu0 0
        %698 = vperm.xlu0 %697, %v672
        %v699 = vpop.permute.xlu0 %698
        %702 = vset.pattern.permute.xlu0 0
        %703 = vperm.xlu0 %702, %v673
        %v704 = vpop.permute.xlu0 %703
        %707 = vset.pattern.permute.xlu0 0
        %708 = vperm.xlu0 %707, %v674
        %v709 = vpop.permute.xlu0 %708
        %712 = vset.pattern.permute.xlu0 0
        %713 = vperm.xlu0 %712, %v675
        %v714 = vpop.permute.xlu0 %713
        %717 = vset.pattern.permute.xlu0 0
        %718 = vperm.xlu0 %717, %v676
        %v719 = vpop.permute.xlu0 %718
        %722 = vset.pattern.permute.xlu0 0
        %723 = vperm.xlu0 %722, %v677
        %v724 = vpop.permute.xlu0 %723
        %v726 = vmul.f32 %v689, %v678
        %v727 = vmul.f32 %v694, %v679
        %v728 = vmul.f32 %v699, %v680
        %v729 = vmul.f32 %v704, %v681
        %v730 = vmul.f32 %v709, %v682
        %v731 = vmul.f32 %v714, %v683
        %v732 = vmul.f32 %v719, %v684
        %v733 = vmul.f32 %v724, %v685
        %vm734 = vcmask 257024
        %v735 = vsel %vm734, %v726, 0.0
        %v736 = vrot.slane %v735, 4
        %v737 = vadd.f32 %v735, %v736
        %v738 = vrot.slane %v737, 2
        %v739 = vadd.f32 %v737, %v738
        %v740 = vrot.slane %v739, 1
        %v741 = vadd.f32 %v739, %v740
        %v742 = vsel %vm734, %v727, 0.0
        %v743 = vrot.slane %v742, 4
        %v744 = vadd.f32 %v742, %v743
        %v745 = vrot.slane %v744, 2
        %v746 = vadd.f32 %v744, %v745
        %v747 = vrot.slane %v746, 1
        %v748 = vadd.f32 %v746, %v747
        %v749 = vsel %vm734, %v728, 0.0
        %v750 = vrot.slane %v749, 4
        %v751 = vadd.f32 %v749, %v750
        %v752 = vrot.slane %v751, 2
        %v753 = vadd.f32 %v751, %v752
        %v754 = vrot.slane %v753, 1
        %v755 = vadd.f32 %v753, %v754
        %v756 = vsel %vm734, %v729, 0.0
        %v757 = vrot.slane %v756, 4
        %v758 = vadd.f32 %v756, %v757
        %v759 = vrot.slane %v758, 2
        %v760 = vadd.f32 %v758, %v759
        %v761 = vrot.slane %v760, 1
        %v762 = vadd.f32 %v760, %v761
        %v763 = vsel %vm734, %v730, 0.0
        %v764 = vrot.slane %v763, 4
        %v765 = vadd.f32 %v763, %v764
        %v766 = vrot.slane %v765, 2
        %v767 = vadd.f32 %v765, %v766
        %v768 = vrot.slane %v767, 1
        %v769 = vadd.f32 %v767, %v768
        %v770 = vsel %vm734, %v731, 0.0
        %v771 = vrot.slane %v770, 4
        %v772 = vadd.f32 %v770, %v771
        %v773 = vrot.slane %v772, 2
        %v774 = vadd.f32 %v772, %v773
        %v775 = vrot.slane %v774, 1
        %v776 = vadd.f32 %v774, %v775
        %v777 = vsel %vm734, %v732, 0.0
        %v778 = vrot.slane %v777, 4
        %v779 = vadd.f32 %v777, %v778
        %v780 = vrot.slane %v779, 2
        %v781 = vadd.f32 %v779, %v780
        %v782 = vrot.slane %v781, 1
        %v783 = vadd.f32 %v781, %v782
        %v784 = vsel %vm734, %v733, 0.0
        %v785 = vrot.slane %v784, 4
        %v786 = vadd.f32 %v784, %v785
        %v787 = vrot.slane %v786, 2
        %v788 = vadd.f32 %v786, %v787
        %v789 = vrot.slane %v788, 1
        %v790 = vadd.f32 %v788, %v789
        %v791 = vld [vmem:[%s340] sm:$0x3]
        %v792 = vld [vmem:[%s340 + $0x2] sm:$0x3]
        %v793 = vld [vmem:[%s340 + $0x4] sm:$0x3]
        %v794 = vld [vmem:[%s340 + $0x6] sm:$0x3]
        %v795 = vld [vmem:[%s340 + $0x8] sm:$0x3]
        %v796 = vld [vmem:[%s340 + $0xa] sm:$0x3]
        %v797 = vld [vmem:[%s340 + $0xc] sm:$0x3]
        %v798 = vld [vmem:[%s340 + $0xe] sm:$0x3]
        %800 = vst [vmem:[#allocation1] ss:$4 sm:$0xff] %v791
        %s802 = scalar_lea.vmem [#allocation1], 1
        %803 = vst [vmem:[%s802] ss:$4 sm:$0xff] %v792
        %s805 = scalar_lea.vmem [#allocation1], 2
        %806 = vst [vmem:[%s805] ss:$4 sm:$0xff] %v793
        %s808 = scalar_lea.vmem [#allocation1], 3
        %809 = vst [vmem:[%s808] ss:$4 sm:$0xff] %v794
        %s811 = scalar_lea.vmem [#allocation1], 32
        %812 = vst [vmem:[%s811] ss:$4 sm:$0xff] %v795
        %s814 = scalar_lea.vmem [#allocation1], 33
        %815 = vst [vmem:[%s814] ss:$4 sm:$0xff] %v796
        %s817 = scalar_lea.vmem [#allocation1], 34
        %818 = vst [vmem:[%s817] ss:$4 sm:$0xff] %v797
        %s820 = scalar_lea.vmem [#allocation1], 35
        %821 = vst [vmem:[%s820] ss:$4 sm:$0xff] %v798
        %v822 = vld.sshfl [vmem:[#allocation1] sm:$0xff pattern:$0x73625140]
        %v823 = vld.sshfl [vmem:[#allocation1 + $0x20] sm:$0xff pattern:$0x73625140]
        %v824 = vsel %vm446, %v822, 0
        %v826 = vsel %vm446, %v823, 0
        %828 = vmatpush.bf16.msra.mxu0 0
        %829 = vmatpush.bf16.msra.mxu0 0
        %830 = vmatpush.bf16.msra.mxu0 0
        %831 = vmatpush.bf16.msra.mxu0 0
        %832 = vmatpush.bf16.msra.mxu0 0
        %833 = vmatpush.bf16.msra.mxu0 0
        %834 = vmatpush.bf16.msra.mxu0 %v443
        %835 = vmatpush.bf16.msra.mxu0 %v442
        %836 = vmatmul.bf16.gmra.mxu0 %v824
        %v837 = vpop.f32.mrf.mxu0
        %v838 = vadd.f32 %v407, %v837
        %v839 = vpop.f32.mrf.mxu0
        %v840 = vadd.f32 %v407, %v839
        %841 = vmatmul.bf16.gmra.mxu0 %v826
        %v842 = vpop.f32.mrf.mxu0
        %v843 = vadd.f32 %v407, %v842
        %v844 = vpop.f32.mrf.mxu0
        %v845 = vadd.f32 %v407, %v844
        %846 = vdwg.mxu0
        %v847 = vmax.f32 %v838, 0.0
        %v848 = vmax.f32 %v840, 0.0
        %v849 = vmax.f32 %v843, 0.0
        %v850 = vmax.f32 %v845, 0.0
        %v855 = vrot.slane %v847, 4
        %v856 = vrot.slane %v848, 4
        %v857 = vrot.slane %v849, 4
        %v858 = vrot.slane %v850, 4
        %v863 = vmul.f32 %v847, %v488
        %v864 = vmul.f32 %v855, %v488
        %v865 = vmul.f32 %v848, %v488
        %v866 = vmul.f32 %v856, %v488
        %v867 = vmul.f32 %v849, %v488
        %v868 = vmul.f32 %v857, %v488
        %v869 = vmul.f32 %v850, %v488
        %v870 = vmul.f32 %v858, %v488
        %v871 = vsel %vm498, %v863, 0.0
        %872 = vadd.xlane.f32.xlu0 %v871
        %v873 = vpop.xlane.xlu0 %872
        %v874 = vsel %vm498, %v864, 0.0
        %875 = vadd.xlane.f32.xlu0 %v874
        %v876 = vpop.xlane.xlu0 %875
        %v877 = vsel %vm498, %v865, 0.0
        %878 = vadd.xlane.f32.xlu0 %v877
        %v879 = vpop.xlane.xlu0 %878
        %v880 = vsel %vm498, %v866, 0.0
        %881 = vadd.xlane.f32.xlu0 %v880
        %v882 = vpop.xlane.xlu0 %881
        %v883 = vsel %vm498, %v867, 0.0
        %884 = vadd.xlane.f32.xlu0 %v883
        %v885 = vpop.xlane.xlu0 %884
        %v886 = vsel %vm498, %v868, 0.0
        %887 = vadd.xlane.f32.xlu0 %v886
        %v888 = vpop.xlane.xlu0 %887
        %v889 = vsel %vm498, %v869, 0.0
        %890 = vadd.xlane.f32.xlu0 %v889
        %v891 = vpop.xlane.xlu0 %890
        %v892 = vsel %vm498, %v870, 0.0
        %893 = vadd.xlane.f32.xlu0 %v892
        %v894 = vpop.xlane.xlu0 %893
        %v903 = vperm.slane %v873, %v532
        %v904 = vperm.slane %v876, %v532
        %v905 = vperm.slane %v879, %v532
        %v906 = vperm.slane %v882, %v532
        %v907 = vperm.slane %v885, %v532
        %v908 = vperm.slane %v888, %v532
        %v909 = vperm.slane %v891, %v532
        %v910 = vperm.slane %v894, %v532
        %v911 = vsel %vm541, %v904, %v903
        %v912 = vsel %vm543, %v905, %v911
        %v913 = vsel %vm545, %v906, %v912
        %v914 = vsel %vm547, %v907, %v913
        %v915 = vsel %vm549, %v908, %v914
        %v916 = vsel %vm551, %v909, %v915
        %v917 = vsel %vm553, %v910, %v916
        %v919 = vsel %vm556, %v917, -inf
        %920 = vmax.xlane.f32.xlu0 %v919
        %v921 = vpop.xlane.xlu0 %920
        %v923 = vperm.slane %v921, 0
        %v924 = vperm.slane %v921, 1
        %v925 = vperm.slane %v921, 2
        %v926 = vperm.slane %v921, 3
        %v927 = vperm.slane %v921, 4
        %v928 = vperm.slane %v921, 5
        %v929 = vperm.slane %v921, 6
        %v930 = vperm.slane %v921, 7
        %v939 = vsub.f32 %v873, %v923
        %v940 = vsub.f32 %v876, %v924
        %v941 = vsub.f32 %v879, %v925
        %v942 = vsub.f32 %v882, %v926
        %v943 = vsub.f32 %v885, %v927
        %v944 = vsub.f32 %v888, %v928
        %v945 = vsub.f32 %v891, %v929
        %v946 = vsub.f32 %v894, %v930
        %v947 = vmul.f32 %v939, 1.442695
        %v948 = vpow.pop %v947
        %v949 = vmul.f32 %v940, 1.442695
        %v950 = vpow.pop %v949
        %v951 = vmul.f32 %v941, 1.442695
        %v952 = vpow.pop %v951
        %v953 = vmul.f32 %v942, 1.442695
        %v954 = vpow.pop %v953
        %v955 = vmul.f32 %v943, 1.442695
        %v956 = vpow.pop %v955
        %v957 = vmul.f32 %v944, 1.442695
        %v958 = vpow.pop %v957
        %v959 = vmul.f32 %v945, 1.442695
        %v960 = vpow.pop %v959
        %v961 = vmul.f32 %v946, 1.442695
        %v962 = vpow.pop %v961
        %971 = vset.pattern.permute.xlu0 0
        %972 = vperm.xlu0 %971, %v948
        %v973 = vpop.permute.xlu0 %972
        %974 = vset.pattern.permute.xlu0 0
        %975 = vperm.xlu0 %974, %v950
        %v976 = vpop.permute.xlu0 %975
        %977 = vset.pattern.permute.xlu0 0
        %978 = vperm.xlu0 %977, %v952
        %v979 = vpop.permute.xlu0 %978
        %980 = vset.pattern.permute.xlu0 0
        %981 = vperm.xlu0 %980, %v954
        %v982 = vpop.permute.xlu0 %981
        %983 = vset.pattern.permute.xlu0 0
        %984 = vperm.xlu0 %983, %v956
        %v985 = vpop.permute.xlu0 %984
        %986 = vset.pattern.permute.xlu0 0
        %987 = vperm.xlu0 %986, %v958
        %v988 = vpop.permute.xlu0 %987
        %989 = vset.pattern.permute.xlu0 0
        %990 = vperm.xlu0 %989, %v960
        %v991 = vpop.permute.xlu0 %990
        %992 = vset.pattern.permute.xlu0 0
        %993 = vperm.xlu0 %992, %v962
        %v994 = vpop.permute.xlu0 %993
        %v995 = vperm.slane %v973, %v532
        %v996 = vperm.slane %v976, %v532
        %v997 = vperm.slane %v979, %v532
        %v998 = vperm.slane %v982, %v532
        %v999 = vperm.slane %v985, %v532
        %v1000 = vperm.slane %v988, %v532
        %v1001 = vperm.slane %v991, %v532
        %v1002 = vperm.slane %v994, %v532
        %v1003 = vsel %vm541, %v996, %v995
        %v1004 = vsel %vm543, %v997, %v1003
        %v1005 = vsel %vm545, %v998, %v1004
        %v1006 = vsel %vm547, %v999, %v1005
        %v1007 = vsel %vm549, %v1000, %v1006
        %v1008 = vsel %vm551, %v1001, %v1007
        %v1009 = vsel %vm553, %v1002, %v1008
        %v1011 = vsel %vm556, %v1009, 0.0
        %1012 = vadd.xlane.f32.xlu0 %v1011
        %v1013 = vpop.xlane.xlu0 %1012
        %v1014 = vrcp.pop %v1013
        %v1016 = vperm.slane %v1014, 0
        %v1017 = vperm.slane %v1014, 1
        %v1018 = vperm.slane %v1014, 2
        %v1019 = vperm.slane %v1014, 3
        %v1020 = vperm.slane %v1014, 4
        %v1021 = vperm.slane %v1014, 5
        %v1022 = vperm.slane %v1014, 6
        %v1023 = vperm.slane %v1014, 7
        %v1032 = vmul.f32 %v948, %v1016
        %v1033 = vmul.f32 %v950, %v1017
        %v1034 = vmul.f32 %v952, %v1018
        %v1035 = vmul.f32 %v954, %v1019
        %v1036 = vmul.f32 %v956, %v1020
        %v1037 = vmul.f32 %v958, %v1021
        %v1038 = vmul.f32 %v960, %v1022
        %v1039 = vmul.f32 %v962, %v1023
        %v1040 = vunpack.c.l.bf16 %v791
        %v1041 = vunpack.c.l.bf16 %v792
        %v1042 = vunpack.c.l.bf16 %v793
        %v1043 = vunpack.c.l.bf16 %v794
        %v1044 = vunpack.c.l.bf16 %v795
        %v1045 = vunpack.c.l.bf16 %v796
        %v1046 = vunpack.c.l.bf16 %v797
        %v1047 = vunpack.c.l.bf16 %v798
        %1049 = vset.pattern.permute.xlu0 0
        %1050 = vperm.xlu0 %1049, %v1032
        %v1051 = vpop.permute.xlu0 %1050
        %1054 = vset.pattern.permute.xlu0 0
        %1055 = vperm.xlu0 %1054, %v1033
        %v1056 = vpop.permute.xlu0 %1055
        %1059 = vset.pattern.permute.xlu0 0
        %1060 = vperm.xlu0 %1059, %v1034
        %v1061 = vpop.permute.xlu0 %1060
        %1064 = vset.pattern.permute.xlu0 0
        %1065 = vperm.xlu0 %1064, %v1035
        %v1066 = vpop.permute.xlu0 %1065
        %1069 = vset.pattern.permute.xlu0 0
        %1070 = vperm.xlu0 %1069, %v1036
        %v1071 = vpop.permute.xlu0 %1070
        %1074 = vset.pattern.permute.xlu0 0
        %1075 = vperm.xlu0 %1074, %v1037
        %v1076 = vpop.permute.xlu0 %1075
        %1079 = vset.pattern.permute.xlu0 0
        %1080 = vperm.xlu0 %1079, %v1038
        %v1081 = vpop.permute.xlu0 %1080
        %1084 = vset.pattern.permute.xlu0 0
        %1085 = vperm.xlu0 %1084, %v1039
        %v1086 = vpop.permute.xlu0 %1085
        %v1088 = vmul.f32 %v1051, %v1040
        %v1089 = vmul.f32 %v1056, %v1041
        %v1090 = vmul.f32 %v1061, %v1042
        %v1091 = vmul.f32 %v1066, %v1043
        %v1092 = vmul.f32 %v1071, %v1044
        %v1093 = vmul.f32 %v1076, %v1045
        %v1094 = vmul.f32 %v1081, %v1046
        %v1095 = vmul.f32 %v1086, %v1047
        %v1096 = vsel %vm734, %v1088, 0.0
        %v1097 = vrot.slane %v1096, 4
        %v1098 = vadd.f32 %v1096, %v1097
        %v1099 = vrot.slane %v1098, 2
        %v1100 = vadd.f32 %v1098, %v1099
        %v1101 = vrot.slane %v1100, 1
        %v1102 = vadd.f32 %v1100, %v1101
        %v1103 = vsel %vm734, %v1089, 0.0
        %v1104 = vrot.slane %v1103, 4
        %v1105 = vadd.f32 %v1103, %v1104
        %v1106 = vrot.slane %v1105, 2
        %v1107 = vadd.f32 %v1105, %v1106
        %v1108 = vrot.slane %v1107, 1
        %v1109 = vadd.f32 %v1107, %v1108
        %v1110 = vsel %vm734, %v1090, 0.0
        %v1111 = vrot.slane %v1110, 4
        %v1112 = vadd.f32 %v1110, %v1111
        %v1113 = vrot.slane %v1112, 2
        %v1114 = vadd.f32 %v1112, %v1113
        %v1115 = vrot.slane %v1114, 1
        %v1116 = vadd.f32 %v1114, %v1115
        %v1117 = vsel %vm734, %v1091, 0.0
        %v1118 = vrot.slane %v1117, 4
        %v1119 = vadd.f32 %v1117, %v1118
        %v1120 = vrot.slane %v1119, 2
        %v1121 = vadd.f32 %v1119, %v1120
        %v1122 = vrot.slane %v1121, 1
        %v1123 = vadd.f32 %v1121, %v1122
        %v1124 = vsel %vm734, %v1092, 0.0
        %v1125 = vrot.slane %v1124, 4
        %v1126 = vadd.f32 %v1124, %v1125
        %v1127 = vrot.slane %v1126, 2
        %v1128 = vadd.f32 %v1126, %v1127
        %v1129 = vrot.slane %v1128, 1
        %v1130 = vadd.f32 %v1128, %v1129
        %v1131 = vsel %vm734, %v1093, 0.0
        %v1132 = vrot.slane %v1131, 4
        %v1133 = vadd.f32 %v1131, %v1132
        %v1134 = vrot.slane %v1133, 2
        %v1135 = vadd.f32 %v1133, %v1134
        %v1136 = vrot.slane %v1135, 1
        %v1137 = vadd.f32 %v1135, %v1136
        %v1138 = vsel %vm734, %v1094, 0.0
        %v1139 = vrot.slane %v1138, 4
        %v1140 = vadd.f32 %v1138, %v1139
        %v1141 = vrot.slane %v1140, 2
        %v1142 = vadd.f32 %v1140, %v1141
        %v1143 = vrot.slane %v1142, 1
        %v1144 = vadd.f32 %v1142, %v1143
        %v1145 = vsel %vm734, %v1095, 0.0
        %v1146 = vrot.slane %v1145, 4
        %v1147 = vadd.f32 %v1145, %v1146
        %v1148 = vrot.slane %v1147, 2
        %v1149 = vadd.f32 %v1147, %v1148
        %v1150 = vrot.slane %v1149, 1
        %v1151 = vadd.f32 %v1149, %v1150
        %v1152 = vld [vmem:[%s388] sm:$0x3]
        %v1153 = vld [vmem:[%s388 + $0x2] sm:$0x3]
        %v1154 = vld [vmem:[%s388 + $0x4] sm:$0x3]
        %v1155 = vld [vmem:[%s388 + $0x6] sm:$0x3]
        %v1156 = vld [vmem:[%s388 + $0x8] sm:$0x3]
        %v1157 = vld [vmem:[%s388 + $0xa] sm:$0x3]
        %v1158 = vld [vmem:[%s388 + $0xc] sm:$0x3]
        %v1159 = vld [vmem:[%s388 + $0xe] sm:$0x3]
        %v1160 = vld [vmem:[%s6] sm:$0xf]
        %v1161 = vld [vmem:[%s6 + $0x4] sm:$0xf]
        %v1162 = vld [vmem:[%s6 + $0x8] sm:$0xf]
        %v1163 = vld [vmem:[%s6 + $0xc] sm:$0xf]
        %s1164 = scalar_lea.vmem %s6, 16
        %v1165 = vld [vmem:[%s1164] sm:$0xf]
        %v1166 = vld [vmem:[%s1164 + $0x4] sm:$0xf]
        %v1167 = vld [vmem:[%s1164 + $0x8] sm:$0xf]
        %v1168 = vld [vmem:[%s1164 + $0xc] sm:$0xf]
        %1170 = vst [vmem:[#allocation1] ss:$4 sm:$0xff] %v1152
        %v1171 = vld.sshfl [vmem:[#allocation1] sm:$0xff pattern:$0x73625140]
        %s1174 = scalar_lea.vmem [#allocation1], 32
        %1175 = vst [vmem:[%s1174] ss:$4 sm:$0xff] %v1153
        %v1176 = vld.sshfl [vmem:[#allocation1 + $0x20] sm:$0xff pattern:$0x73625140]
        %1179 = vst [vmem:[#allocation1] ss:$4 sm:$0xff] %v1154
        %v1180 = vld.sshfl [vmem:[#allocation1] sm:$0xff pattern:$0x73625140]
        %1183 = vst [vmem:[%s1174] ss:$4 sm:$0xff] %v1155
        %v1184 = vld.sshfl [vmem:[#allocation1 + $0x20] sm:$0xff pattern:$0x73625140]
        %1187 = vst [vmem:[#allocation1] ss:$4 sm:$0xff] %v1156
        %v1188 = vld.sshfl [vmem:[#allocation1] sm:$0xff pattern:$0x73625140]
        %1191 = vst [vmem:[%s1174] ss:$4 sm:$0xff] %v1157
        %v1192 = vld.sshfl [vmem:[#allocation1 + $0x20] sm:$0xff pattern:$0x73625140]
        %1195 = vst [vmem:[#allocation1] ss:$4 sm:$0xff] %v1158
        %v1196 = vld.sshfl [vmem:[#allocation1] sm:$0xff pattern:$0x73625140]
        %1199 = vst [vmem:[%s1174] ss:$4 sm:$0xff] %v1159
        %v1200 = vld.sshfl [vmem:[#allocation1 + $0x20] sm:$0xff pattern:$0x73625140]
        %v1202 = vunpack.c.l.b16 %v1171
        %v1203 = vunpack.c.l.b16 %v1176
        %v1204 = vunpack.c.l.b16 %v1180
        %v1205 = vunpack.c.l.b16 %v1184
        %v1206 = vunpack.c.l.b16 %v1188
        %v1207 = vunpack.c.l.b16 %v1192
        %v1208 = vunpack.c.l.b16 %v1196
        %v1209 = vunpack.c.l.b16 %v1200
        %v1210 = vrot.slane %v1202, 1
        %v1211 = vsel %vm541, %v1203, %v1210
        %v1212 = vrot.slane %v1204, 7
        %v1213 = vsel %vm543, %v1212, %v1211
        %v1214 = vrot.slane %v1205, 6
        %v1215 = vsel %vm545, %v1214, %v1213
        %v1216 = vrot.slane %v1206, 5
        %v1217 = vsel %vm547, %v1216, %v1215
        %v1218 = vrot.slane %v1207, 4
        %v1219 = vsel %vm549, %v1218, %v1217
        %v1220 = vrot.slane %v1208, 3
        %v1221 = vsel %vm551, %v1220, %v1219
        %v1222 = vrot.slane %v1209, 2
        %v1223 = vsel %vm553, %v1222, %v1221
        %v1224 = vpack.c.b16 %v1223, %v1223
        %v1229 = vunpack.c.l.b16 %v1165
        %v1230 = vunpack.c.l.b16 %v1166
        %v1231 = vunpack.c.l.b16 %v1167
        %v1232 = vunpack.c.l.b16 %v1168
        %v1233 = vpack.c.b16 %v1230, %v1229
        %v1234 = vpack.c.b16 %v1232, %v1231
        %v1238 = vsel %vm446, %v1224, 0
        %1240 = vmatpush.bf16.msra.mxu0 0
        %1241 = vmatpush.bf16.msra.mxu0 0
        %1242 = vmatpush.bf16.msra.mxu0 0
        %1243 = vmatpush.bf16.msra.mxu0 0
        %1244 = vmatpush.bf16.msra.mxu0 0
        %1245 = vmatpush.bf16.msra.mxu0 0
        %1246 = vmatpush.bf16.msra.mxu0 %v1234
        %1247 = vmatpush.bf16.msra.mxu0 %v1233
        %1248 = vmatmul.bf16.gmra.mxu0 %v1238
        %v1249 = vpop.f32.mrf.mxu0
        %v1250 = vadd.f32 0.0, %v1249
        %v1251 = vpop.f32.mrf.mxu0
        %1252 = vdwg.mxu0
        %1253 = vst [vmem:[#allocation1] ss:$4 sm:$0xff] %v1152
        %v1254 = vld.sshfl [vmem:[#allocation1] sm:$0xff pattern:$0x73625140]
        %s1256 = scalar_lea.vmem [#allocation1], 32
        %1257 = vst [vmem:[%s1256] ss:$4 sm:$0xff] %v1153
        %v1258 = vld.sshfl [vmem:[#allocation1 + $0x20] sm:$0xff pattern:$0x73625140]
        %1260 = vst [vmem:[#allocation1] ss:$4 sm:$0xff] %v1154
        %v1261 = vld.sshfl [vmem:[#allocation1] sm:$0xff pattern:$0x73625140]
        %1263 = vst [vmem:[%s1256] ss:$4 sm:$0xff] %v1155
        %v1264 = vld.sshfl [vmem:[#allocation1 + $0x20] sm:$0xff pattern:$0x73625140]
        %1266 = vst [vmem:[#allocation1] ss:$4 sm:$0xff] %v1156
        %v1267 = vld.sshfl [vmem:[#allocation1] sm:$0xff pattern:$0x73625140]
        %1269 = vst [vmem:[%s1256] ss:$4 sm:$0xff] %v1157
        %v1270 = vld.sshfl [vmem:[#allocation1 + $0x20] sm:$0xff pattern:$0x73625140]
        %1272 = vst [vmem:[#allocation1] ss:$4 sm:$0xff] %v1158
        %v1273 = vld.sshfl [vmem:[#allocation1] sm:$0xff pattern:$0x73625140]
        %1275 = vst [vmem:[%s1256] ss:$4 sm:$0xff] %v1159
        %v1276 = vld.sshfl [vmem:[#allocation1 + $0x20] sm:$0xff pattern:$0x73625140]
        %v1278 = vunpack.c.l.b16 %v1254
        %v1279 = vunpack.c.l.b16 %v1258
        %v1280 = vunpack.c.l.b16 %v1261
        %v1281 = vunpack.c.l.b16 %v1264
        %v1282 = vunpack.c.l.b16 %v1267
        %v1283 = vunpack.c.l.b16 %v1270
        %v1284 = vunpack.c.l.b16 %v1273
        %v1285 = vunpack.c.l.b16 %v1276
        %v1286 = vrot.slane %v1279, 7
        %v1287 = vsel %vm541, %v1286, %v1278
        %v1288 = vrot.slane %v1280, 6
        %v1289 = vsel %vm543, %v1288, %v1287
        %v1290 = vrot.slane %v1281, 5
        %v1291 = vsel %vm545, %v1290, %v1289
        %v1292 = vrot.slane %v1282, 4
        %v1293 = vsel %vm547, %v1292, %v1291
        %v1294 = vrot.slane %v1283, 3
        %v1295 = vsel %vm549, %v1294, %v1293
        %v1296 = vrot.slane %v1284, 2
        %v1297 = vsel %vm551, %v1296, %v1295
        %v1298 = vrot.slane %v1285, 1
        %v1299 = vsel %vm553, %v1298, %v1297
        %v1300 = vpack.c.b16 %v1299, %v1299
        %v1305 = vunpack.c.l.b16 %v1160
        %v1306 = vunpack.c.l.b16 %v1161
        %v1307 = vunpack.c.l.b16 %v1162
        %v1308 = vunpack.c.l.b16 %v1163
        %v1309 = vpack.c.b16 %v1306, %v1305
        %v1310 = vpack.c.b16 %v1308, %v1307
        %v1314 = vsel %vm446, %v1300, 0
        %1316 = vmatpush.bf16.msra.mxu0 0
        %1317 = vmatpush.bf16.msra.mxu0 0
        %1318 = vmatpush.bf16.msra.mxu0 0
        %1319 = vmatpush.bf16.msra.mxu0 0
        %1320 = vmatpush.bf16.msra.mxu0 0
        %1321 = vmatpush.bf16.msra.mxu0 0
        %1322 = vmatpush.bf16.msra.mxu0 %v1310
        %1323 = vmatpush.bf16.msra.mxu0 %v1309
        %1324 = vmatmul.bf16.gmra.mxu0 %v1314
        %v1325 = vpop.f32.mrf.mxu0
        %v1326 = vadd.f32 %v1250, %v1325
        %v1327 = vpop.f32.mrf.mxu0
        %1328 = vdwg.mxu0
        %s1329 = scalar_lea.vmem %s6, 32
        %v1330 = vld [vmem:[%s1329] sm:$0xf]
        %v1331 = vld [vmem:[%s1329 + $0x4] sm:$0xf]
        %v1332 = vld [vmem:[%s1329 + $0x8] sm:$0xf]
        %v1333 = vld [vmem:[%s1329 + $0xc] sm:$0xf]
        %1334 = vst [vmem:[#allocation1] ss:$4 sm:$0xff] %v1152
        %v1335 = vld.sshfl [vmem:[#allocation1] sm:$0xff pattern:$0x73625140]
        %s1337 = scalar_lea.vmem [#allocation1], 32
        %1338 = vst [vmem:[%s1337] ss:$4 sm:$0xff] %v1153
        %v1339 = vld.sshfl [vmem:[#allocation1 + $0x20] sm:$0xff pattern:$0x73625140]
        %1341 = vst [vmem:[#allocation1] ss:$4 sm:$0xff] %v1154
        %v1342 = vld.sshfl [vmem:[#allocation1] sm:$0xff pattern:$0x73625140]
        %1344 = vst [vmem:[%s1337] ss:$4 sm:$0xff] %v1155
        %v1345 = vld.sshfl [vmem:[#allocation1 + $0x20] sm:$0xff pattern:$0x73625140]
        %1347 = vst [vmem:[#allocation1] ss:$4 sm:$0xff] %v1156
        %v1348 = vld.sshfl [vmem:[#allocation1] sm:$0xff pattern:$0x73625140]
        %1350 = vst [vmem:[%s1337] ss:$4 sm:$0xff] %v1157
        %v1351 = vld.sshfl [vmem:[#allocation1 + $0x20] sm:$0xff pattern:$0x73625140]
        %1353 = vst [vmem:[#allocation1] ss:$4 sm:$0xff] %v1158
        %v1354 = vld.sshfl [vmem:[#allocation1] sm:$0xff pattern:$0x73625140]
        %1356 = vst [vmem:[%s1337] ss:$4 sm:$0xff] %v1159
        %v1357 = vld.sshfl [vmem:[#allocation1 + $0x20] sm:$0xff pattern:$0x73625140]
        %v1359 = vunpack.c.l.b16 %v1335
        %v1360 = vunpack.c.l.b16 %v1339
        %v1361 = vunpack.c.l.b16 %v1342
        %v1362 = vunpack.c.l.b16 %v1345
        %v1363 = vunpack.c.l.b16 %v1348
        %v1364 = vunpack.c.l.b16 %v1351
        %v1365 = vunpack.c.l.b16 %v1354
        %v1366 = vunpack.c.l.b16 %v1357
        %v1367 = vrot.slane %v1359, 2
        %v1368 = vrot.slane %v1360, 1
        %v1369 = vsel %vm541, %v1368, %v1367
        %v1370 = vsel %vm543, %v1361, %v1369
        %v1371 = vrot.slane %v1362, 7
        %v1372 = vsel %vm545, %v1371, %v1370
        %v1373 = vrot.slane %v1363, 6
        %v1374 = vsel %vm547, %v1373, %v1372
        %v1375 = vrot.slane %v1364, 5
        %v1376 = vsel %vm549, %v1375, %v1374
        %v1377 = vrot.slane %v1365, 4
        %v1378 = vsel %vm551, %v1377, %v1376
        %v1379 = vrot.slane %v1366, 3
        %v1380 = vsel %vm553, %v1379, %v1378
        %v1381 = vpack.c.b16 %v1380, %v1380
        %v1386 = vunpack.c.l.b16 %v1330
        %v1387 = vunpack.c.l.b16 %v1331
        %v1388 = vunpack.c.l.b16 %v1332
        %v1389 = vunpack.c.l.b16 %v1333
        %v1390 = vpack.c.b16 %v1387, %v1386
        %v1391 = vpack.c.b16 %v1389, %v1388
        %v1395 = vsel %vm446, %v1381, 0
        %1397 = vmatpush.bf16.msra.mxu0 0
        %1398 = vmatpush.bf16.msra.mxu0 0
        %1399 = vmatpush.bf16.msra.mxu0 0
        %1400 = vmatpush.bf16.msra.mxu0 0
        %1401 = vmatpush.bf16.msra.mxu0 0
        %1402 = vmatpush.bf16.msra.mxu0 0
        %1403 = vmatpush.bf16.msra.mxu0 %v1391
        %1404 = vmatpush.bf16.msra.mxu0 %v1390
        %1405 = vmatmul.bf16.gmra.mxu0 %v1395
        %v1406 = vpop.f32.mrf.mxu0
        %v1407 = vadd.f32 0.0, %v1406
        %v1408 = vpop.f32.mrf.mxu0
        %1409 = vdwg.mxu0
        %v1410 = vadd.f32 %v1326, %v1407
        %v1411 = vpack.c.bf16 %v741, %v741
        %v1412 = vpack.c.bf16 %v748, %v748
        %v1413 = vpack.c.bf16 %v755, %v755
        %v1414 = vpack.c.bf16 %v762, %v762
        %v1415 = vpack.c.bf16 %v769, %v769
        %v1416 = vpack.c.bf16 %v776, %v776
        %v1417 = vpack.c.bf16 %v783, %v783
        %v1418 = vpack.c.bf16 %v790, %v790
        %s1419 = scalar_lea.vmem %s6, 48
        %v1420 = vld [vmem:[%s1419] sm:$0xf]
        %v1421 = vld [vmem:[%s1419 + $0x4] sm:$0xf]
        %v1422 = vld [vmem:[%s1419 + $0x8] sm:$0xf]
        %v1423 = vld [vmem:[%s1419 + $0xc] sm:$0xf]
        %v1432 = vunpack.c.l.b16 %v1411
        %v1433 = vunpack.c.l.b16 %v1412
        %v1434 = vunpack.c.l.b16 %v1413
        %v1435 = vunpack.c.l.b16 %v1414
        %v1436 = vunpack.c.l.b16 %v1415
        %v1437 = vunpack.c.l.b16 %v1416
        %v1438 = vunpack.c.l.b16 %v1417
        %v1439 = vunpack.c.l.b16 %v1418
        %v1440 = vsel %vm541, %v1433, %v1432
        %v1441 = vsel %vm543, %v1434, %v1440
        %v1442 = vsel %vm545, %v1435, %v1441
        %v1443 = vsel %vm547, %v1436, %v1442
        %v1444 = vsel %vm549, %v1437, %v1443
        %v1445 = vsel %vm551, %v1438, %v1444
        %v1446 = vsel %vm553, %v1439, %v1445
        %v1447 = vpack.c.b16 %v1446, %v1446
        %v1452 = vunpack.c.l.b16 %v1420
        %v1453 = vunpack.c.l.b16 %v1421
        %v1454 = vunpack.c.l.b16 %v1422
        %v1455 = vunpack.c.l.b16 %v1423
        %v1456 = vpack.c.b16 %v1453, %v1452
        %v1457 = vpack.c.b16 %v1455, %v1454
        %v1461 = vsel %vm446, %v1447, 0
        %1463 = vmatpush.bf16.msra.mxu0 0
        %1464 = vmatpush.bf16.msra.mxu0 0
        %1465 = vmatpush.bf16.msra.mxu0 0
        %1466 = vmatpush.bf16.msra.mxu0 0
        %1467 = vmatpush.bf16.msra.mxu0 0
        %1468 = vmatpush.bf16.msra.mxu0 0
        %1469 = vmatpush.bf16.msra.mxu0 %v1457
        %1470 = vmatpush.bf16.msra.mxu0 %v1456
        %1471 = vmatmul.bf16.gmra.mxu0 %v1461
        %v1472 = vpop.f32.mrf.mxu0
        %v1473 = vadd.f32 0.0, %v1472
        %v1474 = vpop.f32.mrf.mxu0
        %1475 = vdwg.mxu0
        %v1476 = vadd.f32 %v1410, %v1473
        %v1477 = vpack.c.bf16 %v1102, %v1102
        %v1478 = vpack.c.bf16 %v1109, %v1109
        %v1479 = vpack.c.bf16 %v1116, %v1116
        %v1480 = vpack.c.bf16 %v1123, %v1123
        %v1481 = vpack.c.bf16 %v1130, %v1130
        %v1482 = vpack.c.bf16 %v1137, %v1137
        %v1483 = vpack.c.bf16 %v1144, %v1144
        %v1484 = vpack.c.bf16 %v1151, %v1151
        %s1485 = scalar_lea.vmem %s6, 64
        %v1486 = vld [vmem:[%s1485] sm:$0xf]
        %v1487 = vld [vmem:[%s1485 + $0x4] sm:$0xf]
        %v1488 = vld [vmem:[%s1485 + $0x8] sm:$0xf]
        %v1489 = vld [vmem:[%s1485 + $0xc] sm:$0xf]
        %v1498 = vunpack.c.l.b16 %v1477
        %v1499 = vunpack.c.l.b16 %v1478
        %v1500 = vunpack.c.l.b16 %v1479
        %v1501 = vunpack.c.l.b16 %v1480
        %v1502 = vunpack.c.l.b16 %v1481
        %v1503 = vunpack.c.l.b16 %v1482
        %v1504 = vunpack.c.l.b16 %v1483
        %v1505 = vunpack.c.l.b16 %v1484
        %v1506 = vsel %vm541, %v1499, %v1498
        %v1507 = vsel %vm543, %v1500, %v1506
        %v1508 = vsel %vm545, %v1501, %v1507
        %v1509 = vsel %vm547, %v1502, %v1508
        %v1510 = vsel %vm549, %v1503, %v1509
        %v1511 = vsel %vm551, %v1504, %v1510
        %v1512 = vsel %vm553, %v1505, %v1511
        %v1513 = vpack.c.b16 %v1512, %v1512
        %v1518 = vunpack.c.l.b16 %v1486
        %v1519 = vunpack.c.l.b16 %v1487
        %v1520 = vunpack.c.l.b16 %v1488
        %v1521 = vunpack.c.l.b16 %v1489
        %v1522 = vpack.c.b16 %v1519, %v1518
        %v1523 = vpack.c.b16 %v1521, %v1520
        %v1527 = vsel %vm446, %v1513, 0
        %1529 = vmatpush.bf16.msra.mxu0 0
        %1530 = vmatpush.bf16.msra.mxu0 0
        %1531 = vmatpush.bf16.msra.mxu0 0
        %1532 = vmatpush.bf16.msra.mxu0 0
        %1533 = vmatpush.bf16.msra.mxu0 0
        %1534 = vmatpush.bf16.msra.mxu0 0
        %1535 = vmatpush.bf16.msra.mxu0 %v1523
        %1536 = vmatpush.bf16.msra.mxu0 %v1522
        %1537 = vmatmul.bf16.gmra.mxu0 %v1527
        %v1538 = vpop.f32.mrf.mxu0
        %v1539 = vadd.f32 0.0, %v1538
        %v1540 = vpop.f32.mrf.mxu0
        %1541 = vdwg.mxu0
        %v1542 = vadd.f32 %v1476, %v1539
        %v1543 = vld [vmem:[%s7] sm:$0x1]
        %v1545 = vperm.slane %v1543, 0
        %v1547 = vadd.f32 %v1542, %v1545
        %1548 = vst.msk [vmem:[%s383] sm:$0xff] %vm446, %v1547
        %s1549 = sand.u32 %s219, 1
        %s1550 = scalar_lea.sflag [#allocation4], %s1549
        %s1551 = sand.u32 %s219, 1
        %s1552 = smul.addr %s1551, 8
        %s1553 = scalar_lea.vmem [#allocation7], %s1552
        // Predicated region
        $region61: #{tpu_custom_call.1} parent=51 // pred_check
          %p1554 = pneg %p229
        $region62: #{tpu_custom_call.1} parent=51 // pred_check_branch
          %1556 = sbr.rel (%p1554) target = $region64
        $region63: #{tpu_custom_call.1} parent=51 // pred_region
          %1558 = vsyncadd %s1550, 0
          %s1559 = smul.addr %s28, 8
          %s1560 = scalar_lea.hbm %s8, %s1559
          %s1562 = sshll.u32 %s1553, 4
          %s1563 = int_to_ptr.vmem [resolvable:$true] %s1562
          %s1564 = sshll.u32 %s1560, 4
          %s1565 = int_to_ptr.hbm [resolvable:$true] %s1564
          %1567 = dma.vmem_to_hbm [thread:$0]  %s1563, 128, %s1565, %s1550
        $region64: #{tpu_custom_call.1} parent=51 // pred_fallthru
          _
      $region52: #{tpu_custom_call.1} parent=5 // pred_fallthru
        _
      %p1568 = scmp.le.s32.totalorder 2, %s23
      // Predicated region
      $region65: #{tpu_custom_call.1} parent=5 // pred_check
        %p1569 = pneg %p1568
      $region66: #{tpu_custom_call.1} parent=5 // pred_check_branch
        %1571 = sbr.rel (%p1569) target = $region68
      $region67: #{tpu_custom_call.1} parent=5 // pred_region
        %s1572 = ssub.s32 %s23, 2
        // Predicated region
        $region69: #{tpu_custom_call.1} parent=67 // pred_check
          %p1573 = pneg %p235
        $region70: #{tpu_custom_call.1} parent=67 // pred_check_branch
          %1575 = sbr.rel (%p1573) target = $region72
        $region71: #{tpu_custom_call.1} parent=67 // pred_region
          %s1576 = sand.u32 %s220, 1
          %s1577 = scalar_lea.sflag [#allocation4], %s1576
          %s1578 = sand.u32 %s220, 1
          %s1579 = smul.addr %s1578, 8
          %s1580 = scalar_lea.vmem [#allocation7], %s1579
          %1582 = dma.done %s1577, 128
        $region72: #{tpu_custom_call.1} parent=67 // pred_fallthru
          _
      $region68: #{tpu_custom_call.1} parent=5 // pred_fallthru
        _
    $region6: #{tpu_custom_call.1} parent=1 // loop_footer
      %s27 = sadd.s32 1, %s23
    $region7: #{tpu_custom_call.1} parent=1 // loop_footer_branch
      %22 = sbr.rel target = $region3
    $region8: #{tpu_custom_call.1} parent=1 // loop_exit
      _
    %1583 = vsyncpa [#allocation3], 1
    %s1584 = scalar_lea.sflag [#allocation3], 1
    %1585 = vsyncpa %s1584, 1
    %1586 = vsyncpa [#allocation6], 1
    %s1587 = scalar_lea.sflag [#allocation6], 1
    %1588 = vsyncpa %s1587, 1
    %1589 = vsyncpa [#allocation4], 1
    %s1590 = scalar_lea.sflag [#allocation4], 1
    %1591 = vsyncpa %s1590, 1

// kernel: tpu_custom_call.1
$region0: #{tpu_custom_call.1}
  #allocation0 [shape = 'u32[]', space=smem, size = 0x4, offset = 0x4, fixed_abs, tag = 'smem constant byte address 0x4 - core index']
  #allocation1 [shape = 'u32[72,128]{1,0:T(1,128)}', space=vmem, size = 0x9000, scoped, tag = 'internal scratch']
  %s0 = inlined_call_operand.vmem [shape: bf16[16,3,32], index: 0, kind: input, shape index: {}]
  %s1 = inlined_call_operand.hbm [shape: bf16[16,4,32], index: 1, kind: input, shape index: {}]
  %s2 = inlined_call_operand.hbm [shape: bf16[16,4,32], index: 2, kind: input, shape index: {}]
  %s3 = inlined_call_operand.vmem [shape: bf16[32,16], index: 3, kind: input, shape index: {}]
  %s4 = inlined_call_operand.vmem [shape: f32[1,16], index: 4, kind: input, shape index: {}]
  %s5 = inlined_call_operand.vmem [shape: f32[1,16], index: 5, kind: input, shape index: {}]
  %s6 = inlined_call_operand.vmem [shape: bf16[5,32,32], index: 6, kind: input, shape index: {}]
  %s7 = inlined_call_operand.vmem [shape: f32[1,32], index: 7, kind: input, shape index: {}]
  %s8 = inlined_call_operand.hbm [shape: f32[16,32], index: 8, kind: output, shape index: {}]
  %s9 = sld [smem:[#allocation0]]
  $region73: #{tpu_custom_call.1} parent=0
    _
  %s11 = ssub.s32 1, %s9
  %s12 = scalar_select 0, %s11, %s9
  $region1: #{tpu_custom_call.1} parent=0
    #allocation2 [shape = 'u8[16384]{0}', space=vmem, size = 0x4000, scoped, tag = 'input window, operand 1']
    #allocation3 [shape = 's32[2]{0}', space=sflag, size = 0x8, scoped, tag = 'scoped memory for tpu_custom_call.1']
    #allocation4 [shape = 's32[2]{0}', space=sflag, size = 0x8, scoped, tag = 'scoped memory for tpu_custom_call.1']
    #allocation5 [shape = 'u8[16384]{0}', space=vmem, size = 0x4000, scoped, tag = 'input window, operand 2']
    #allocation6 [shape = 's32[2]{0}', space=sflag, size = 0x8, scoped, tag = 'scoped memory for tpu_custom_call.1']
    #allocation7 [shape = 'u8[8192]{0}', space=vmem, size = 0x2000, scoped, tag = 'output window, operand 0']
    %13 = vsyncpa [#allocation3], 0
    %s14 = scalar_lea.sflag [#allocation3], 1
    %15 = vsyncpa %s14, 0
    %16 = vsyncpa [#allocation6], 0
    %s17 = scalar_lea.sflag [#allocation6], 1
    %18 = vsyncpa %s17, 0
    %19 = vsyncpa [#allocation4], 0
    %s20 = scalar_lea.sflag [#allocation4], 1
    %21 = vsyncpa %s20, 0
    loop: start=0, step=1, limit=4
    $region2: #{tpu_custom_call.1} parent=1 // loop_pre_header
      _
    $region3: #{tpu_custom_call.1} parent=1 // loop_header
      %s23 = sphi 0, %s27
      %p24 = scmp.ge.s32.totalorder %s23, 4
      %s33 = sphi 0, %s35
      %s36 = sphi 0, %s33
      %s37 = sphi 0, %s36
      %s53 = sphi 0, %s37
      %s59 = sphi 0, %s61
      %s62 = sphi 0, %s59
      %s63 = sphi 0, %s62
      %s79 = sphi 0, %s63
      %s85 = sphi 0, %s87
      %s88 = sphi 0, %s85
      %s89 = sphi 0, %s88
      %s105 = sphi 0, %s89
      %s109 = sphi 0, %s109
      %s111 = sphi 0, %s109
      %s112 = sphi 0, %s111
      %s126 = sphi 0, %s112
      %s130 = sphi 0, %s130
      %s132 = sphi 0, %s130
      %s133 = sphi 0, %s132
      %s147 = sphi 0, %s133
      %s151 = sphi 0, %s151
      %s153 = sphi 0, %s151
      %s154 = sphi 0, %s153
      %s168 = sphi 0, %s154
      %s172 = sphi 0, %s172
      %s174 = sphi 0, %s172
      %s175 = sphi 0, %s174
      %s189 = sphi 0, %s175
      %s193 = sphi 0, %s193
      %s195 = sphi 0, %s193
      %s196 = sphi 0, %s195
      %s210 = sphi 0, %s196
      %s216 = sphi 0, %s218
      %s219 = sphi 0, %s216
      %s220 = sphi 0, %s219
      %s236 = sphi 0, %s220
    $region4: #{tpu_custom_call.1} parent=1 // loop_header_branch
      %26 = sbr.rel (%p24) target = $region8
    $region5: #{tpu_custom_call.1} parent=1 // loop_body
      %s28 = ssub.s32 %s23, 1
      %s29 = ssub.s32 %s23, 2
      %s30 = sadd.s32 %s23, 1
      %s31 = ssub.s32 %s23, %s30
      %p32 = scmp.eq.s32.totalorder %s31, 0
      %s34 = sadd.s32 %s33, 1
      %s35 = scalar_select %p32, %s33, %s34
      %p38 = pneg %p32
      %p39 = scmp.eq.s32.totalorder %s23, 1
      %p40 = por %p38, %p39
      %p41 = scmp.ne.s32.totalorder %s33, %s36
      %p42 = scmp.eq.s32.totalorder %s23, 0
      %p43 = por %p41, %p42
      %p44 = scmp.ne.s32.totalorder %s33, %s36
      %p45 = scmp.eq.s32.totalorder %s28, 1
      %p46 = por %p44, %p45
      %p47 = scmp.ne.s32.totalorder %s36, %s37
      %p48 = scmp.eq.s32.totalorder %s28, 0
      %p49 = por %p47, %p48
      %p50 = scmp.ne.s32.totalorder %s36, %s37
      %p51 = scmp.eq.s32.totalorder %s29, 1
      %p52 = por %p50, %p51
      %p54 = scmp.ne.s32.totalorder %s37, %s53
      %p55 = scmp.eq.s32.totalorder %s29, 0
      %p56 = por %p54, %p55
      %s57 = ssub.s32 %s23, %s30
      %p58 = scmp.eq.s32.totalorder %s57, 0
      %s60 = sadd.s32 %s59, 1
      %s61 = scalar_select %p58, %s59, %s60
      %p64 = pneg %p58
      %p65 = scmp.eq.s32.totalorder %s23, 1
      %p66 = por %p64, %p65
      %p67 = scmp.ne.s32.totalorder %s59, %s62
      %p68 = scmp.eq.s32.totalorder %s23, 0
      %p69 = por %p67, %p68
      %p70 = scmp.ne.s32.totalorder %s59, %s62
      %p71 = scmp.eq.s32.totalorder %s28, 1
      %p72 = por %p70, %p71
      %p73 = scmp.ne.s32.totalorder %s62, %s63
      %p74 = scmp.eq.s32.totalorder %s28, 0
      %p75 = por %p73, %p74
      %p76 = scmp.ne.s32.totalorder %s62, %s63
      %p77 = scmp.eq.s32.totalorder %s29, 1
      %p78 = por %p76, %p77
      %p80 = scmp.ne.s32.totalorder %s63, %s79
      %p81 = scmp.eq.s32.totalorder %s29, 0
      %p82 = por %p80, %p81
      %s83 = ssub.s32 %s23, %s30
      %p84 = scmp.eq.s32.totalorder %s83, 0
      %s86 = sadd.s32 %s85, 1
      %s87 = scalar_select %p84, %s85, %s86
      %p90 = pneg %p84
      %p91 = scmp.eq.s32.totalorder %s23, 1
      %p92 = por %p90, %p91
      %p93 = scmp.ne.s32.totalorder %s85, %s88
      %p94 = scmp.eq.s32.totalorder %s23, 0
      %p95 = por %p93, %p94
      %p96 = scmp.ne.s32.totalorder %s85, %s88
      %p97 = scmp.eq.s32.totalorder %s28, 1
      %p98 = por %p96, %p97
      %p99 = scmp.ne.s32.totalorder %s88, %s89
      %p100 = scmp.eq.s32.totalorder %s28, 0
      %p101 = por %p99, %p100
      %p102 = scmp.ne.s32.totalorder %s88, %s89
      %p103 = scmp.eq.s32.totalorder %s29, 1
      %p104 = por %p102, %p103
      %p106 = scmp.ne.s32.totalorder %s89, %s105
      %p107 = scmp.eq.s32.totalorder %s29, 0
      %p108 = por %p106, %p107
      %s110 = sadd.s32 %s109, 1
      %p113 = scmp.eq.s32.totalorder %s23, 1
      %p114 = scmp.ne.s32.totalorder %s109, %s111
      %p115 = scmp.eq.s32.totalorder %s23, 0
      %p116 = por %p114, %p115
      %p117 = scmp.ne.s32.totalorder %s109, %s111
      %p118 = scmp.eq.s32.totalorder %s28, 1
      %p119 = por %p117, %p118
      %p120 = scmp.ne.s32.totalorder %s111, %s112
      %p121 = scmp.eq.s32.totalorder %s28, 0
      %p122 = por %p120, %p121
      %p123 = scmp.ne.s32.totalorder %s111, %s112
      %p124 = scmp.eq.s32.totalorder %s29, 1
      %p125 = por %p123, %p124
      %p127 = scmp.ne.s32.totalorder %s112, %s126
      %p128 = scmp.eq.s32.totalorder %s29, 0
      %p129 = por %p127, %p128
      %s131 = sadd.s32 %s130, 1
      %p134 = scmp.eq.s32.totalorder %s23, 1
      %p135 = scmp.ne.s32.totalorder %s130, %s132
      %p136 = scmp.eq.s32.totalorder %s23, 0
      %p137 = por %p135, %p136
      %p138 = scmp.ne.s32.totalorder %s130, %s132
      %p139 = scmp.eq.s32.totalorder %s28, 1
      %p140 = por %p138, %p139
      %p141 = scmp.ne.s32.totalorder %s132, %s133
      %p142 = scmp.eq.s32.totalorder %s28, 0
      %p143 = por %p141, %p142
      %p144 = scmp.ne.s32.totalorder %s132, %s133
      %p145 = scmp.eq.s32.totalorder %s29, 1
      %p146 = por %p144, %p145
      %p148 = scmp.ne.s32.totalorder %s133, %s147
      %p149 = scmp.eq.s32.totalorder %s29, 0
      %p150 = por %p148, %p149
      %s152 = sadd.s32 %s151, 1
      %p155 = scmp.eq.s32.totalorder %s23, 1
      %p156 = scmp.ne.s32.totalorder %s151, %s153
      %p157 = scmp.eq.s32.totalorder %s23, 0
      %p158 = por %p156, %p157
      %p159 = scmp.ne.s32.totalorder %s151, %s153
      %p160 = scmp.eq.s32.totalorder %s28, 1
      %p161 = por %p159, %p160
      %p162 = scmp.ne.s32.totalorder %s153, %s154
      %p163 = scmp.eq.s32.totalorder %s28, 0
      %p164 = por %p162, %p163
      %p165 = scmp.ne.s32.totalorder %s153, %s154
      %p166 = scmp.eq.s32.totalorder %s29, 1
      %p167 = por %p165, %p166
      %p169 = scmp.ne.s32.totalorder %s154, %s168
      %p170 = scmp.eq.s32.totalorder %s29, 0
      %p171 = por %p169, %p170
      %s173 = sadd.s32 %s172, 1
      %p176 = scmp.eq.s32.totalorder %s23, 1
      %p177 = scmp.ne.s32.totalorder %s172, %s174
      %p178 = scmp.eq.s32.totalorder %s23, 0
      %p179 = por %p177, %p178
      %p180 = scmp.ne.s32.totalorder %s172, %s174
      %p181 = scmp.eq.s32.totalorder %s28, 1
      %p182 = por %p180, %p181
      %p183 = scmp.ne.s32.totalorder %s174, %s175
      %p184 = scmp.eq.s32.totalorder %s28, 0
      %p185 = por %p183, %p184
      %p186 = scmp.ne.s32.totalorder %s174, %s175
      %p187 = scmp.eq.s32.totalorder %s29, 1
      %p188 = por %p186, %p187
      %p190 = scmp.ne.s32.totalorder %s175, %s189
      %p191 = scmp.eq.s32.totalorder %s29, 0
      %p192 = por %p190, %p191
      %s194 = sadd.s32 %s193, 1
      %p197 = scmp.eq.s32.totalorder %s23, 1
      %p198 = scmp.ne.s32.totalorder %s193, %s195
      %p199 = scmp.eq.s32.totalorder %s23, 0
      %p200 = por %p198, %p199
      %p201 = scmp.ne.s32.totalorder %s193, %s195
      %p202 = scmp.eq.s32.totalorder %s28, 1
      %p203 = por %p201, %p202
      %p204 = scmp.ne.s32.totalorder %s195, %s196
      %p205 = scmp.eq.s32.totalorder %s28, 0
      %p206 = por %p204, %p205
      %p207 = scmp.ne.s32.totalorder %s195, %s196
      %p208 = scmp.eq.s32.totalorder %s29, 1
      %p209 = por %p207, %p208
      %p211 = scmp.ne.s32.totalorder %s196, %s210
      %p212 = scmp.eq.s32.totalorder %s29, 0
      %p213 = por %p211, %p212
      %s214 = ssub.s32 %s23, %s30
      %p215 = scmp.eq.s32.totalorder %s214, 0
      %s217 = sadd.s32 %s216, 1
      %s218 = scalar_select %p215, %s216, %s217
      %p221 = pneg %p215
      %p222 = scmp.eq.s32.totalorder %s23, 1
      %p223 = por %p221, %p222
      %p224 = scmp.ne.s32.totalorder %s216, %s219
      %p225 = scmp.eq.s32.totalorder %s23, 0
      %p226 = por %p224, %p225
      %p227 = scmp.ne.s32.totalorder %s216, %s219
      %p228 = scmp.eq.s32.totalorder %s28, 1
      %p229 = por %p227, %p228
      %p230 = scmp.ne.s32.totalorder %s219, %s220
      %p231 = scmp.eq.s32.totalorder %s28, 0
      %p232 = por %p230, %p231
      %p233 = scmp.ne.s32.totalorder %s219, %s220
      %p234 = scmp.eq.s32.totalorder %s29, 1
      %p235 = por %p233, %p234
      %p237 = scmp.ne.s32.totalorder %s220, %s236
      %p238 = scmp.eq.s32.totalorder %s29, 0
      %p239 = por %p237, %p238
      %p240 = scmp.le.s32.totalorder 1, %s23
      %p241 = scmp.lt.s32.totalorder %s23, 3
      %p242 = pnand %p240, %p241
      %p243 = pneg %p242
      // Predicated region
      $region9: #{tpu_custom_call.1} parent=5 // pred_check
        _
      $region10: #{tpu_custom_call.1} parent=5 // pred_check_branch
        %245 = sbr.rel (%p242) target = $region12
      $region11: #{tpu_custom_call.1} parent=5 // pred_region
        %s246 = ssub.s32 %s23, 1
        // Predicated region
        $region13: #{tpu_custom_call.1} parent=11 // pred_check
          %p247 = pneg %p122
        $region14: #{tpu_custom_call.1} parent=11 // pred_check_branch
          %249 = sbr.rel (%p247) target = $region16
        $region15: #{tpu_custom_call.1} parent=11 // pred_region
          _
        $region16: #{tpu_custom_call.1} parent=11 // pred_fallthru
          _
        // Predicated region
        $region17: #{tpu_custom_call.1} parent=11 // pred_check
          %p250 = pneg %p143
        $region18: #{tpu_custom_call.1} parent=11 // pred_check_branch
          %252 = sbr.rel (%p250) target = $region20
        $region19: #{tpu_custom_call.1} parent=11 // pred_region
          _
        $region20: #{tpu_custom_call.1} parent=11 // pred_fallthru
          _
        // Predicated region
        $region21: #{tpu_custom_call.1} parent=11 // pred_check
          %p253 = pneg %p164
        $region22: #{tpu_custom_call.1} parent=11 // pred_check_branch
          %255 = sbr.rel (%p253) target = $region24
        $region23: #{tpu_custom_call.1} parent=11 // pred_region
          _
        $region24: #{tpu_custom_call.1} parent=11 // pred_fallthru
          _
        // Predicated region
        $region25: #{tpu_custom_call.1} parent=11 // pred_check
          %p256 = pneg %p185
        $region26: #{tpu_custom_call.1} parent=11 // pred_check_branch
          %258 = sbr.rel (%p256) target = $region28
        $region27: #{tpu_custom_call.1} parent=11 // pred_region
          _
        $region28: #{tpu_custom_call.1} parent=11 // pred_fallthru
          _
        // Predicated region
        $region29: #{tpu_custom_call.1} parent=11 // pred_check
          %p259 = pneg %p206
        $region30: #{tpu_custom_call.1} parent=11 // pred_check_branch
          %261 = sbr.rel (%p259) target = $region32
        $region31: #{tpu_custom_call.1} parent=11 // pred_region
          _
        $region32: #{tpu_custom_call.1} parent=11 // pred_fallthru
          _
      $region12: #{tpu_custom_call.1} parent=5 // pred_fallthru
        _
      %p262 = scmp.lt.s32.totalorder %s23, 2
      // Predicated region
      $region33: #{tpu_custom_call.1} parent=5 // pred_check
        %p263 = pneg %p262
      $region34: #{tpu_custom_call.1} parent=5 // pred_check_branch
        %265 = sbr.rel (%p263) target = $region36
      $region35: #{tpu_custom_call.1} parent=5 // pred_region
        // Predicated region
        $region37: #{tpu_custom_call.1} parent=35 // pred_check
          %p266 = pneg %p43
        $region38: #{tpu_custom_call.1} parent=35 // pred_check_branch
          %268 = sbr.rel (%p266) target = $region40
        $region39: #{tpu_custom_call.1} parent=35 // pred_region
          %s269 = smul.u32 8, %s23
          %p270 = scmp.lt.s32.totalorder %s269, 15
          %s271 = scalar_select %p270, %s269, 15
          %s272 = smul.addr %s271, 2
          %s273 = scalar_lea.vmem %s0, %s272
          %s274 = smul.u32 8, %s23
        $region40: #{tpu_custom_call.1} parent=35 // pred_fallthru
          _
        // Predicated region
        $region41: #{tpu_custom_call.1} parent=35 // pred_check
          %p275 = pneg %p69
        $region42: #{tpu_custom_call.1} parent=35 // pred_check_branch
          %277 = sbr.rel (%p275) target = $region44
        $region43: #{tpu_custom_call.1} parent=35 // pred_region
          %s278 = sand.u32 %s59, 1
          %s279 = scalar_lea.sflag [#allocation3], %s278
          %s280 = sand.u32 %s59, 1
          %s281 = smul.addr %s280, 16
          %s282 = scalar_lea.vmem [#allocation2], %s281
          %s283 = smul.u32 8, %s23
          %285 = vsyncadd %s279, 0
          %s286 = smul.addr %s283, 2
          %s287 = scalar_lea.hbm %s1, %s286
          %s288 = sshll.u32 %s287, 4
          %s289 = int_to_ptr.hbm [resolvable:$true] %s288
          %s290 = sshll.u32 %s282, 4
          %s291 = int_to_ptr.vmem [resolvable:$true] %s290
          %296 = dma.hbm_to_vmem [thread:$0]  %s289, 256, %s291, %s279, 32, 32, 2
        $region44: #{tpu_custom_call.1} parent=35 // pred_fallthru
          _
        // Predicated region
        $region45: #{tpu_custom_call.1} parent=35 // pred_check
          %p297 = pneg %p95
        $region46: #{tpu_custom_call.1} parent=35 // pred_check_branch
          %299 = sbr.rel (%p297) target = $region48
        $region47: #{tpu_custom_call.1} parent=35 // pred_region
          %s300 = sand.u32 %s85, 1
          %s301 = scalar_lea.sflag [#allocation6], %s300
          %s302 = sand.u32 %s85, 1
          %s303 = smul.addr %s302, 16
          %s304 = scalar_lea.vmem [#allocation5], %s303
          %s305 = smul.u32 8, %s23
          %307 = vsyncadd %s301, 0
          %s308 = smul.addr %s305, 2
          %s309 = scalar_lea.hbm %s2, %s308
          %s310 = sshll.u32 %s309, 4
          %s311 = int_to_ptr.hbm [resolvable:$true] %s310
          %s312 = sshll.u32 %s304, 4
          %s313 = int_to_ptr.vmem [resolvable:$true] %s312
          %318 = dma.hbm_to_vmem [thread:$0]  %s311, 256, %s313, %s301, 32, 32, 2
        $region48: #{tpu_custom_call.1} parent=35 // pred_fallthru
          _
      $region36: #{tpu_custom_call.1} parent=5 // pred_fallthru
        _
      %p319 = scmp.le.s32.totalorder 1, %s23
      %p320 = scmp.lt.s32.totalorder %s23, 3
      %p321 = pnand %p319, %p320
      %p322 = pneg %p321
      // Predicated region
      $region49: #{tpu_custom_call.1} parent=5 // pred_check
        _
      $region50: #{tpu_custom_call.1} parent=5 // pred_check_branch
        %324 = sbr.rel (%p321) target = $region52
      $region51: #{tpu_custom_call.1} parent=5 // pred_region
        %s325 = ssub.s32 %s23, 1
        %s326 = sand.u32 %s62, 1
        %s327 = scalar_lea.sflag [#allocation3], %s326
        %s328 = sand.u32 %s62, 1
        %s329 = smul.addr %s328, 16
        %s330 = scalar_lea.vmem [#allocation2], %s329
        // Predicated region
        $region53: #{tpu_custom_call.1} parent=51 // pred_check
          %p331 = pneg %p75
        $region54: #{tpu_custom_call.1} parent=51 // pred_check_branch
          %333 = sbr.rel (%p331) target = $region56
        $region55: #{tpu_custom_call.1} parent=51 // pred_region
          %335 = dma.done %s327, 256
        $region56: #{tpu_custom_call.1} parent=51 // pred_fallthru
          _
        %s336 = sand.u32 %s88, 1
        %s337 = scalar_lea.sflag [#allocation6], %s336
        %s338 = sand.u32 %s88, 1
        %s339 = smul.addr %s338, 16
        %s340 = scalar_lea.vmem [#allocation5], %s339
        // Predicated region
        $region57: #{tpu_custom_call.1} parent=51 // pred_check
          %p341 = pneg %p101
        $region58: #{tpu_custom_call.1} parent=51 // pred_check_branch
          %343 = sbr.rel (%p341) target = $region60
        $region59: #{tpu_custom_call.1} parent=51 // pred_region
          %345 = dma.done %s337, 256
        $region60: #{tpu_custom_call.1} parent=51 // pred_fallthru
          _
        %s346 = smul.u32 8, %s28
        %p347 = scmp.lt.s32.totalorder %s346, 15
        %s348 = scalar_select %p347, %s346, 15
        %s349 = smul.addr %s348, 2
        %s350 = scalar_lea.vmem %s0, %s349
        %p351 = pneg %p49
        %p352 = pneg %p46
        %s353 = sand.u32 %s62, 1
        %s354 = scalar_lea.sflag [#allocation3], %s353
        %s355 = sand.u32 %s62, 1
        %s356 = smul.addr %s355, 16
        %s357 = scalar_lea.vmem [#allocation2], %s356
        %p358 = pneg %p75
        %p359 = pneg %p72
        %s360 = sand.u32 %s88, 1
        %s361 = scalar_lea.sflag [#allocation6], %s360
        %s362 = sand.u32 %s88, 1
        %s363 = smul.addr %s362, 16
        %s364 = scalar_lea.vmem [#allocation5], %s363
        %p365 = pneg %p101
        %p366 = pneg %p98
        %p367 = pneg %p122
        %p368 = pneg %p119
        %p369 = pneg %p143
        %p370 = pneg %p140
        %p371 = pneg %p164
        %p372 = pneg %p161
        %p373 = pneg %p185
        %p374 = pneg %p182
        %p375 = pneg %p206
        %p376 = pneg %p203
        %p377 = pneg %p232
        %p378 = pneg %p229
        %s379 = sand.u32 %s219, 1
        %s380 = scalar_lea.sflag [#allocation4], %s379
        %s381 = sand.u32 %s219, 1
        %s382 = smul.addr %s381, 8
        %s383 = scalar_lea.vmem [#allocation7], %s382
        %s384 = smul.u32 8, %s28
        %p385 = scmp.lt.s32.totalorder %s384, 15
        %s386 = scalar_select %p385, %s384, 15
        %s387 = smul.addr %s386, 2
        %s388 = scalar_lea.vmem %s0, %s387
        %s389 = smul.u32 8, %s28
        %s390 = smul.u32 8, %s28
        %s391 = smul.u32 8, %s28
        %v393 = vld [vmem:[%s330] sm:$0x3]
        %v394 = vld [vmem:[%s330 + $0x2] sm:$0x3]
        %v395 = vld [vmem:[%s330 + $0x4] sm:$0x3]
        %v396 = vld [vmem:[%s330 + $0x6] sm:$0x3]
        %v397 = vld [vmem:[%s330 + $0x8] sm:$0x3]
        %v398 = vld [vmem:[%s330 + $0xa] sm:$0x3]
        %v399 = vld [vmem:[%s330 + $0xc] sm:$0x3]
        %v400 = vld [vmem:[%s330 + $0xe] sm:$0x3]
        %v401 = vld [vmem:[%s3] sm:$0xf]
        %v402 = vld [vmem:[%s3 + $0x4] sm:$0xf]
        %v403 = vld [vmem:[%s3 + $0x8] sm:$0xf]
        %v404 = vld [vmem:[%s3 + $0xc] sm:$0xf]
        %v405 = vld [vmem:[%s4] sm:$0x1]
        %v407 = vperm.slane %v405, 0
        %410 = vst [vmem:[#allocation1] ss:$4 sm:$0xff] %v393
        %s412 = scalar_lea.vmem [#allocation1], 1
        %413 = vst [vmem:[%s412] ss:$4 sm:$0xff] %v394
        %s415 = scalar_lea.vmem [#allocation1], 2
        %416 = vst [vmem:[%s415] ss:$4 sm:$0xff] %v395
        %s418 = scalar_lea.vmem [#allocation1], 3
        %419 = vst [vmem:[%s418] ss:$4 sm:$0xff] %v396
        %s421 = scalar_lea.vmem [#allocation1], 32
        %422 = vst [vmem:[%s421] ss:$4 sm:$0xff] %v397
        %s424 = scalar_lea.vmem [#allocation1], 33
        %425 = vst [vmem:[%s424] ss:$4 sm:$0xff] %v398
        %s427 = scalar_lea.vmem [#allocation1], 34
        %428 = vst [vmem:[%s427] ss:$4 sm:$0xff] %v399
        %s430 = scalar_lea.vmem [#allocation1], 35
        %431 = vst [vmem:[%s430] ss:$4 sm:$0xff] %v400
        %v432 = vld.sshfl [vmem:[#allocation1] sm:$0xff pattern:$0x73625140]
        %v433 = vld.sshfl [vmem:[#allocation1 + $0x20] sm:$0xff pattern:$0x73625140]
        %v438 = vunpack.c.l.b16 %v401
        %v439 = vunpack.c.l.b16 %v402
        %v440 = vunpack.c.l.b16 %v403
        %v441 = vunpack.c.l.b16 %v404
        %v442 = vpack.c.b16 %v439, %v438
        %v443 = vpack.c.b16 %v441, %v440
        %vm446 = vcmask 261120
        %v447 = vsel %vm446, %v432, 0
        %v449 = vsel %vm446, %v433, 0
        %451 = vmatpush.bf16.msra.mxu0 0
        %452 = vmatpush.bf16.msra.mxu0 0
        %453 = vmatpush.bf16.msra.mxu0 0
        %454 = vmatpush.bf16.msra.mxu0 0
        %455 = vmatpush.bf16.msra.mxu0 0
        %456 = vmatpush.bf16.msra.mxu0 0
        %457 = vmatpush.bf16.msra.mxu0 %v443
        %458 = vmatpush.bf16.msra.mxu0 %v442
        %459 = vmatmul.bf16.gmra.mxu0 %v447
        %v460 = vpop.f32.mrf.mxu0
        %v461 = vadd.f32 %v407, %v460
        %v462 = vpop.f32.mrf.mxu0
        %v463 = vadd.f32 %v407, %v462
        %464 = vmatmul.bf16.gmra.mxu0 %v449
        %v465 = vpop.f32.mrf.mxu0
        %v466 = vadd.f32 %v407, %v465
        %v467 = vpop.f32.mrf.mxu0
        %v468 = vadd.f32 %v407, %v467
        %469 = vdwg.mxu0
        %v470 = vmax.f32 %v461, 0.0
        %v471 = vmax.f32 %v463, 0.0
        %v472 = vmax.f32 %v466, 0.0
        %v473 = vmax.f32 %v468, 0.0
        %v478 = vrot.slane %v470, 4
        %v479 = vrot.slane %v471, 4
        %v480 = vrot.slane %v472, 4
        %v481 = vrot.slane %v473, 4
        %v486 = vld [vmem:[%s5] sm:$0x1]
        %v488 = vperm.slane %v486, 0
        %v490 = vmul.f32 %v470, %v488
        %v491 = vmul.f32 %v478, %v488
        %v492 = vmul.f32 %v471, %v488
        %v493 = vmul.f32 %v479, %v488
        %v494 = vmul.f32 %v472, %v488
        %v495 = vmul.f32 %v480, %v488
        %v496 = vmul.f32 %v473, %v488
        %v497 = vmul.f32 %v481, %v488
        %vm498 = vcmask 125952
        %v499 = vsel %vm498, %v490, 0.0
        %500 = vadd.xlane.f32.xlu0 %v499
        %v501 = vpop.xlane.xlu0 %500
        %v502 = vsel %vm498, %v491, 0.0
        %503 = vadd.xlane.f32.xlu0 %v502
        %v504 = vpop.xlane.xlu0 %503
        %v505 = vsel %vm498, %v492, 0.0
        %506 = vadd.xlane.f32.xlu0 %v505
        %v507 = vpop.xlane.xlu0 %506
        %v508 = vsel %vm498, %v493, 0.0
        %509 = vadd.xlane.f32.xlu0 %v508
        %v510 = vpop.xlane.xlu0 %509
        %v511 = vsel %vm498, %v494, 0.0
        %512 = vadd.xlane.f32.xlu0 %v511
        %v513 = vpop.xlane.xlu0 %512
        %v514 = vsel %vm498, %v495, 0.0
        %515 = vadd.xlane.f32.xlu0 %v514
        %v516 = vpop.xlane.xlu0 %515
        %v517 = vsel %vm498, %v496, 0.0
        %518 = vadd.xlane.f32.xlu0 %v517
        %v519 = vpop.xlane.xlu0 %518
        %v520 = vsel %vm498, %v497, 0.0
        %521 = vadd.xlane.f32.xlu0 %v520
        %v522 = vpop.xlane.xlu0 %521
        %v531 = vlaneseq
        %v532 = vand.u32 %v531, 127
        %v533 = vperm.slane %v501, %v532
        %v534 = vperm.slane %v504, %v532
        %v535 = vperm.slane %v507, %v532
        %v536 = vperm.slane %v510, %v532
        %v537 = vperm.slane %v513, %v532
        %v538 = vperm.slane %v516, %v532
        %v539 = vperm.slane %v519, %v532
        %v540 = vperm.slane %v522, %v532
        %vm541 = vcmask 1041409
        %v542 = vsel %vm541, %v534, %v533
        %vm543 = vcmask 1042434
        %v544 = vsel %vm543, %v535, %v542
        %vm545 = vcmask 1043459
        %v546 = vsel %vm545, %v536, %v544
        %vm547 = vcmask 1044484
        %v548 = vsel %vm547, %v537, %v546
        %vm549 = vcmask 1045509
        %v550 = vsel %vm549, %v538, %v548
        %vm551 = vcmask 1046534
        %v552 = vsel %vm551, %v539, %v550
        %vm553 = vcmask 1047559
        %v554 = vsel %vm553, %v540, %v552
        %vm556 = vcmask 31744
        %v557 = vsel %vm556, %v554, -inf
        %558 = vmax.xlane.f32.xlu0 %v557
        %v559 = vpop.xlane.xlu0 %558
        %v561 = vperm.slane %v559, 0
        %v562 = vperm.slane %v559, 1
        %v563 = vperm.slane %v559, 2
        %v564 = vperm.slane %v559, 3
        %v565 = vperm.slane %v559, 4
        %v566 = vperm.slane %v559, 5
        %v567 = vperm.slane %v559, 6
        %v568 = vperm.slane %v559, 7
        %v577 = vsub.f32 %v501, %v561
        %v578 = vsub.f32 %v504, %v562
        %v579 = vsub.f32 %v507, %v563
        %v580 = vsub.f32 %v510, %v564
        %v581 = vsub.f32 %v513, %v565
        %v582 = vsub.f32 %v516, %v566
        %v583 = vsub.f32 %v519, %v567
        %v584 = vsub.f32 %v522, %v568
        %v585 = vmul.f32 %v577, 1.442695
        %v586 = vpow.pop %v585
        %v587 = vmul.f32 %v578, 1.442695
        %v588 = vpow.pop %v587
        %v589 = vmul.f32 %v579, 1.442695
        %v590 = vpow.pop %v589
        %v591 = vmul.f32 %v580, 1.442695
        %v592 = vpow.pop %v591
        %v593 = vmul.f32 %v581, 1.442695
        %v594 = vpow.pop %v593
        %v595 = vmul.f32 %v582, 1.442695
        %v596 = vpow.pop %v595
        %v597 = vmul.f32 %v583, 1.442695
        %v598 = vpow.pop %v597
        %v599 = vmul.f32 %v584, 1.442695
        %v600 = vpow.pop %v599
        %609 = vset.pattern.permute.xlu0 0
        %610 = vperm.xlu0 %609, %v586
        %v611 = vpop.permute.xlu0 %610
        %612 = vset.pattern.permute.xlu0 0
        %613 = vperm.xlu0 %612, %v588
        %v614 = vpop.permute.xlu0 %613
        %615 = vset.pattern.permute.xlu0 0
        %616 = vperm.xlu0 %615, %v590
        %v617 = vpop.permute.xlu0 %616
        %618 = vset.pattern.permute.xlu0 0
        %619 = vperm.xlu0 %618, %v592
        %v620 = vpop.permute.xlu0 %619
        %621 = vset.pattern.permute.xlu0 0
        %622 = vperm.xlu0 %621, %v594
        %v623 = vpop.permute.xlu0 %622
        %624 = vset.pattern.permute.xlu0 0
        %625 = vperm.xlu0 %624, %v596
        %v626 = vpop.permute.xlu0 %625
        %627 = vset.pattern.permute.xlu0 0
        %628 = vperm.xlu0 %627, %v598
        %v629 = vpop.permute.xlu0 %628
        %630 = vset.pattern.permute.xlu0 0
        %631 = vperm.xlu0 %630, %v600
        %v632 = vpop.permute.xlu0 %631
        %v633 = vperm.slane %v611, %v532
        %v634 = vperm.slane %v614, %v532
        %v635 = vperm.slane %v617, %v532
        %v636 = vperm.slane %v620, %v532
        %v637 = vperm.slane %v623, %v532
        %v638 = vperm.slane %v626, %v532
        %v639 = vperm.slane %v629, %v532
        %v640 = vperm.slane %v632, %v532
        %v641 = vsel %vm541, %v634, %v633
        %v642 = vsel %vm543, %v635, %v641
        %v643 = vsel %vm545, %v636, %v642
        %v644 = vsel %vm547, %v637, %v643
        %v645 = vsel %vm549, %v638, %v644
        %v646 = vsel %vm551, %v639, %v645
        %v647 = vsel %vm553, %v640, %v646
        %v649 = vsel %vm556, %v647, 0.0
        %650 = vadd.xlane.f32.xlu0 %v649
        %v651 = vpop.xlane.xlu0 %650
        %v652 = vrcp.pop %v651
        %v654 = vperm.slane %v652, 0
        %v655 = vperm.slane %v652, 1
        %v656 = vperm.slane %v652, 2
        %v657 = vperm.slane %v652, 3
        %v658 = vperm.slane %v652, 4
        %v659 = vperm.slane %v652, 5
        %v660 = vperm.slane %v652, 6
        %v661 = vperm.slane %v652, 7
        %v670 = vmul.f32 %v586, %v654
        %v671 = vmul.f32 %v588, %v655
        %v672 = vmul.f32 %v590, %v656
        %v673 = vmul.f32 %v592, %v657
        %v674 = vmul.f32 %v594, %v658
        %v675 = vmul.f32 %v596, %v659
        %v676 = vmul.f32 %v598, %v660
        %v677 = vmul.f32 %v600, %v661
        %v678 = vunpack.c.l.bf16 %v393
        %v679 = vunpack.c.l.bf16 %v394
        %v680 = vunpack.c.l.bf16 %v395
        %v681 = vunpack.c.l.bf16 %v396
        %v682 = vunpack.c.l.bf16 %v397
        %v683 = vunpack.c.l.bf16 %v398
        %v684 = vunpack.c.l.bf16 %v399
        %v685 = vunpack.c.l.bf16 %v400
        %687 = vset.pattern.permute.xlu0 0
        %688 = vperm.xlu0 %687, %v670
        %v689 = vpop.permute.xlu0 %688
        %692 = vset.pattern.permute.xlu0 0
        %693 = vperm.xlu0 %692, %v671
        %v694 = vpop.permute.xlu0 %693
        %697 = vset.pattern.permute.xlu0 0
        %698 = vperm.xlu0 %697, %v672
        %v699 = vpop.permute.xlu0 %698
        %702 = vset.pattern.permute.xlu0 0
        %703 = vperm.xlu0 %702, %v673
        %v704 = vpop.permute.xlu0 %703
        %707 = vset.pattern.permute.xlu0 0
        %708 = vperm.xlu0 %707, %v674
        %v709 = vpop.permute.xlu0 %708
        %712 = vset.pattern.permute.xlu0 0
        %713 = vperm.xlu0 %712, %v675
        %v714 = vpop.permute.xlu0 %713
        %717 = vset.pattern.permute.xlu0 0
        %718 = vperm.xlu0 %717, %v676
        %v719 = vpop.permute.xlu0 %718
        %722 = vset.pattern.permute.xlu0 0
        %723 = vperm.xlu0 %722, %v677
        %v724 = vpop.permute.xlu0 %723
        %v726 = vmul.f32 %v689, %v678
        %v727 = vmul.f32 %v694, %v679
        %v728 = vmul.f32 %v699, %v680
        %v729 = vmul.f32 %v704, %v681
        %v730 = vmul.f32 %v709, %v682
        %v731 = vmul.f32 %v714, %v683
        %v732 = vmul.f32 %v719, %v684
        %v733 = vmul.f32 %v724, %v685
        %vm734 = vcmask 257024
        %v735 = vsel %vm734, %v726, 0.0
        %v736 = vrot.slane %v735, 4
        %v737 = vadd.f32 %v735, %v736
        %v738 = vrot.slane %v737, 2
        %v739 = vadd.f32 %v737, %v738
        %v740 = vrot.slane %v739, 1
        %v741 = vadd.f32 %v739, %v740
        %v742 = vsel %vm734, %v727, 0.0
        %v743 = vrot.slane %v742, 4
        %v744 = vadd.f32 %v742, %v743
        %v745 = vrot.slane %v744, 2
        %v746 = vadd.f32 %v744, %v745
        %v747 = vrot.slane %v746, 1
        %v748 = vadd.f32 %v746, %v747
        %v749 = vsel %vm734, %v728, 0.0
        %v750 = vrot.slane %v749, 4
        %v751 = vadd.f32 %v749, %v750
        %v752 = vrot.slane %v751, 2
        %v753 = vadd.f32 %v751, %v752
        %v754 = vrot.slane %v753, 1
        %v755 = vadd.f32 %v753, %v754
        %v756 = vsel %vm734, %v729, 0.0
        %v757 = vrot.slane %v756, 4
        %v758 = vadd.f32 %v756, %v757
        %v759 = vrot.slane %v758, 2
        %v760 = vadd.f32 %v758, %v759
        %v761 = vrot.slane %v760, 1
        %v762 = vadd.f32 %v760, %v761
        %v763 = vsel %vm734, %v730, 0.0
        %v764 = vrot.slane %v763, 4
        %v765 = vadd.f32 %v763, %v764
        %v766 = vrot.slane %v765, 2
        %v767 = vadd.f32 %v765, %v766
        %v768 = vrot.slane %v767, 1
        %v769 = vadd.f32 %v767, %v768
        %v770 = vsel %vm734, %v731, 0.0
        %v771 = vrot.slane %v770, 4
        %v772 = vadd.f32 %v770, %v771
        %v773 = vrot.slane %v772, 2
        %v774 = vadd.f32 %v772, %v773
        %v775 = vrot.slane %v774, 1
        %v776 = vadd.f32 %v774, %v775
        %v777 = vsel %vm734, %v732, 0.0
        %v778 = vrot.slane %v777, 4
        %v779 = vadd.f32 %v777, %v778
        %v780 = vrot.slane %v779, 2
        %v781 = vadd.f32 %v779, %v780
        %v782 = vrot.slane %v781, 1
        %v783 = vadd.f32 %v781, %v782
        %v784 = vsel %vm734, %v733, 0.0
        %v785 = vrot.slane %v784, 4
        %v786 = vadd.f32 %v784, %v785
        %v787 = vrot.slane %v786, 2
        %v788 = vadd.f32 %v786, %v787
        %v789 = vrot.slane %v788, 1
        %v790 = vadd.f32 %v788, %v789
        %v791 = vld [vmem:[%s340] sm:$0x3]
        %v792 = vld [vmem:[%s340 + $0x2] sm:$0x3]
        %v793 = vld [vmem:[%s340 + $0x4] sm:$0x3]
        %v794 = vld [vmem:[%s340 + $0x6] sm:$0x3]
        %v795 = vld [vmem:[%s340 + $0x8] sm:$0x3]
        %v796 = vld [vmem:[%s340 + $0xa] sm:$0x3]
        %v797 = vld [vmem:[%s340 + $0xc] sm:$0x3]
        %v798 = vld [vmem:[%s340 + $0xe] sm:$0x3]
        %800 = vst [vmem:[#allocation1] ss:$4 sm:$0xff] %v791
        %s802 = scalar_lea.vmem [#allocation1], 1
        %803 = vst [vmem:[%s802] ss:$4 sm:$0xff] %v792
        %s805 = scalar_lea.vmem [#allocation1], 2
        %806 = vst [vmem:[%s805] ss:$4 sm:$0xff] %v793
        %s808 = scalar_lea.vmem [#allocation1], 3
        %809 = vst [vmem:[%s808] ss:$4 sm:$0xff] %v794
        %s811 = scalar_lea.vmem [#allocation1], 32
        %812 = vst [vmem:[%s811] ss:$4 sm:$0xff] %v795
        %s814 = scalar_lea.vmem [#allocation1], 33
        %815 = vst [vmem:[%s814] ss:$4 sm:$0xff] %v796
        %s817 = scalar_lea.vmem [#allocation1], 34
        %818 = vst [vmem:[%s817] ss:$4 sm:$0xff] %v797
        %s820 = scalar_lea.vmem [#allocation1], 35
        %821 = vst [vmem:[%s820] ss:$4 sm:$0xff] %v798
        %v822 = vld.sshfl [vmem:[#allocation1] sm:$0xff pattern:$0x73625140]
        %v823 = vld.sshfl [vmem:[#allocation1 + $0x20] sm:$0xff pattern:$0x73625140]
        %v824 = vsel %vm446, %v822, 0
        %v826 = vsel %vm446, %v823, 0
        %828 = vmatpush.bf16.msra.mxu0 0
        %829 = vmatpush.bf16.msra.mxu0 0
        %830 = vmatpush.bf16.msra.mxu0 0
        %831 = vmatpush.bf16.msra.mxu0 0
        %832 = vmatpush.bf16.msra.mxu0 0
        %833 = vmatpush.bf16.msra.mxu0 0
        %834 = vmatpush.bf16.msra.mxu0 %v443
        %835 = vmatpush.bf16.msra.mxu0 %v442
        %836 = vmatmul.bf16.gmra.mxu0 %v824
        %v837 = vpop.f32.mrf.mxu0
        %v838 = vadd.f32 %v407, %v837
        %v839 = vpop.f32.mrf.mxu0
        %v840 = vadd.f32 %v407, %v839
        %841 = vmatmul.bf16.gmra.mxu0 %v826
        %v842 = vpop.f32.mrf.mxu0
        %v843 = vadd.f32 %v407, %v842
        %v844 = vpop.f32.mrf.mxu0
        %v845 = vadd.f32 %v407, %v844
        %846 = vdwg.mxu0
        %v847 = vmax.f32 %v838, 0.0
        %v848 = vmax.f32 %v840, 0.0
        %v849 = vmax.f32 %v843, 0.0
        %v850 = vmax.f32 %v845, 0.0
        %v855 = vrot.slane %v847, 4
        %v856 = vrot.slane %v848, 4
        %v857 = vrot.slane %v849, 4
        %v858 = vrot.slane %v850, 4
        %v863 = vmul.f32 %v847, %v488
        %v864 = vmul.f32 %v855, %v488
        %v865 = vmul.f32 %v848, %v488
        %v866 = vmul.f32 %v856, %v488
        %v867 = vmul.f32 %v849, %v488
        %v868 = vmul.f32 %v857, %v488
        %v869 = vmul.f32 %v850, %v488
        %v870 = vmul.f32 %v858, %v488
        %v871 = vsel %vm498, %v863, 0.0
        %872 = vadd.xlane.f32.xlu0 %v871
        %v873 = vpop.xlane.xlu0 %872
        %v874 = vsel %vm498, %v864, 0.0
        %875 = vadd.xlane.f32.xlu0 %v874
        %v876 = vpop.xlane.xlu0 %875
        %v877 = vsel %vm498, %v865, 0.0
        %878 = vadd.xlane.f32.xlu0 %v877
        %v879 = vpop.xlane.xlu0 %878
        %v880 = vsel %vm498, %v866, 0.0
        %881 = vadd.xlane.f32.xlu0 %v880
        %v882 = vpop.xlane.xlu0 %881
        %v883 = vsel %vm498, %v867, 0.0
        %884 = vadd.xlane.f32.xlu0 %v883
        %v885 = vpop.xlane.xlu0 %884
        %v886 = vsel %vm498, %v868, 0.0
        %887 = vadd.xlane.f32.xlu0 %v886
        %v888 = vpop.xlane.xlu0 %887
        %v889 = vsel %vm498, %v869, 0.0
        %890 = vadd.xlane.f32.xlu0 %v889
        %v891 = vpop.xlane.xlu0 %890
        %v892 = vsel %vm498, %v870, 0.0
        %893 = vadd.xlane.f32.xlu0 %v892
        %v894 = vpop.xlane.xlu0 %893
        %v903 = vperm.slane %v873, %v532
        %v904 = vperm.slane %v876, %v532
        %v905 = vperm.slane %v879, %v532
        %v906 = vperm.slane %v882, %v532
        %v907 = vperm.slane %v885, %v532
        %v908 = vperm.slane %v888, %v532
        %v909 = vperm.slane %v891, %v532
        %v910 = vperm.slane %v894, %v532
        %v911 = vsel %vm541, %v904, %v903
        %v912 = vsel %vm543, %v905, %v911
        %v913 = vsel %vm545, %v906, %v912
        %v914 = vsel %vm547, %v907, %v913
        %v915 = vsel %vm549, %v908, %v914
        %v916 = vsel %vm551, %v909, %v915
        %v917 = vsel %vm553, %v910, %v916
        %v919 = vsel %vm556, %v917, -inf
        %920 = vmax.xlane.f32.xlu0 %v919
        %v921 = vpop.xlane.xlu0 %920
        %v923 = vperm.slane %v921, 0
        %v924 = vperm.slane %v921, 1
        %v925 = vperm.slane %v921, 2
        %v926 = vperm.slane %v921, 3
        %v927 = vperm.slane %v921, 4
        %v928 = vperm.slane %v921, 5
        %v929 = vperm.slane %v921, 6
        %v930 = vperm.slane %v921, 7
        %v939 = vsub.f32 %v873, %v923
        %v940 = vsub.f32 %v876, %v924
        %v941 = vsub.f32 %v879, %v925
        %v942 = vsub.f32 %v882, %v926
        %v943 = vsub.f32 %v885, %v927
        %v944 = vsub.f32 %v888, %v928
        %v945 = vsub.f32 %v891, %v929
        %v946 = vsub.f32 %v894, %v930
        %v947 = vmul.f32 %v939, 1.442695
        %v948 = vpow.pop %v947
        %v949 = vmul.f32 %v940, 1.442695
        %v950 = vpow.pop %v949
        %v951 = vmul.f32 %v941, 1.442695
        %v952 = vpow.pop %v951
        %v953 = vmul.f32 %v942, 1.442695
        %v954 = vpow.pop %v953
        %v955 = vmul.f32 %v943, 1.442695
        %v956 = vpow.pop %v955
        %v957 = vmul.f32 %v944, 1.442695
        %v958 = vpow.pop %v957
        %v959 = vmul.f32 %v945, 1.442695
        %v960 = vpow.pop %v959
        %v961 = vmul.f32 %v946, 1.442695
        %v962 = vpow.pop %v961
        %971 = vset.pattern.permute.xlu0 0
        %972 = vperm.xlu0 %971, %v948
        %v973 = vpop.permute.xlu0 %972
        %974 = vset.pattern.permute.xlu0 0
        %975 = vperm.xlu0 %974, %v950
        %v976 = vpop.permute.xlu0 %975
        %977 = vset.pattern.permute.xlu0 0
        %978 = vperm.xlu0 %977, %v952
        %v979 = vpop.permute.xlu0 %978
        %980 = vset.pattern.permute.xlu0 0
        %981 = vperm.xlu0 %980, %v954
        %v982 = vpop.permute.xlu0 %981
        %983 = vset.pattern.permute.xlu0 0
        %984 = vperm.xlu0 %983, %v956
        %v985 = vpop.permute.xlu0 %984
        %986 = vset.pattern.permute.xlu0 0
        %987 = vperm.xlu0 %986, %v958
        %v988 = vpop.permute.xlu0 %987
        %989 = vset.pattern.permute.xlu0 0
        %990 = vperm.xlu0 %989, %v960
        %v991 = vpop.permute.xlu0 %990
        %992 = vset.pattern.permute.xlu0 0
        %993 = vperm.xlu0 %992, %v962
        %v994 = vpop.permute.xlu0 %993
        %v995 = vperm.slane %v973, %v532
        %v996 = vperm.slane %v976, %v532
        %v997 = vperm.slane %v979, %v532
        %v998 = vperm.slane %v982, %v532
        %v999 = vperm.slane %v985, %v532
        %v1000 = vperm.slane %v988, %v532
        %v1001 = vperm.slane %v991, %v532
        %v1002 = vperm.slane %v994, %v532
        %v1003 = vsel %vm541, %v996, %v995
        %v1004 = vsel %vm543, %v997, %v1003
        %v1005 = vsel %vm545, %v998, %v1004
        %v1006 = vsel %vm547, %v999, %v1005
        %v1007 = vsel %vm549, %v1000, %v1006
        %v1008 = vsel %vm551, %v1001, %v1007
        %v1009 = vsel %vm553, %v1002, %v1008
        %v1011 = vsel %vm556, %v1009, 0.0
        %1012 = vadd.xlane.f32.xlu0 %v1011
        %v1013 = vpop.xlane.xlu0 %1012
        %v1014 = vrcp.pop %v1013
        %v1016 = vperm.slane %v1014, 0
        %v1017 = vperm.slane %v1014, 1
        %v1018 = vperm.slane %v1014, 2
        %v1019 = vperm.slane %v1014, 3
        %v1020 = vperm.slane %v1014, 4
        %v1021 = vperm.slane %v1014, 5
        %v1022 = vperm.slane %v1014, 6
        %v1023 = vperm.slane %v1014, 7
        %v1032 = vmul.f32 %v948, %v1016
        %v1033 = vmul.f32 %v950, %v1017
        %v1034 = vmul.f32 %v952, %v1018
        %v1035 = vmul.f32 %v954, %v1019
        %v1036 = vmul.f32 %v956, %v1020
        %v1037 = vmul.f32 %v958, %v1021
        %v1038 = vmul.f32 %v960, %v1022
        %v1039 = vmul.f32 %v962, %v1023
        %v1040 = vunpack.c.l.bf16 %v791
        %v1041 = vunpack.c.l.bf16 %v792
        %v1042 = vunpack.c.l.bf16 %v793
        %v1043 = vunpack.c.l.bf16 %v794
        %v1044 = vunpack.c.l.bf16 %v795
        %v1045 = vunpack.c.l.bf16 %v796
        %v1046 = vunpack.c.l.bf16 %v797
        %v1047 = vunpack.c.l.bf16 %v798
        %1049 = vset.pattern.permute.xlu0 0
        %1050 = vperm.xlu0 %1049, %v1032
        %v1051 = vpop.permute.xlu0 %1050
        %1054 = vset.pattern.permute.xlu0 0
        %1055 = vperm.xlu0 %1054, %v1033
        %v1056 = vpop.permute.xlu0 %1055
        %1059 = vset.pattern.permute.xlu0 0
        %1060 = vperm.xlu0 %1059, %v1034
        %v1061 = vpop.permute.xlu0 %1060
        %1064 = vset.pattern.permute.xlu0 0
        %1065 = vperm.xlu0 %1064, %v1035
        %v1066 = vpop.permute.xlu0 %1065
        %1069 = vset.pattern.permute.xlu0 0
        %1070 = vperm.xlu0 %1069, %v1036
        %v1071 = vpop.permute.xlu0 %1070
        %1074 = vset.pattern.permute.xlu0 0
        %1075 = vperm.xlu0 %1074, %v1037
        %v1076 = vpop.permute.xlu0 %1075
        %1079 = vset.pattern.permute.xlu0 0
        %1080 = vperm.xlu0 %1079, %v1038
        %v1081 = vpop.permute.xlu0 %1080
        %1084 = vset.pattern.permute.xlu0 0
        %1085 = vperm.xlu0 %1084, %v1039
        %v1086 = vpop.permute.xlu0 %1085
        %v1088 = vmul.f32 %v1051, %v1040
        %v1089 = vmul.f32 %v1056, %v1041
        %v1090 = vmul.f32 %v1061, %v1042
        %v1091 = vmul.f32 %v1066, %v1043
        %v1092 = vmul.f32 %v1071, %v1044
        %v1093 = vmul.f32 %v1076, %v1045
        %v1094 = vmul.f32 %v1081, %v1046
        %v1095 = vmul.f32 %v1086, %v1047
        %v1096 = vsel %vm734, %v1088, 0.0
        %v1097 = vrot.slane %v1096, 4
        %v1098 = vadd.f32 %v1096, %v1097
        %v1099 = vrot.slane %v1098, 2
        %v1100 = vadd.f32 %v1098, %v1099
        %v1101 = vrot.slane %v1100, 1
        %v1102 = vadd.f32 %v1100, %v1101
        %v1103 = vsel %vm734, %v1089, 0.0
        %v1104 = vrot.slane %v1103, 4
        %v1105 = vadd.f32 %v1103, %v1104
        %v1106 = vrot.slane %v1105, 2
        %v1107 = vadd.f32 %v1105, %v1106
        %v1108 = vrot.slane %v1107, 1
        %v1109 = vadd.f32 %v1107, %v1108
        %v1110 = vsel %vm734, %v1090, 0.0
        %v1111 = vrot.slane %v1110, 4
        %v1112 = vadd.f32 %v1110, %v1111
        %v1113 = vrot.slane %v1112, 2
        %v1114 = vadd.f32 %v1112, %v1113
        %v1115 = vrot.slane %v1114, 1
        %v1116 = vadd.f32 %v1114, %v1115
        %v1117 = vsel %vm734, %v1091, 0.0
        %v1118 = vrot.slane %v1117, 4
        %v1119 = vadd.f32 %v1117, %v1118
        %v1120 = vrot.slane %v1119, 2
        %v1121 = vadd.f32 %v1119, %v1120
        %v1122 = vrot.slane %v1121, 1
        %v1123 = vadd.f32 %v1121, %v1122
        %v1124 = vsel %vm734, %v1092, 0.0
        %v1125 = vrot.slane %v1124, 4
        %v1126 = vadd.f32 %v1124, %v1125
        %v1127 = vrot.slane %v1126, 2
        %v1128 = vadd.f32 %v1126, %v1127
        %v1129 = vrot.slane %v1128, 1
        %v1130 = vadd.f32 %v1128, %v1129
        %v1131 = vsel %vm734, %v1093, 0.0
        %v1132 = vrot.slane %v1131, 4
        %v1133 = vadd.f32 %v1131, %v1132
        %v1134 = vrot.slane %v1133, 2
        %v1135 = vadd.f32 %v1133, %v1134
        %v1136 = vrot.slane %v1135, 1
        %v1137 = vadd.f32 %v1135, %v1136
        %v1138 = vsel %vm734, %v1094, 0.0
        %v1139 = vrot.slane %v1138, 4
        %v1140 = vadd.f32 %v1138, %v1139
        %v1141 = vrot.slane %v1140, 2
        %v1142 = vadd.f32 %v1140, %v1141
        %v1143 = vrot.slane %v1142, 1
        %v1144 = vadd.f32 %v1142, %v1143
        %v1145 = vsel %vm734, %v1095, 0.0
        %v1146 = vrot.slane %v1145, 4
        %v1147 = vadd.f32 %v1145, %v1146
        %v1148 = vrot.slane %v1147, 2
        %v1149 = vadd.f32 %v1147, %v1148
        %v1150 = vrot.slane %v1149, 1
        %v1151 = vadd.f32 %v1149, %v1150
        %v1152 = vld [vmem:[%s388] sm:$0x3]
        %v1153 = vld [vmem:[%s388 + $0x2] sm:$0x3]
        %v1154 = vld [vmem:[%s388 + $0x4] sm:$0x3]
        %v1155 = vld [vmem:[%s388 + $0x6] sm:$0x3]
        %v1156 = vld [vmem:[%s388 + $0x8] sm:$0x3]
        %v1157 = vld [vmem:[%s388 + $0xa] sm:$0x3]
        %v1158 = vld [vmem:[%s388 + $0xc] sm:$0x3]
        %v1159 = vld [vmem:[%s388 + $0xe] sm:$0x3]
        %v1160 = vld [vmem:[%s6] sm:$0xf]
        %v1161 = vld [vmem:[%s6 + $0x4] sm:$0xf]
        %v1162 = vld [vmem:[%s6 + $0x8] sm:$0xf]
        %v1163 = vld [vmem:[%s6 + $0xc] sm:$0xf]
        %s1164 = scalar_lea.vmem %s6, 16
        %v1165 = vld [vmem:[%s1164] sm:$0xf]
        %v1166 = vld [vmem:[%s1164 + $0x4] sm:$0xf]
        %v1167 = vld [vmem:[%s1164 + $0x8] sm:$0xf]
        %v1168 = vld [vmem:[%s1164 + $0xc] sm:$0xf]
        %1170 = vst [vmem:[#allocation1] ss:$4 sm:$0xff] %v1152
        %v1171 = vld.sshfl [vmem:[#allocation1] sm:$0xff pattern:$0x73625140]
        %s1174 = scalar_lea.vmem [#allocation1], 32
        %1175 = vst [vmem:[%s1174] ss:$4 sm:$0xff] %v1153
        %v1176 = vld.sshfl [vmem:[#allocation1 + $0x20] sm:$0xff pattern:$0x73625140]
        %1179 = vst [vmem:[#allocation1] ss:$4 sm:$0xff] %v1154
        %v1180 = vld.sshfl [vmem:[#allocation1] sm:$0xff pattern:$0x73625140]
        %1183 = vst [vmem:[%s1174] ss:$4 sm:$0xff] %v1155
        %v1184 = vld.sshfl [vmem:[#allocation1 + $0x20] sm:$0xff pattern:$0x73625140]
        %1187 = vst [vmem:[#allocation1] ss:$4 sm:$0xff] %v1156
        %v1188 = vld.sshfl [vmem:[#allocation1] sm:$0xff pattern:$0x73625140]
        %1191 = vst [vmem:[%s1174] ss:$4 sm:$0xff] %v1157
        %v1192 = vld.sshfl [vmem:[#allocation1 + $0x20] sm:$0xff pattern:$0x73625140]
        %1195 = vst [vmem:[#allocation1] ss:$4 sm:$0xff] %v1158
        %v1196 = vld.sshfl [vmem:[#allocation1] sm:$0xff pattern:$0x73625140]
        %1199 = vst [vmem:[%s1174] ss:$4 sm:$0xff] %v1159
        %v1200 = vld.sshfl [vmem:[#allocation1 + $0x20] sm:$0xff pattern:$0x73625140]
        %v1202 = vunpack.c.l.b16 %v1171
        %v1203 = vunpack.c.l.b16 %v1176
        %v1204 = vunpack.c.l.b16 %v1180
        %v1205 = vunpack.c.l.b16 %v1184
        %v1206 = vunpack.c.l.b16 %v1188
        %v1207 = vunpack.c.l.b16 %v1192
        %v1208 = vunpack.c.l.b16 %v1196
        %v1209 = vunpack.c.l.b16 %v1200
        %v1210 = vrot.slane %v1202, 1
        %v1211 = vsel %vm541, %v1203, %v1210
        %v1212 = vrot.slane %v1204, 7
        %v1213 = vsel %vm543, %v1212, %v1211
        %v1214 = vrot.slane %v1205, 6
        %v1215 = vsel %vm545, %v1214, %v1213
        %v1216 = vrot.slane %v1206, 5
        %v1217 = vsel %vm547, %v1216, %v1215
        %v1218 = vrot.slane %v1207, 4
        %v1219 = vsel %vm549, %v1218, %v1217
        %v1220 = vrot.slane %v1208, 3
        %v1221 = vsel %vm551, %v1220, %v1219
        %v1222 = vrot.slane %v1209, 2
        %v1223 = vsel %vm553, %v1222, %v1221
        %v1224 = vpack.c.b16 %v1223, %v1223
        %v1229 = vunpack.c.l.b16 %v1165
        %v1230 = vunpack.c.l.b16 %v1166
        %v1231 = vunpack.c.l.b16 %v1167
        %v1232 = vunpack.c.l.b16 %v1168
        %v1233 = vpack.c.b16 %v1230, %v1229
        %v1234 = vpack.c.b16 %v1232, %v1231
        %v1238 = vsel %vm446, %v1224, 0
        %1240 = vmatpush.bf16.msra.mxu0 0
        %1241 = vmatpush.bf16.msra.mxu0 0
        %1242 = vmatpush.bf16.msra.mxu0 0
        %1243 = vmatpush.bf16.msra.mxu0 0
        %1244 = vmatpush.bf16.msra.mxu0 0
        %1245 = vmatpush.bf16.msra.mxu0 0
        %1246 = vmatpush.bf16.msra.mxu0 %v1234
        %1247 = vmatpush.bf16.msra.mxu0 %v1233
        %1248 = vmatmul.bf16.gmra.mxu0 %v1238
        %v1249 = vpop.f32.mrf.mxu0
        %v1250 = vadd.f32 0.0, %v1249
        %v1251 = vpop.f32.mrf.mxu0
        %1252 = vdwg.mxu0
        %1253 = vst [vmem:[#allocation1] ss:$4 sm:$0xff] %v1152
        %v1254 = vld.sshfl [vmem:[#allocation1] sm:$0xff pattern:$0x73625140]
        %s1256 = scalar_lea.vmem [#allocation1], 32
        %1257 = vst [vmem:[%s1256] ss:$4 sm:$0xff] %v1153
        %v1258 = vld.sshfl [vmem:[#allocation1 + $0x20] sm:$0xff pattern:$0x73625140]
        %1260 = vst [vmem:[#allocation1] ss:$4 sm:$0xff] %v1154
        %v1261 = vld.sshfl [vmem:[#allocation1] sm:$0xff pattern:$0x73625140]
        %1263 = vst [vmem:[%s1256] ss:$4 sm:$0xff] %v1155
        %v1264 = vld.sshfl [vmem:[#allocation1 + $0x20] sm:$0xff pattern:$0x73625140]
        %1266 = vst [vmem:[#allocation1] ss:$4 sm:$0xff] %v1156
        %v1267 = vld.sshfl [vmem:[#allocation1] sm:$0xff pattern:$0x73625140]
        %1269 = vst [vmem:[%s1256] ss:$4 sm:$0xff] %v1157
        %v1270 = vld.sshfl [vmem:[#allocation1 + $0x20] sm:$0xff pattern:$0x73625140]
        %1272 = vst [vmem:[#allocation1] ss:$4 sm:$0xff] %v1158
        %v1273 = vld.sshfl [vmem:[#allocation1] sm:$0xff pattern:$0x73625140]
        %1275 = vst [vmem:[%s1256] ss:$4 sm:$0xff] %v1159
        %v1276 = vld.sshfl [vmem:[#allocation1 + $0x20] sm:$0xff pattern:$0x73625140]
        %v1278 = vunpack.c.l.b16 %v1254
        %v1279 = vunpack.c.l.b16 %v1258
        %v1280 = vunpack.c.l.b16 %v1261
        %v1281 = vunpack.c.l.b16 %v1264
        %v1282 = vunpack.c.l.b16 %v1267
        %v1283 = vunpack.c.l.b16 %v1270
        %v1284 = vunpack.c.l.b16 %v1273
        %v1285 = vunpack.c.l.b16 %v1276
        %v1286 = vrot.slane %v1279, 7
        %v1287 = vsel %vm541, %v1286, %v1278
        %v1288 = vrot.slane %v1280, 6
        %v1289 = vsel %vm543, %v1288, %v1287
        %v1290 = vrot.slane %v1281, 5
        %v1291 = vsel %vm545, %v1290, %v1289
        %v1292 = vrot.slane %v1282, 4
        %v1293 = vsel %vm547, %v1292, %v1291
        %v1294 = vrot.slane %v1283, 3
        %v1295 = vsel %vm549, %v1294, %v1293
        %v1296 = vrot.slane %v1284, 2
        %v1297 = vsel %vm551, %v1296, %v1295
        %v1298 = vrot.slane %v1285, 1
        %v1299 = vsel %vm553, %v1298, %v1297
        %v1300 = vpack.c.b16 %v1299, %v1299
        %v1305 = vunpack.c.l.b16 %v1160
        %v1306 = vunpack.c.l.b16 %v1161
        %v1307 = vunpack.c.l.b16 %v1162
        %v1308 = vunpack.c.l.b16 %v1163
        %v1309 = vpack.c.b16 %v1306, %v1305
        %v1310 = vpack.c.b16 %v1308, %v1307
        %v1314 = vsel %vm446, %v1300, 0
        %1316 = vmatpush.bf16.msra.mxu0 0
        %1317 = vmatpush.bf16.msra.mxu0 0
        %1318 = vmatpush.bf16.msra.mxu0 0
        %1319 = vmatpush.bf16.msra.mxu0 0
        %1320 = vmatpush.bf16.msra.mxu0 0
        %1321 = vmatpush.bf16.msra.mxu0 0
        %1322 = vmatpush.bf16.msra.mxu0 %v1310
        %1323 = vmatpush.bf16.msra.mxu0 %v1309
        %1324 = vmatmul.bf16.gmra.mxu0 %v1314
        %v1325 = vpop.f32.mrf.mxu0
        %v1326 = vadd.f32 %v1250, %v1325
        %v1327 = vpop.f32.mrf.mxu0
        %1328 = vdwg.mxu0
        %s1329 = scalar_lea.vmem %s6, 32
        %v1330 = vld [vmem:[%s1329] sm:$0xf]
        %v1331 = vld [vmem:[%s1329 + $0x4] sm:$0xf]
        %v1332 = vld [vmem:[%s1329 + $0x8] sm:$0xf]
        %v1333 = vld [vmem:[%s1329 + $0xc] sm:$0xf]
        %1334 = vst [vmem:[#allocation1] ss:$4 sm:$0xff] %v1152
        %v1335 = vld.sshfl [vmem:[#allocation1] sm:$0xff pattern:$0x73625140]
        %s1337 = scalar_lea.vmem [#allocation1], 32
        %1338 = vst [vmem:[%s1337] ss:$4 sm:$0xff] %v1153
        %v1339 = vld.sshfl [vmem:[#allocation1 + $0x20] sm:$0xff pattern:$0x73625140]
        %1341 = vst [vmem:[#allocation1] ss:$4 sm:$0xff] %v1154
        %v1342 = vld.sshfl [vmem:[#allocation1] sm:$0xff pattern:$0x73625140]
        %1344 = vst [vmem:[%s1337] ss:$4 sm:$0xff] %v1155
        %v1345 = vld.sshfl [vmem:[#allocation1 + $0x20] sm:$0xff pattern:$0x73625140]
        %1347 = vst [vmem:[#allocation1] ss:$4 sm:$0xff] %v1156
        %v1348 = vld.sshfl [vmem:[#allocation1] sm:$0xff pattern:$0x73625140]
        %1350 = vst [vmem:[%s1337] ss:$4 sm:$0xff] %v1157
        %v1351 = vld.sshfl [vmem:[#allocation1 + $0x20] sm:$0xff pattern:$0x73625140]
        %1353 = vst [vmem:[#allocation1] ss:$4 sm:$0xff] %v1158
        %v1354 = vld.sshfl [vmem:[#allocation1] sm:$0xff pattern:$0x73625140]
        %1356 = vst [vmem:[%s1337] ss:$4 sm:$0xff] %v1159
        %v1357 = vld.sshfl [vmem:[#allocation1 + $0x20] sm:$0xff pattern:$0x73625140]
        %v1359 = vunpack.c.l.b16 %v1335
        %v1360 = vunpack.c.l.b16 %v1339
        %v1361 = vunpack.c.l.b16 %v1342
        %v1362 = vunpack.c.l.b16 %v1345
        %v1363 = vunpack.c.l.b16 %v1348
        %v1364 = vunpack.c.l.b16 %v1351
        %v1365 = vunpack.c.l.b16 %v1354
        %v1366 = vunpack.c.l.b16 %v1357
        %v1367 = vrot.slane %v1359, 2
        %v1368 = vrot.slane %v1360, 1
        %v1369 = vsel %vm541, %v1368, %v1367
        %v1370 = vsel %vm543, %v1361, %v1369
        %v1371 = vrot.slane %v1362, 7
        %v1372 = vsel %vm545, %v1371, %v1370
        %v1373 = vrot.slane %v1363, 6
        %v1374 = vsel %vm547, %v1373, %v1372
        %v1375 = vrot.slane %v1364, 5
        %v1376 = vsel %vm549, %v1375, %v1374
        %v1377 = vrot.slane %v1365, 4
        %v1378 = vsel %vm551, %v1377, %v1376
        %v1379 = vrot.slane %v1366, 3
        %v1380 = vsel %vm553, %v1379, %v1378
        %v1381 = vpack.c.b16 %v1380, %v1380
        %v1386 = vunpack.c.l.b16 %v1330
        %v1387 = vunpack.c.l.b16 %v1331
        %v1388 = vunpack.c.l.b16 %v1332
        %v1389 = vunpack.c.l.b16 %v1333
        %v1390 = vpack.c.b16 %v1387, %v1386
        %v1391 = vpack.c.b16 %v1389, %v1388
        %v1395 = vsel %vm446, %v1381, 0
        %1397 = vmatpush.bf16.msra.mxu0 0
        %1398 = vmatpush.bf16.msra.mxu0 0
        %1399 = vmatpush.bf16.msra.mxu0 0
        %1400 = vmatpush.bf16.msra.mxu0 0
        %1401 = vmatpush.bf16.msra.mxu0 0
        %1402 = vmatpush.bf16.msra.mxu0 0
        %1403 = vmatpush.bf16.msra.mxu0 %v1391
        %1404 = vmatpush.bf16.msra.mxu0 %v1390
        %1405 = vmatmul.bf16.gmra.mxu0 %v1395
        %v1406 = vpop.f32.mrf.mxu0
        %v1407 = vadd.f32 0.0, %v1406
        %v1408 = vpop.f32.mrf.mxu0
        %1409 = vdwg.mxu0
        %v1410 = vadd.f32 %v1326, %v1407
        %v1411 = vpack.c.bf16 %v741, %v741
        %v1412 = vpack.c.bf16 %v748, %v748
        %v1413 = vpack.c.bf16 %v755, %v755
        %v1414 = vpack.c.bf16 %v762, %v762
        %v1415 = vpack.c.bf16 %v769, %v769
        %v1416 = vpack.c.bf16 %v776, %v776
        %v1417 = vpack.c.bf16 %v783, %v783
        %v1418 = vpack.c.bf16 %v790, %v790
        %s1419 = scalar_lea.vmem %s6, 48
        %v1420 = vld [vmem:[%s1419] sm:$0xf]
        %v1421 = vld [vmem:[%s1419 + $0x4] sm:$0xf]
        %v1422 = vld [vmem:[%s1419 + $0x8] sm:$0xf]
        %v1423 = vld [vmem:[%s1419 + $0xc] sm:$0xf]
        %v1432 = vunpack.c.l.b16 %v1411
        %v1433 = vunpack.c.l.b16 %v1412
        %v1434 = vunpack.c.l.b16 %v1413
        %v1435 = vunpack.c.l.b16 %v1414
        %v1436 = vunpack.c.l.b16 %v1415
        %v1437 = vunpack.c.l.b16 %v1416
        %v1438 = vunpack.c.l.b16 %v1417
        %v1439 = vunpack.c.l.b16 %v1418
        %v1440 = vsel %vm541, %v1433, %v1432
        %v1441 = vsel %vm543, %v1434, %v1440
        %v1442 = vsel %vm545, %v1435, %v1441
        %v1443 = vsel %vm547, %v1436, %v1442
        %v1444 = vsel %vm549, %v1437, %v1443
        %v1445 = vsel %vm551, %v1438, %v1444
        %v1446 = vsel %vm553, %v1439, %v1445
        %v1447 = vpack.c.b16 %v1446, %v1446
        %v1452 = vunpack.c.l.b16 %v1420
        %v1453 = vunpack.c.l.b16 %v1421
        %v1454 = vunpack.c.l.b16 %v1422
        %v1455 = vunpack.c.l.b16 %v1423
        %v1456 = vpack.c.b16 %v1453, %v1452
        %v1457 = vpack.c.b16 %v1455, %v1454
        %v1461 = vsel %vm446, %v1447, 0
        %1463 = vmatpush.bf16.msra.mxu0 0
        %1464 = vmatpush.bf16.msra.mxu0 0
        %1465 = vmatpush.bf16.msra.mxu0 0
        %1466 = vmatpush.bf16.msra.mxu0 0
        %1467 = vmatpush.bf16.msra.mxu0 0
        %1468 = vmatpush.bf16.msra.mxu0 0
        %1469 = vmatpush.bf16.msra.mxu0 %v1457
        %1470 = vmatpush.bf16.msra.mxu0 %v1456
        %1471 = vmatmul.bf16.gmra.mxu0 %v1461
        %v1472 = vpop.f32.mrf.mxu0
        %v1473 = vadd.f32 0.0, %v1472
        %v1474 = vpop.f32.mrf.mxu0
        %1475 = vdwg.mxu0
        %v1476 = vadd.f32 %v1410, %v1473
        %v1477 = vpack.c.bf16 %v1102, %v1102
        %v1478 = vpack.c.bf16 %v1109, %v1109
        %v1479 = vpack.c.bf16 %v1116, %v1116
        %v1480 = vpack.c.bf16 %v1123, %v1123
        %v1481 = vpack.c.bf16 %v1130, %v1130
        %v1482 = vpack.c.bf16 %v1137, %v1137
        %v1483 = vpack.c.bf16 %v1144, %v1144
        %v1484 = vpack.c.bf16 %v1151, %v1151
        %s1485 = scalar_lea.vmem %s6, 64
        %v1486 = vld [vmem:[%s1485] sm:$0xf]
        %v1487 = vld [vmem:[%s1485 + $0x4] sm:$0xf]
        %v1488 = vld [vmem:[%s1485 + $0x8] sm:$0xf]
        %v1489 = vld [vmem:[%s1485 + $0xc] sm:$0xf]
        %v1498 = vunpack.c.l.b16 %v1477
        %v1499 = vunpack.c.l.b16 %v1478
        %v1500 = vunpack.c.l.b16 %v1479
        %v1501 = vunpack.c.l.b16 %v1480
        %v1502 = vunpack.c.l.b16 %v1481
        %v1503 = vunpack.c.l.b16 %v1482
        %v1504 = vunpack.c.l.b16 %v1483
        %v1505 = vunpack.c.l.b16 %v1484
        %v1506 = vsel %vm541, %v1499, %v1498
        %v1507 = vsel %vm543, %v1500, %v1506
        %v1508 = vsel %vm545, %v1501, %v1507
        %v1509 = vsel %vm547, %v1502, %v1508
        %v1510 = vsel %vm549, %v1503, %v1509
        %v1511 = vsel %vm551, %v1504, %v1510
        %v1512 = vsel %vm553, %v1505, %v1511
        %v1513 = vpack.c.b16 %v1512, %v1512
        %v1518 = vunpack.c.l.b16 %v1486
        %v1519 = vunpack.c.l.b16 %v1487
        %v1520 = vunpack.c.l.b16 %v1488
        %v1521 = vunpack.c.l.b16 %v1489
        %v1522 = vpack.c.b16 %v1519, %v1518
        %v1523 = vpack.c.b16 %v1521, %v1520
        %v1527 = vsel %vm446, %v1513, 0
        %1529 = vmatpush.bf16.msra.mxu0 0
        %1530 = vmatpush.bf16.msra.mxu0 0
        %1531 = vmatpush.bf16.msra.mxu0 0
        %1532 = vmatpush.bf16.msra.mxu0 0
        %1533 = vmatpush.bf16.msra.mxu0 0
        %1534 = vmatpush.bf16.msra.mxu0 0
        %1535 = vmatpush.bf16.msra.mxu0 %v1523
        %1536 = vmatpush.bf16.msra.mxu0 %v1522
        %1537 = vmatmul.bf16.gmra.mxu0 %v1527
        %v1538 = vpop.f32.mrf.mxu0
        %v1539 = vadd.f32 0.0, %v1538
        %v1540 = vpop.f32.mrf.mxu0
        %1541 = vdwg.mxu0
        %v1542 = vadd.f32 %v1476, %v1539
        %v1543 = vld [vmem:[%s7] sm:$0x1]
        %v1545 = vperm.slane %v1543, 0
        %v1547 = vadd.f32 %v1542, %v1545
        %1548 = vst.msk [vmem:[%s383] sm:$0xff] %vm446, %v1547
        %s1549 = sand.u32 %s219, 1
        %s1550 = scalar_lea.sflag [#allocation4], %s1549
        %s1551 = sand.u32 %s219, 1
        %s1552 = smul.addr %s1551, 8
        %s1553 = scalar_lea.vmem [#allocation7], %s1552
        // Predicated region
        $region61: #{tpu_custom_call.1} parent=51 // pred_check
          %p1554 = pneg %p229
        $region62: #{tpu_custom_call.1} parent=51 // pred_check_branch
          %1556 = sbr.rel (%p1554) target = $region64
        $region63: #{tpu_custom_call.1} parent=51 // pred_region
          %1558 = vsyncadd %s1550, 0
          %s1559 = smul.addr %s28, 8
          %s1560 = scalar_lea.hbm %s8, %s1559
          %s1562 = sshll.u32 %s1553, 4
          %s1563 = int_to_ptr.vmem [resolvable:$true] %s1562
          %s1564 = sshll.u32 %s1560, 4
          %s1565 = int_to_ptr.hbm [resolvable:$true] %s1564
          %1567 = dma.vmem_to_hbm [thread:$0]  %s1563, 128, %s1565, %s1550
        $region64: #{tpu_custom_call.1} parent=51 // pred_fallthru
          _
      $region52: #{tpu_custom_call.1} parent=5 // pred_fallthru
        _
      %p1568 = scmp.le.s32.totalorder 2, %s23
      // Predicated region
      $region65: #{tpu_custom_call.1} parent=5 // pred_check
        %p1569 = pneg %p1568
      $region66: #{tpu_custom_call.1} parent=5 // pred_check_branch
        %1571 = sbr.rel (%p1569) target = $region68
      $region67: #{tpu_custom_call.1} parent=5 // pred_region
        %s1572 = ssub.s32 %s23, 2
        // Predicated region
        $region69: #{tpu_custom_call.1} parent=67 // pred_check
          %p1573 = pneg %p235
        $region70: #{tpu_custom_call.1} parent=67 // pred_check_branch
          %1575 = sbr.rel (%p1573) target = $region72
        $region71: #{tpu_custom_call.1} parent=67 // pred_region
          %s1576 = sand.u32 %s220, 1
          %s1577 = scalar_lea.sflag [#allocation4], %s1576
          %s1578 = sand.u32 %s220, 1
          %s1579 = smul.addr %s1578, 8
          %s1580 = scalar_lea.vmem [#allocation7], %s1579
          %1582 = dma.done %s1577, 128
        $region72: #{tpu_custom_call.1} parent=67 // pred_fallthru
          _
      $region68: #{tpu_custom_call.1} parent=5 // pred_fallthru
        _
    $region6: #{tpu_custom_call.1} parent=1 // loop_footer
      %s27 = sadd.s32 1, %s23
    $region7: #{tpu_custom_call.1} parent=1 // loop_footer_branch
      %22 = sbr.rel target = $region3
    $region8: #{tpu_custom_call.1} parent=1 // loop_exit
      _
    %1583 = vsyncpa [#allocation3], 1
    %s1584 = scalar_lea.sflag [#allocation3], 1
    %1585 = vsyncpa %s1584, 1
    %1586 = vsyncpa [#allocation6], 1
    %s1587 = scalar_lea.sflag [#allocation6], 1
    %1588 = vsyncpa %s1587, 1
    %1589 = vsyncpa [#allocation4], 1
    %s1590 = scalar_lea.sflag [#allocation4], 1
    %1591 = vsyncpa %s1590, 1

</llo_original>
